<compile_context>
chip_gen: v5e
topology: v5e:2x2
jax: 0.10.0
libtpu: 0.0.40
codegen_flags: <defaults>
</compile_context>

<pallas_src>
import numpy as np
import jax
import jax.numpy as jnp
from jax.experimental import pallas as pl
from jax.experimental.pallas import tpu as pltpu

# ----------------------------- config ---------------------------------------
B = 2          # batch
N = 8          # sequence length (nodes)
DIM = 32       # model dim (== input_dim)
HEADS = 4
DIM_HEAD = 16
INNER = HEADS * DIM_HEAD   # 64
MLP_DIM = 64
HIERARCHY = [2, 2, 2]      # depth of each of the 3 transformer stages
NUM_STAGES = len(HIERARCHY)
DEPTH = HIERARCHY[0]
assert all(d == DEPTH for d in HIERARCHY), "stacked weights assume equal depth"

EPS_LN = 1e-5
EPS_NORMALIZE = 1e-12          # F.normalize eps (clamp semantics)
EPS_NORM2 = EPS_NORMALIZE * EPS_NORMALIZE
SCALE = DIM_HEAD ** (-0.5)

# packed small-vector slab layout (per stage): DEPTH*7 layer rows + dense_b + head_scale
VP_ROWS_PER_LAYER = 7          # bo, ln1_g, ln1_b, ln2_g, ln2_b, b2, b1
VP_DENSE_B_ROW = DEPTH * VP_ROWS_PER_LAYER       # 14
VP_HEAD_SCALE_ROW = VP_DENSE_B_ROW + 1           # 15
VP_ROWS = VP_HEAD_SCALE_ROW + 1                  # 16
VP_WIDTH = MLP_DIM                               # 64 lanes


# ----------------------------- fused Pallas kernel ---------------------------
def _fused_forward_kernel(x_ref, spd_ref, dw_ref, vp_ref,
                          wqkv_ref, wo_ref, w1_ref, w2_ref, o_ref):
    """Entire 3-stage AirwayFormer forward for one batch block of (N, DIM) tokens.

    All operands live in VMEM for the whole kernel; every loop is a static
    Python loop (unrolled at trace time), so each grid step is pure in-VMEM
    compute with a single output store.
    """
    f32 = jnp.float32
    x = x_ref[...]                                           # (N, DIM)

    # per-head drop scale, expanded to the (N, INNER) lane layout once (hoisted)
    hs = jnp.broadcast_to(
        vp_ref[0, VP_HEAD_SCALE_ROW:VP_HEAD_SCALE_ROW + 1, :INNER], (N, INNER))

    def layer_norm(v, g, b):
        mu = jnp.mean(v, axis=-1, keepdims=True)
        vc = v - mu
        var = jnp.mean(vc * vc, axis=-1, keepdims=True)
        return vc * jax.lax.rsqrt(var + EPS_LN) * g + b

    cat = x                      # growing concat of [x, out0, out1, ...] along lanes
    outs = []
    for s in range(NUM_STAGES):
        spd_s = spd_ref[s]                                   # (N, N)
        dense_b = vp_ref[s, VP_DENSE_B_ROW:VP_DENSE_B_ROW + 1, :DIM]
        # stage input projection (Dense): (N, (s+1)*DIM) @ ((s+1)*DIM, DIM)
        xt = jnp.dot(cat, dw_ref[s, :(s + 1) * DIM, :],
                     preferred_element_type=f32) + dense_b

        for l in range(DEPTH):
            r = l * VP_ROWS_PER_LAYER
            bo   = vp_ref[s, r + 0:r + 1, :DIM]
            ln1g = vp_ref[s, r + 1:r + 2, :DIM]
            ln1b = vp_ref[s, r + 2:r + 3, :DIM]
            ln2g = vp_ref[s, r + 3:r + 4, :DIM]
            ln2b = vp_ref[s, r + 4:r + 5, :DIM]
            b2   = vp_ref[s, r + 5:r + 6, :DIM]
            b1   = vp_ref[s, r + 6:r + 7, :MLP_DIM]

            # ---- PreNorm(Attention):  xt = xt + Attn(LN(xt), spd) ----
            h = layer_norm(xt, ln1g, ln1b)                               # (N, DIM)
            qkv = jnp.dot(h, wqkv_ref[s, l],
                          preferred_element_type=f32)                    # (N, 3*INNER)

            # head-major (H, N, Dh) views built from lane slices + leading-axis stack
            def heads_of(base):
                return jnp.stack(
                    [qkv[:, base + hd * DIM_HEAD: base + (hd + 1) * DIM_HEAD]
                     for hd in range(HEADS)], axis=0)                     # (H, N, Dh)
            q = heads_of(0)
            k = heads_of(INNER)
            v = heads_of(2 * INNER)

            # one batched contraction over all heads
            dots = jnp.einsum('hnd,hmd->hnm', q, k,
                              preferred_element_type=f32) * SCALE         # (H, N, N)

            # spd-modulated logits (fused F.normalize):
            #   logits = dots + F.normalize(dots*spd, dim=-1) * ||dots||_2
            y = dots * spd_s[None, :, :]
            sum_y2 = jnp.sum(y * y, axis=-1, keepdims=True)
            d_norm = jnp.sqrt(jnp.sum(dots * dots, axis=-1, keepdims=True))
            ratio = d_norm * jax.lax.rsqrt(jnp.maximum(sum_y2, EPS_NORM2))
            logits = dots + y * ratio

            # single softmax over the combined (H, N, N) tensor
            m = jnp.max(logits, axis=-1, keepdims=True)
            e = jnp.exp(logits - m)
            p = e * pl.reciprocal(jnp.sum(e, axis=-1, keepdims=True), approx=True)

            oh = jnp.einsum('hnm,hmd->hnd', p, v,
                            preferred_element_type=f32)                   # (H, N, Dh)
            attn = jnp.concatenate([oh[hd] for hd in range(HEADS)],
                                   axis=-1) * hs                          # (N, INNER)
            xt = xt + jnp.dot(attn, wo_ref[s, l],
                              preferred_element_type=f32) + bo

            # ---- PreNorm(FeedForward):  xt = xt + FF(LN(xt)) ----
            h2 = layer_norm(xt, ln2g, ln2b)
            hh = jnp.dot(h2, w1_ref[s, l], preferred_element_type=f32) + b1
            hh = jax.nn.gelu(hh, approximate=True)                        # tanh GELU (EUP)
            xt = xt + jnp.dot(hh, w2_ref[s, l], preferred_element_type=f32) + b2

        outs.append(xt)
        cat = jnp.concatenate([cat, xt], axis=-1)

    # single lane-dense output write (N, 3*DIM)
    o_ref[...] = jnp.concatenate(outs, axis=-1)


def airwayformer_forward(x, spd, packed):
    b, n, d = x.shape

    def full_spec(a):
        return pl.BlockSpec(a.shape, lambda i, nd=a.ndim: (0,) * nd)

    out = pl.pallas_call(
        _fused_forward_kernel,
        grid=(b,),
        in_specs=[
            pl.BlockSpec((n, d), lambda i: (i, 0)),          # x: one batch per step
            full_spec(spd),
            full_spec(packed["dense_w"]),
            full_spec(packed["vp"]),
            full_spec(packed["wqkv"]),
            full_spec(packed["wo"]),
            full_spec(packed["w1"]),
            full_spec(packed["w2"]),
        ],
        out_specs=pl.BlockSpec((n, NUM_STAGES * DIM), lambda i: (i, 0)),
        out_shape=jax.ShapeDtypeStruct((b * n, NUM_STAGES * DIM), jnp.float32),
        compiler_params=pltpu.CompilerParams(
            dimension_semantics=("parallel",)),               # 2 TCs on v7x
    )(x.reshape(b * n, d), spd, packed["dense_w"], packed["vp"],
      packed["wqkv"], packed["wo"], packed["w1"], packed["w2"])

    out = out.reshape(b, n, NUM_STAGES * DIM)
    return tuple(out[..., s * DIM:(s + 1) * DIM] for s in range(NUM_STAGES))


# ----------------------------- params, packing, head mask --------------------
def init_params(key):
    def w(k, shape, scale=0.02):
        return (scale * jax.random.normal(k, shape)).astype(jnp.float32)

    keys = iter(jax.random.split(key, 16))
    S, L = NUM_STAGES, DEPTH
    return {
        "dense_w": [w(next(keys), ((i + 1) * DIM, DIM)) for i in range(S)],
        "dense_b": jnp.zeros((S, DIM), jnp.float32),
        "wqkv": w(next(keys), (S, L, DIM, 3 * INNER)),        # no qkv bias
        "wo":   w(next(keys), (S, L, INNER, DIM)),
        "bo":   jnp.zeros((S, L, DIM), jnp.float32),
        "ln1_g": jnp.ones((S, L, DIM), jnp.float32),          # PreNorm(Attention) LN
        "ln1_b": jnp.zeros((S, L, DIM), jnp.float32),
        "w1":   w(next(keys), (S, L, DIM, MLP_DIM)),
        "b1":   jnp.zeros((S, L, MLP_DIM), jnp.float32),
        "w2":   w(next(keys), (S, L, MLP_DIM, DIM)),
        "b2":   jnp.zeros((S, L, DIM), jnp.float32),
        "ln2_g": jnp.ones((S, L, DIM), jnp.float32),          # PreNorm(FeedForward) LN
        "ln2_b": jnp.zeros((S, L, DIM), jnp.float32),
    }


def pack_params(params, head_scale):
    """Pack 20 small operands into 6 kernel operands (done once, outside jit)."""
    S, L = NUM_STAGES, DEPTH
    # stage-input Dense weights zero-padded into one (S, 3*DIM, DIM) slab
    dw = jnp.zeros((S, NUM_STAGES * DIM, DIM), jnp.float32)
    for s in range(S):
        dw = dw.at[s, :(s + 1) * DIM, :].set(params["dense_w"][s])

    # all per-layer / per-stage small vectors into one (S, 16, 64) slab
    hs_vec = jnp.repeat(head_scale, DIM_HEAD)                 # (INNER,)
    vp = jnp.zeros((S, VP_ROWS, VP_WIDTH), jnp.float32)
    for s in range(S):
        for l in range(L):
            r = l * VP_ROWS_PER_LAYER
            vp = vp.at[s, r + 0, :DIM].set(params["bo"][s, l])
            vp = vp.at[s, r + 1, :DIM].set(params["ln1_g"][s, l])
            vp = vp.at[s, r + 2, :DIM].set(params["ln1_b"][s, l])
            vp = vp.at[s, r + 3, :DIM].set(params["ln2_g"][s, l])
            vp = vp.at[s, r + 4, :DIM].set(params["ln2_b"][s, l])
            vp = vp.at[s, r + 5, :DIM].set(params["b2"][s, l])
            vp = vp.at[s, r + 6, :MLP_DIM].set(params["b1"][s, l])
        vp = vp.at[s, VP_DENSE_B_ROW, :DIM].set(params["dense_b"][s])
        vp = vp.at[s, VP_HEAD_SCALE_ROW, :INNER].set(hs_vec)

    return {
        "dense_w": dw, "vp": vp,
        "wqkv": params["wqkv"], "wo": params["wo"],
        "w1": params["w1"], "w2": params["w2"],
    }


def make_head_scale(heads, p, seed=0):
    # TODO(synk): the reference re-samples np.random.binomial head-drop on the
    # host every forward; here it is sampled once at construction (exact for
    # inference / p=0, not equivalent for training with p>0).
    rng = np.random.RandomState(seed)
    a = rng.binomial(1, 1.0 - p, size=heads)
    while a.sum() == 0:
        a = rng.binomial(1, 1.0 - p, size=heads)
    return jnp.asarray(a.astype(np.float32) * heads / a.sum(), dtype=jnp.float32)


# ----------------------------- main ------------------------------------------
if __name__ == "__main__":
    key = jax.random.PRNGKey(0)
    k_x, k_spd, _ = jax.random.split(key, 3)

    x = jax.random.normal(k_x, (B, N, DIM), dtype=jnp.float32)
    spd = jax.random.normal(k_spd, (NUM_STAGES, N, N), dtype=jnp.float32)
    head_scale = make_head_scale(HEADS, p=0.0, seed=0)   # dropout p=0 -> deterministic

    params = init_params(jax.random.PRNGKey(42))
    packed = pack_params(params, head_scale)             # packed once, outside jit

    fwd = jax.jit(airwayformer_forward)
    out1, out2, out3 = fwd(x, spd, packed)
    jax.block_until_ready((out1, out2, out3))

    assert out1.shape == (B, N, DIM)
    assert out2.shape == (B, N, DIM)
    assert out3.shape == (B, N, DIM)
    assert bool(jnp.all(jnp.isfinite(out1)))
    assert bool(jnp.all(jnp.isfinite(out2)))
    assert bool(jnp.all(jnp.isfinite(out3)))
    print("KERNEL_OK")
</pallas_src>

<mosaic_0001>
module attributes {stable_mosaic.version = 11 : i64} {
  func.func @_fused_forward_kernel(%arg0: i32, %arg1: memref<8x32xf32, #tpu.memory_space<vmem>>, %arg2: memref<3x8x8xf32, #tpu.memory_space<vmem>>, %arg3: memref<3x96x32xf32, #tpu.memory_space<vmem>>, %arg4: memref<3x16x64xf32, #tpu.memory_space<vmem>>, %arg5: memref<3x2x32x192xf32, #tpu.memory_space<vmem>>, %arg6: memref<3x2x64x32xf32, #tpu.memory_space<vmem>>, %arg7: memref<3x2x32x64xf32, #tpu.memory_space<vmem>>, %arg8: memref<3x2x64x32xf32, #tpu.memory_space<vmem>>, %arg9: memref<8x96xf32, #tpu.memory_space<vmem>>) attributes {dimension_semantics = [#tpu.dimension_semantics<parallel>], iteration_bounds = array<i64: 2>, scalar_prefetch = 0 : i64, scratch_operands = 0 : i64, tpu.core_type = #tpu.core_type<tc>, window_params = [{transform_indices = @transform_0, window_bounds = array<i64: 8, 32>}, {pipeline_mode = #tpu.pipeline_mode<synchronous>, transform_indices = @transform_1, window_bounds = array<i64: 3, 8, 8>}, {pipeline_mode = #tpu.pipeline_mode<synchronous>, transform_indices = @transform_2, window_bounds = array<i64: 3, 96, 32>}, {pipeline_mode = #tpu.pipeline_mode<synchronous>, transform_indices = @transform_3, window_bounds = array<i64: 3, 16, 64>}, {pipeline_mode = #tpu.pipeline_mode<synchronous>, transform_indices = @transform_4, window_bounds = array<i64: 3, 2, 32, 192>}, {pipeline_mode = #tpu.pipeline_mode<synchronous>, transform_indices = @transform_5, window_bounds = array<i64: 3, 2, 64, 32>}, {pipeline_mode = #tpu.pipeline_mode<synchronous>, transform_indices = @transform_6, window_bounds = array<i64: 3, 2, 32, 64>}, {pipeline_mode = #tpu.pipeline_mode<synchronous>, transform_indices = @transform_7, window_bounds = array<i64: 3, 2, 64, 32>}, {transform_indices = @transform_8, window_bounds = array<i64: 8, 96>}]} {
    %c0 = arith.constant 0 : index
    %c0_0 = arith.constant 0 : index
    %0 = vector.load %arg1[%c0, %c0_0] : memref<8x32xf32, #tpu.memory_space<vmem>>, vector<8x32xf32>
    %c0_1 = arith.constant 0 : index
    %c15 = arith.constant 15 : index
    %c0_2 = arith.constant 0 : index
    %1 = vector.load %arg4[%c0_1, %c15, %c0_2] : memref<3x16x64xf32, #tpu.memory_space<vmem>>, vector<1x1x64xf32>
    %2 = vector.shape_cast %1 : vector<1x1x64xf32> to vector<1x64xf32>
    %3 = vector.shape_cast %2 : vector<1x64xf32> to vector<1x64xf32>
    %4 = vector.broadcast %3 : vector<1x64xf32> to vector<8x64xf32>
    %c0_3 = arith.constant 0 : index
    %c0_4 = arith.constant 0 : index
    %c0_5 = arith.constant 0 : index
    %5 = vector.load %arg2[%c0_3, %c0_4, %c0_5] : memref<3x8x8xf32, #tpu.memory_space<vmem>>, vector<1x8x8xf32>
    %6 = vector.shape_cast %5 : vector<1x8x8xf32> to vector<8x8xf32>
    %c0_6 = arith.constant 0 : index
    %c14 = arith.constant 14 : index
    %c0_7 = arith.constant 0 : index
    %7 = vector.load %arg4[%c0_6, %c14, %c0_7] : memref<3x16x64xf32, #tpu.memory_space<vmem>>, vector<1x1x32xf32>
    %8 = vector.shape_cast %7 : vector<1x1x32xf32> to vector<1x32xf32>
    %c0_8 = arith.constant 0 : index
    %c0_9 = arith.constant 0 : index
    %c0_10 = arith.constant 0 : index
    %9 = vector.load %arg3[%c0_8, %c0_9, %c0_10] : memref<3x96x32xf32, #tpu.memory_space<vmem>>, vector<1x32x32xf32>
    %10 = vector.shape_cast %9 : vector<1x32x32xf32> to vector<32x32xf32>
    %cst = arith.constant dense<0.000000e+00> : vector<8x32xf32>
    %11 = tpu.matmul %0, %10, %cst {dimension_numbers = #tpu.dot_dimension_numbers<[1], [0], [0], [1], [0, 0, 1, 1], [], []>} : vector<8x32xf32>, vector<32x32xf32>, vector<8x32xf32> -> vector<8x32xf32>
    %12 = vector.broadcast %8 : vector<1x32xf32> to vector<8x32xf32>
    %13 = arith.addf %11, %12 : vector<8x32xf32>
    %c0_11 = arith.constant 0 : index
    %c0_12 = arith.constant 0 : index
    %c0_13 = arith.constant 0 : index
    %14 = vector.load %arg4[%c0_11, %c0_12, %c0_13] : memref<3x16x64xf32, #tpu.memory_space<vmem>>, vector<1x1x32xf32>
    %15 = vector.shape_cast %14 : vector<1x1x32xf32> to vector<1x32xf32>
    %c0_14 = arith.constant 0 : index
    %c1 = arith.constant 1 : index
    %c0_15 = arith.constant 0 : index
    %16 = vector.load %arg4[%c0_14, %c1, %c0_15] : memref<3x16x64xf32, #tpu.memory_space<vmem>>, vector<1x1x32xf32>
    %17 = vector.shape_cast %16 : vector<1x1x32xf32> to vector<1x32xf32>
    %c0_16 = arith.constant 0 : index
    %c2 = arith.constant 2 : index
    %c0_17 = arith.constant 0 : index
    %18 = vector.load %arg4[%c0_16, %c2, %c0_17] : memref<3x16x64xf32, #tpu.memory_space<vmem>>, vector<1x1x32xf32>
    %19 = vector.shape_cast %18 : vector<1x1x32xf32> to vector<1x32xf32>
    %c0_18 = arith.constant 0 : index
    %c3 = arith.constant 3 : index
    %c0_19 = arith.constant 0 : index
    %20 = vector.load %arg4[%c0_18, %c3, %c0_19] : memref<3x16x64xf32, #tpu.memory_space<vmem>>, vector<1x1x32xf32>
    %21 = vector.shape_cast %20 : vector<1x1x32xf32> to vector<1x32xf32>
    %c0_20 = arith.constant 0 : index
    %c4 = arith.constant 4 : index
    %c0_21 = arith.constant 0 : index
    %22 = vector.load %arg4[%c0_20, %c4, %c0_21] : memref<3x16x64xf32, #tpu.memory_space<vmem>>, vector<1x1x32xf32>
    %23 = vector.shape_cast %22 : vector<1x1x32xf32> to vector<1x32xf32>
    %c0_22 = arith.constant 0 : index
    %c5 = arith.constant 5 : index
    %c0_23 = arith.constant 0 : index
    %24 = vector.load %arg4[%c0_22, %c5, %c0_23] : memref<3x16x64xf32, #tpu.memory_space<vmem>>, vector<1x1x32xf32>
    %25 = vector.shape_cast %24 : vector<1x1x32xf32> to vector<1x32xf32>
    %c0_24 = arith.constant 0 : index
    %c6 = arith.constant 6 : index
    %c0_25 = arith.constant 0 : index
    %26 = vector.load %arg4[%c0_24, %c6, %c0_25] : memref<3x16x64xf32, #tpu.memory_space<vmem>>, vector<1x1x64xf32>
    %27 = vector.shape_cast %26 : vector<1x1x64xf32> to vector<1x64xf32>
    %cst_26 = arith.constant dense<0.000000e+00> : vector<8xf32>
    %28 = vector.multi_reduction <add>, %13, %cst_26 [1] : vector<8x32xf32> to vector<8xf32>
    %29 = vector.shape_cast %28 : vector<8xf32> to vector<8x1xf32>
    %cst_27 = arith.constant 3.200000e+01 : f32
    %30 = vector.broadcast %cst_27 : f32 to vector<8x1xf32>
    %31 = arith.divf %29, %30 : vector<8x1xf32>
    %32 = vector.broadcast %31 : vector<8x1xf32> to vector<8x32xf32>
    %33 = arith.subf %13, %32 : vector<8x32xf32>
    %34 = arith.mulf %33, %33 : vector<8x32xf32>
    %cst_28 = arith.constant dense<0.000000e+00> : vector<8xf32>
    %35 = vector.multi_reduction <add>, %34, %cst_28 [1] : vector<8x32xf32> to vector<8xf32>
    %36 = vector.shape_cast %35 : vector<8xf32> to vector<8x1xf32>
    %cst_29 = arith.constant 3.200000e+01 : f32
    %37 = vector.broadcast %cst_29 : f32 to vector<8x1xf32>
    %38 = arith.divf %36, %37 : vector<8x1xf32>
    %cst_30 = arith.constant 9.99999974E-6 : f32
    %39 = vector.broadcast %cst_30 : f32 to vector<8x1xf32>
    %40 = arith.addf %38, %39 : vector<8x1xf32>
    %41 = math.rsqrt %40 : vector<8x1xf32>
    %42 = vector.broadcast %41 : vector<8x1xf32> to vector<8x32xf32>
    %43 = arith.mulf %33, %42 : vector<8x32xf32>
    %44 = vector.broadcast %17 : vector<1x32xf32> to vector<8x32xf32>
    %45 = arith.mulf %43, %44 : vector<8x32xf32>
    %46 = vector.broadcast %19 : vector<1x32xf32> to vector<8x32xf32>
    %47 = arith.addf %45, %46 : vector<8x32xf32>
    %c0_31 = arith.constant 0 : index
    %c0_32 = arith.constant 0 : index
    %c0_33 = arith.constant 0 : index
    %c0_34 = arith.constant 0 : index
    %48 = vector.load %arg5[%c0_31, %c0_32, %c0_33, %c0_34] : memref<3x2x32x192xf32, #tpu.memory_space<vmem>>, vector<1x1x32x192xf32>
    %49 = vector.shape_cast %48 : vector<1x1x32x192xf32> to vector<32x192xf32>
    %cst_35 = arith.constant dense<0.000000e+00> : vector<8x192xf32>
    %50 = tpu.matmul %47, %49, %cst_35 {dimension_numbers = #tpu.dot_dimension_numbers<[1], [0], [0], [1], [0, 0, 1, 1], [], []>} : vector<8x32xf32>, vector<32x192xf32>, vector<8x192xf32> -> vector<8x192xf32>
    %51 = vector.extract_strided_slice %50 {offsets = [0, 0], sizes = [8, 16], strides = [1, 1]} : vector<8x192xf32> to vector<8x16xf32>
    %52 = vector.extract_strided_slice %50 {offsets = [0, 16], sizes = [8, 16], strides = [1, 1]} : vector<8x192xf32> to vector<8x16xf32>
    %53 = vector.extract_strided_slice %50 {offsets = [0, 32], sizes = [8, 16], strides = [1, 1]} : vector<8x192xf32> to vector<8x16xf32>
    %54 = vector.extract_strided_slice %50 {offsets = [0, 48], sizes = [8, 16], strides = [1, 1]} : vector<8x192xf32> to vector<8x16xf32>
    %55 = vector.shape_cast %51 : vector<8x16xf32> to vector<1x8x16xf32>
    %56 = vector.shape_cast %52 : vector<8x16xf32> to vector<1x8x16xf32>
    %57 = vector.shape_cast %53 : vector<8x16xf32> to vector<1x8x16xf32>
    %58 = vector.shape_cast %54 : vector<8x16xf32> to vector<1x8x16xf32>
    %59 = tpu.concatenate %55, %56, %57, %58 in 0 : vector<1x8x16xf32>, vector<1x8x16xf32>, vector<1x8x16xf32>, vector<1x8x16xf32> -> vector<4x8x16xf32>
    %60 = vector.extract_strided_slice %50 {offsets = [0, 64], sizes = [8, 16], strides = [1, 1]} : vector<8x192xf32> to vector<8x16xf32>
    %61 = vector.extract_strided_slice %50 {offsets = [0, 80], sizes = [8, 16], strides = [1, 1]} : vector<8x192xf32> to vector<8x16xf32>
    %62 = vector.extract_strided_slice %50 {offsets = [0, 96], sizes = [8, 16], strides = [1, 1]} : vector<8x192xf32> to vector<8x16xf32>
    %63 = vector.extract_strided_slice %50 {offsets = [0, 112], sizes = [8, 16], strides = [1, 1]} : vector<8x192xf32> to vector<8x16xf32>
    %64 = vector.shape_cast %60 : vector<8x16xf32> to vector<1x8x16xf32>
    %65 = vector.shape_cast %61 : vector<8x16xf32> to vector<1x8x16xf32>
    %66 = vector.shape_cast %62 : vector<8x16xf32> to vector<1x8x16xf32>
    %67 = vector.shape_cast %63 : vector<8x16xf32> to vector<1x8x16xf32>
    %68 = tpu.concatenate %64, %65, %66, %67 in 0 : vector<1x8x16xf32>, vector<1x8x16xf32>, vector<1x8x16xf32>, vector<1x8x16xf32> -> vector<4x8x16xf32>
    %69 = vector.extract_strided_slice %50 {offsets = [0, 128], sizes = [8, 16], strides = [1, 1]} : vector<8x192xf32> to vector<8x16xf32>
    %70 = vector.extract_strided_slice %50 {offsets = [0, 144], sizes = [8, 16], strides = [1, 1]} : vector<8x192xf32> to vector<8x16xf32>
    %71 = vector.extract_strided_slice %50 {offsets = [0, 160], sizes = [8, 16], strides = [1, 1]} : vector<8x192xf32> to vector<8x16xf32>
    %72 = vector.extract_strided_slice %50 {offsets = [0, 176], sizes = [8, 16], strides = [1, 1]} : vector<8x192xf32> to vector<8x16xf32>
    %73 = vector.shape_cast %69 : vector<8x16xf32> to vector<1x8x16xf32>
    %74 = vector.shape_cast %70 : vector<8x16xf32> to vector<1x8x16xf32>
    %75 = vector.shape_cast %71 : vector<8x16xf32> to vector<1x8x16xf32>
    %76 = vector.shape_cast %72 : vector<8x16xf32> to vector<1x8x16xf32>
    %77 = tpu.concatenate %73, %74, %75, %76 in 0 : vector<1x8x16xf32>, vector<1x8x16xf32>, vector<1x8x16xf32>, vector<1x8x16xf32> -> vector<4x8x16xf32>
    "tpu.trace_start"() <{level = 10 : i32, message = "hnd,hmd->hnm"}> : () -> ()
    %cst_36 = arith.constant dense<0.000000e+00> : vector<4x8x8xf32>
    %78 = tpu.matmul %59, %68, %cst_36 {dimension_numbers = #tpu.dot_dimension_numbers<[2], [2], [1], [1], [0, 0, 0, 1, 1, 1], [0], [0]>} : vector<4x8x16xf32>, vector<4x8x16xf32>, vector<4x8x8xf32> -> vector<4x8x8xf32>
    "tpu.trace_stop"() : () -> ()
    %cst_37 = arith.constant 2.500000e-01 : f32
    %79 = vector.broadcast %cst_37 : f32 to vector<4x8x8xf32>
    %80 = arith.mulf %78, %79 : vector<4x8x8xf32>
    %81 = vector.shape_cast %6 : vector<8x8xf32> to vector<1x8x8xf32>
    %82 = vector.broadcast %81 : vector<1x8x8xf32> to vector<4x8x8xf32>
    %83 = arith.mulf %80, %82 : vector<4x8x8xf32>
    %84 = arith.mulf %83, %83 : vector<4x8x8xf32>
    %cst_38 = arith.constant dense<0.000000e+00> : vector<4x8xf32>
    %85 = vector.multi_reduction <add>, %84, %cst_38 [2] : vector<4x8x8xf32> to vector<4x8xf32>
    %86 = vector.shape_cast %85 : vector<4x8xf32> to vector<4x8x1xf32>
    %87 = arith.mulf %80, %80 : vector<4x8x8xf32>
    %cst_39 = arith.constant dense<0.000000e+00> : vector<4x8xf32>
    %88 = vector.multi_reduction <add>, %87, %cst_39 [2] : vector<4x8x8xf32> to vector<4x8xf32>
    %89 = vector.shape_cast %88 : vector<4x8xf32> to vector<4x8x1xf32>
    %90 = math.sqrt %89 : vector<4x8x1xf32>
    %cst_40 = arith.constant 1.000000e-24 : f32
    %91 = vector.broadcast %cst_40 : f32 to vector<4x8x1xf32>
    %92 = arith.maximumf %86, %91 : vector<4x8x1xf32>
    %93 = math.rsqrt %92 : vector<4x8x1xf32>
    %94 = arith.mulf %90, %93 : vector<4x8x1xf32>
    %95 = vector.broadcast %94 : vector<4x8x1xf32> to vector<4x8x8xf32>
    %96 = arith.mulf %83, %95 : vector<4x8x8xf32>
    %97 = arith.addf %80, %96 : vector<4x8x8xf32>
    %cst_41 = arith.constant dense<0xFF800000> : vector<4x8xf32>
    %98 = vector.multi_reduction <maximumf>, %97, %cst_41 [2] : vector<4x8x8xf32> to vector<4x8xf32>
    %99 = vector.shape_cast %98 : vector<4x8xf32> to vector<4x8x1xf32>
    %100 = vector.broadcast %99 : vector<4x8x1xf32> to vector<4x8x8xf32>
    %101 = arith.subf %97, %100 : vector<4x8x8xf32>
    %102 = math.exp %101 : vector<4x8x8xf32>
    %cst_42 = arith.constant dense<0.000000e+00> : vector<4x8xf32>
    %103 = vector.multi_reduction <add>, %102, %cst_42 [2] : vector<4x8x8xf32> to vector<4x8xf32>
    %104 = vector.shape_cast %103 : vector<4x8xf32> to vector<4x8x1xf32>
    %105 = tpu.reciprocal %104 {approx = true} : vector<4x8x1xf32> -> vector<4x8x1xf32>
    %106 = vector.broadcast %105 : vector<4x8x1xf32> to vector<4x8x8xf32>
    %107 = arith.mulf %102, %106 : vector<4x8x8xf32>
    "tpu.trace_start"() <{level = 10 : i32, message = "hnm,hmd->hnd"}> : () -> ()
    %cst_43 = arith.constant dense<0.000000e+00> : vector<4x8x16xf32>
    %108 = tpu.matmul %107, %77, %cst_43 {dimension_numbers = #tpu.dot_dimension_numbers<[2], [1], [1], [2], [0, 0, 0, 1, 1, 2], [0], [0]>} : vector<4x8x8xf32>, vector<4x8x16xf32>, vector<4x8x16xf32> -> vector<4x8x16xf32>
    "tpu.trace_stop"() : () -> ()
    %109 = vector.extract_strided_slice %108 {offsets = [0, 0, 0], sizes = [1, 8, 16], strides = [1, 1, 1]} : vector<4x8x16xf32> to vector<1x8x16xf32>
    %110 = vector.shape_cast %109 : vector<1x8x16xf32> to vector<8x16xf32>
    %111 = vector.extract_strided_slice %108 {offsets = [1, 0, 0], sizes = [1, 8, 16], strides = [1, 1, 1]} : vector<4x8x16xf32> to vector<1x8x16xf32>
    %112 = vector.shape_cast %111 : vector<1x8x16xf32> to vector<8x16xf32>
    %113 = vector.extract_strided_slice %108 {offsets = [2, 0, 0], sizes = [1, 8, 16], strides = [1, 1, 1]} : vector<4x8x16xf32> to vector<1x8x16xf32>
    %114 = vector.shape_cast %113 : vector<1x8x16xf32> to vector<8x16xf32>
    %115 = vector.extract_strided_slice %108 {offsets = [3, 0, 0], sizes = [1, 8, 16], strides = [1, 1, 1]} : vector<4x8x16xf32> to vector<1x8x16xf32>
    %116 = vector.shape_cast %115 : vector<1x8x16xf32> to vector<8x16xf32>
    %117 = tpu.concatenate %110, %112, %114, %116 in 1 : vector<8x16xf32>, vector<8x16xf32>, vector<8x16xf32>, vector<8x16xf32> -> vector<8x64xf32>
    %118 = arith.mulf %117, %4 : vector<8x64xf32>
    %c0_44 = arith.constant 0 : index
    %c0_45 = arith.constant 0 : index
    %c0_46 = arith.constant 0 : index
    %c0_47 = arith.constant 0 : index
    %119 = vector.load %arg6[%c0_44, %c0_45, %c0_46, %c0_47] : memref<3x2x64x32xf32, #tpu.memory_space<vmem>>, vector<1x1x64x32xf32>
    %120 = vector.shape_cast %119 : vector<1x1x64x32xf32> to vector<64x32xf32>
    %cst_48 = arith.constant dense<0.000000e+00> : vector<8x32xf32>
    %121 = tpu.matmul %118, %120, %cst_48 {dimension_numbers = #tpu.dot_dimension_numbers<[1], [0], [0], [1], [0, 0, 1, 1], [], []>} : vector<8x64xf32>, vector<64x32xf32>, vector<8x32xf32> -> vector<8x32xf32>
    %122 = arith.addf %13, %121 : vector<8x32xf32>
    %123 = vector.broadcast %15 : vector<1x32xf32> to vector<8x32xf32>
    %124 = arith.addf %122, %123 : vector<8x32xf32>
    %cst_49 = arith.constant dense<0.000000e+00> : vector<8xf32>
    %125 = vector.multi_reduction <add>, %124, %cst_49 [1] : vector<8x32xf32> to vector<8xf32>
    %126 = vector.shape_cast %125 : vector<8xf32> to vector<8x1xf32>
    %cst_50 = arith.constant 3.200000e+01 : f32
    %127 = vector.broadcast %cst_50 : f32 to vector<8x1xf32>
    %128 = arith.divf %126, %127 : vector<8x1xf32>
    %129 = vector.broadcast %128 : vector<8x1xf32> to vector<8x32xf32>
    %130 = arith.subf %124, %129 : vector<8x32xf32>
    %131 = arith.mulf %130, %130 : vector<8x32xf32>
    %cst_51 = arith.constant dense<0.000000e+00> : vector<8xf32>
    %132 = vector.multi_reduction <add>, %131, %cst_51 [1] : vector<8x32xf32> to vector<8xf32>
    %133 = vector.shape_cast %132 : vector<8xf32> to vector<8x1xf32>
    %cst_52 = arith.constant 3.200000e+01 : f32
    %134 = vector.broadcast %cst_52 : f32 to vector<8x1xf32>
    %135 = arith.divf %133, %134 : vector<8x1xf32>
    %cst_53 = arith.constant 9.99999974E-6 : f32
    %136 = vector.broadcast %cst_53 : f32 to vector<8x1xf32>
    %137 = arith.addf %135, %136 : vector<8x1xf32>
    %138 = math.rsqrt %137 : vector<8x1xf32>
    %139 = vector.broadcast %138 : vector<8x1xf32> to vector<8x32xf32>
    %140 = arith.mulf %130, %139 : vector<8x32xf32>
    %141 = vector.broadcast %21 : vector<1x32xf32> to vector<8x32xf32>
    %142 = arith.mulf %140, %141 : vector<8x32xf32>
    %143 = vector.broadcast %23 : vector<1x32xf32> to vector<8x32xf32>
    %144 = arith.addf %142, %143 : vector<8x32xf32>
    %c0_54 = arith.constant 0 : index
    %c0_55 = arith.constant 0 : index
    %c0_56 = arith.constant 0 : index
    %c0_57 = arith.constant 0 : index
    %145 = vector.load %arg7[%c0_54, %c0_55, %c0_56, %c0_57] : memref<3x2x32x64xf32, #tpu.memory_space<vmem>>, vector<1x1x32x64xf32>
    %146 = vector.shape_cast %145 : vector<1x1x32x64xf32> to vector<32x64xf32>
    %cst_58 = arith.constant dense<0.000000e+00> : vector<8x64xf32>
    %147 = tpu.matmul %144, %146, %cst_58 {dimension_numbers = #tpu.dot_dimension_numbers<[1], [0], [0], [1], [0, 0, 1, 1], [], []>} : vector<8x32xf32>, vector<32x64xf32>, vector<8x64xf32> -> vector<8x64xf32>
    %148 = vector.broadcast %27 : vector<1x64xf32> to vector<8x64xf32>
    %149 = arith.addf %147, %148 : vector<8x64xf32>
    %150 = arith.mulf %149, %149 : vector<8x64xf32>
    %151 = arith.mulf %149, %150 : vector<8x64xf32>
    %cst_59 = arith.constant 4.471500e-02 : f32
    %152 = vector.broadcast %cst_59 : f32 to vector<8x64xf32>
    %153 = arith.mulf %152, %151 : vector<8x64xf32>
    %154 = arith.addf %149, %153 : vector<8x64xf32>
    %cst_60 = arith.constant 0.797884583 : f32
    %155 = vector.broadcast %cst_60 : f32 to vector<8x64xf32>
    %156 = arith.mulf %155, %154 : vector<8x64xf32>
    %157 = math.tanh %156 : vector<8x64xf32>
    %cst_61 = arith.constant 1.000000e+00 : f32
    %158 = vector.broadcast %cst_61 : f32 to vector<8x64xf32>
    %159 = arith.addf %158, %157 : vector<8x64xf32>
    %cst_62 = arith.constant 5.000000e-01 : f32
    %160 = vector.broadcast %cst_62 : f32 to vector<8x64xf32>
    %161 = arith.mulf %160, %159 : vector<8x64xf32>
    %162 = arith.mulf %149, %161 : vector<8x64xf32>
    %c0_63 = arith.constant 0 : index
    %c0_64 = arith.constant 0 : index
    %c0_65 = arith.constant 0 : index
    %c0_66 = arith.constant 0 : index
    %163 = vector.load %arg8[%c0_63, %c0_64, %c0_65, %c0_66] : memref<3x2x64x32xf32, #tpu.memory_space<vmem>>, vector<1x1x64x32xf32>
    %164 = vector.shape_cast %163 : vector<1x1x64x32xf32> to vector<64x32xf32>
    %cst_67 = arith.constant dense<0.000000e+00> : vector<8x32xf32>
    %165 = tpu.matmul %162, %164, %cst_67 {dimension_numbers = #tpu.dot_dimension_numbers<[1], [0], [0], [1], [0, 0, 1, 1], [], []>} : vector<8x64xf32>, vector<64x32xf32>, vector<8x32xf32> -> vector<8x32xf32>
    %166 = arith.addf %124, %165 : vector<8x32xf32>
    %167 = vector.broadcast %25 : vector<1x32xf32> to vector<8x32xf32>
    %168 = arith.addf %166, %167 : vector<8x32xf32>
    %c0_68 = arith.constant 0 : index
    %c7 = arith.constant 7 : index
    %c0_69 = arith.constant 0 : index
    %169 = vector.load %arg4[%c0_68, %c7, %c0_69] : memref<3x16x64xf32, #tpu.memory_space<vmem>>, vector<1x1x32xf32>
    %170 = vector.shape_cast %169 : vector<1x1x32xf32> to vector<1x32xf32>
    %c0_70 = arith.constant 0 : index
    %c8 = arith.constant 8 : index
    %c0_71 = arith.constant 0 : index
    %171 = vector.load %arg4[%c0_70, %c8, %c0_71] : memref<3x16x64xf32, #tpu.memory_space<vmem>>, vector<1x1x32xf32>
    %172 = vector.shape_cast %171 : vector<1x1x32xf32> to vector<1x32xf32>
    %c0_72 = arith.constant 0 : index
    %c9 = arith.constant 9 : index
    %c0_73 = arith.constant 0 : index
    %173 = vector.load %arg4[%c0_72, %c9, %c0_73] : memref<3x16x64xf32, #tpu.memory_space<vmem>>, vector<1x1x32xf32>
    %174 = vector.shape_cast %173 : vector<1x1x32xf32> to vector<1x32xf32>
    %c0_74 = arith.constant 0 : index
    %c10 = arith.constant 10 : index
    %c0_75 = arith.constant 0 : index
    %175 = vector.load %arg4[%c0_74, %c10, %c0_75] : memref<3x16x64xf32, #tpu.memory_space<vmem>>, vector<1x1x32xf32>
    %176 = vector.shape_cast %175 : vector<1x1x32xf32> to vector<1x32xf32>
    %c0_76 = arith.constant 0 : index
    %c11 = arith.constant 11 : index
    %c0_77 = arith.constant 0 : index
    %177 = vector.load %arg4[%c0_76, %c11, %c0_77] : memref<3x16x64xf32, #tpu.memory_space<vmem>>, vector<1x1x32xf32>
    %178 = vector.shape_cast %177 : vector<1x1x32xf32> to vector<1x32xf32>
    %c0_78 = arith.constant 0 : index
    %c12 = arith.constant 12 : index
    %c0_79 = arith.constant 0 : index
    %179 = vector.load %arg4[%c0_78, %c12, %c0_79] : memref<3x16x64xf32, #tpu.memory_space<vmem>>, vector<1x1x32xf32>
    %180 = vector.shape_cast %179 : vector<1x1x32xf32> to vector<1x32xf32>
    %c0_80 = arith.constant 0 : index
    %c13 = arith.constant 13 : index
    %c0_81 = arith.constant 0 : index
    %181 = vector.load %arg4[%c0_80, %c13, %c0_81] : memref<3x16x64xf32, #tpu.memory_space<vmem>>, vector<1x1x64xf32>
    %182 = vector.shape_cast %181 : vector<1x1x64xf32> to vector<1x64xf32>
    %cst_82 = arith.constant dense<0.000000e+00> : vector<8xf32>
    %183 = vector.multi_reduction <add>, %168, %cst_82 [1] : vector<8x32xf32> to vector<8xf32>
    %184 = vector.shape_cast %183 : vector<8xf32> to vector<8x1xf32>
    %cst_83 = arith.constant 3.200000e+01 : f32
    %185 = vector.broadcast %cst_83 : f32 to vector<8x1xf32>
    %186 = arith.divf %184, %185 : vector<8x1xf32>
    %187 = vector.broadcast %186 : vector<8x1xf32> to vector<8x32xf32>
    %188 = arith.subf %168, %187 : vector<8x32xf32>
    %189 = arith.mulf %188, %188 : vector<8x32xf32>
    %cst_84 = arith.constant dense<0.000000e+00> : vector<8xf32>
    %190 = vector.multi_reduction <add>, %189, %cst_84 [1] : vector<8x32xf32> to vector<8xf32>
    %191 = vector.shape_cast %190 : vector<8xf32> to vector<8x1xf32>
    %cst_85 = arith.constant 3.200000e+01 : f32
    %192 = vector.broadcast %cst_85 : f32 to vector<8x1xf32>
    %193 = arith.divf %191, %192 : vector<8x1xf32>
    %cst_86 = arith.constant 9.99999974E-6 : f32
    %194 = vector.broadcast %cst_86 : f32 to vector<8x1xf32>
    %195 = arith.addf %193, %194 : vector<8x1xf32>
    %196 = math.rsqrt %195 : vector<8x1xf32>
    %197 = vector.broadcast %196 : vector<8x1xf32> to vector<8x32xf32>
    %198 = arith.mulf %188, %197 : vector<8x32xf32>
    %199 = vector.broadcast %172 : vector<1x32xf32> to vector<8x32xf32>
    %200 = arith.mulf %198, %199 : vector<8x32xf32>
    %201 = vector.broadcast %174 : vector<1x32xf32> to vector<8x32xf32>
    %202 = arith.addf %200, %201 : vector<8x32xf32>
    %c0_87 = arith.constant 0 : index
    %c1_88 = arith.constant 1 : index
    %c0_89 = arith.constant 0 : index
    %c0_90 = arith.constant 0 : index
    %203 = vector.load %arg5[%c0_87, %c1_88, %c0_89, %c0_90] : memref<3x2x32x192xf32, #tpu.memory_space<vmem>>, vector<1x1x32x192xf32>
    %204 = vector.shape_cast %203 : vector<1x1x32x192xf32> to vector<32x192xf32>
    %cst_91 = arith.constant dense<0.000000e+00> : vector<8x192xf32>
    %205 = tpu.matmul %202, %204, %cst_91 {dimension_numbers = #tpu.dot_dimension_numbers<[1], [0], [0], [1], [0, 0, 1, 1], [], []>} : vector<8x32xf32>, vector<32x192xf32>, vector<8x192xf32> -> vector<8x192xf32>
    %206 = vector.extract_strided_slice %205 {offsets = [0, 0], sizes = [8, 16], strides = [1, 1]} : vector<8x192xf32> to vector<8x16xf32>
    %207 = vector.extract_strided_slice %205 {offsets = [0, 16], sizes = [8, 16], strides = [1, 1]} : vector<8x192xf32> to vector<8x16xf32>
    %208 = vector.extract_strided_slice %205 {offsets = [0, 32], sizes = [8, 16], strides = [1, 1]} : vector<8x192xf32> to vector<8x16xf32>
    %209 = vector.extract_strided_slice %205 {offsets = [0, 48], sizes = [8, 16], strides = [1, 1]} : vector<8x192xf32> to vector<8x16xf32>
    %210 = vector.shape_cast %206 : vector<8x16xf32> to vector<1x8x16xf32>
    %211 = vector.shape_cast %207 : vector<8x16xf32> to vector<1x8x16xf32>
    %212 = vector.shape_cast %208 : vector<8x16xf32> to vector<1x8x16xf32>
    %213 = vector.shape_cast %209 : vector<8x16xf32> to vector<1x8x16xf32>
    %214 = tpu.concatenate %210, %211, %212, %213 in 0 : vector<1x8x16xf32>, vector<1x8x16xf32>, vector<1x8x16xf32>, vector<1x8x16xf32> -> vector<4x8x16xf32>
    %215 = vector.extract_strided_slice %205 {offsets = [0, 64], sizes = [8, 16], strides = [1, 1]} : vector<8x192xf32> to vector<8x16xf32>
    %216 = vector.extract_strided_slice %205 {offsets = [0, 80], sizes = [8, 16], strides = [1, 1]} : vector<8x192xf32> to vector<8x16xf32>
    %217 = vector.extract_strided_slice %205 {offsets = [0, 96], sizes = [8, 16], strides = [1, 1]} : vector<8x192xf32> to vector<8x16xf32>
    %218 = vector.extract_strided_slice %205 {offsets = [0, 112], sizes = [8, 16], strides = [1, 1]} : vector<8x192xf32> to vector<8x16xf32>
    %219 = vector.shape_cast %215 : vector<8x16xf32> to vector<1x8x16xf32>
    %220 = vector.shape_cast %216 : vector<8x16xf32> to vector<1x8x16xf32>
    %221 = vector.shape_cast %217 : vector<8x16xf32> to vector<1x8x16xf32>
    %222 = vector.shape_cast %218 : vector<8x16xf32> to vector<1x8x16xf32>
    %223 = tpu.concatenate %219, %220, %221, %222 in 0 : vector<1x8x16xf32>, vector<1x8x16xf32>, vector<1x8x16xf32>, vector<1x8x16xf32> -> vector<4x8x16xf32>
    %224 = vector.extract_strided_slice %205 {offsets = [0, 128], sizes = [8, 16], strides = [1, 1]} : vector<8x192xf32> to vector<8x16xf32>
    %225 = vector.extract_strided_slice %205 {offsets = [0, 144], sizes = [8, 16], strides = [1, 1]} : vector<8x192xf32> to vector<8x16xf32>
    %226 = vector.extract_strided_slice %205 {offsets = [0, 160], sizes = [8, 16], strides = [1, 1]} : vector<8x192xf32> to vector<8x16xf32>
    %227 = vector.extract_strided_slice %205 {offsets = [0, 176], sizes = [8, 16], strides = [1, 1]} : vector<8x192xf32> to vector<8x16xf32>
    %228 = vector.shape_cast %224 : vector<8x16xf32> to vector<1x8x16xf32>
    %229 = vector.shape_cast %225 : vector<8x16xf32> to vector<1x8x16xf32>
    %230 = vector.shape_cast %226 : vector<8x16xf32> to vector<1x8x16xf32>
    %231 = vector.shape_cast %227 : vector<8x16xf32> to vector<1x8x16xf32>
    %232 = tpu.concatenate %228, %229, %230, %231 in 0 : vector<1x8x16xf32>, vector<1x8x16xf32>, vector<1x8x16xf32>, vector<1x8x16xf32> -> vector<4x8x16xf32>
    "tpu.trace_start"() <{level = 10 : i32, message = "hnd,hmd->hnm"}> : () -> ()
    %cst_92 = arith.constant dense<0.000000e+00> : vector<4x8x8xf32>
    %233 = tpu.matmul %214, %223, %cst_92 {dimension_numbers = #tpu.dot_dimension_numbers<[2], [2], [1], [1], [0, 0, 0, 1, 1, 1], [0], [0]>} : vector<4x8x16xf32>, vector<4x8x16xf32>, vector<4x8x8xf32> -> vector<4x8x8xf32>
    "tpu.trace_stop"() : () -> ()
    %cst_93 = arith.constant 2.500000e-01 : f32
    %234 = vector.broadcast %cst_93 : f32 to vector<4x8x8xf32>
    %235 = arith.mulf %233, %234 : vector<4x8x8xf32>
    %236 = vector.shape_cast %6 : vector<8x8xf32> to vector<1x8x8xf32>
    %237 = vector.broadcast %236 : vector<1x8x8xf32> to vector<4x8x8xf32>
    %238 = arith.mulf %235, %237 : vector<4x8x8xf32>
    %239 = arith.mulf %238, %238 : vector<4x8x8xf32>
    %cst_94 = arith.constant dense<0.000000e+00> : vector<4x8xf32>
    %240 = vector.multi_reduction <add>, %239, %cst_94 [2] : vector<4x8x8xf32> to vector<4x8xf32>
    %241 = vector.shape_cast %240 : vector<4x8xf32> to vector<4x8x1xf32>
    %242 = arith.mulf %235, %235 : vector<4x8x8xf32>
    %cst_95 = arith.constant dense<0.000000e+00> : vector<4x8xf32>
    %243 = vector.multi_reduction <add>, %242, %cst_95 [2] : vector<4x8x8xf32> to vector<4x8xf32>
    %244 = vector.shape_cast %243 : vector<4x8xf32> to vector<4x8x1xf32>
    %245 = math.sqrt %244 : vector<4x8x1xf32>
    %cst_96 = arith.constant 1.000000e-24 : f32
    %246 = vector.broadcast %cst_96 : f32 to vector<4x8x1xf32>
    %247 = arith.maximumf %241, %246 : vector<4x8x1xf32>
    %248 = math.rsqrt %247 : vector<4x8x1xf32>
    %249 = arith.mulf %245, %248 : vector<4x8x1xf32>
    %250 = vector.broadcast %249 : vector<4x8x1xf32> to vector<4x8x8xf32>
    %251 = arith.mulf %238, %250 : vector<4x8x8xf32>
    %252 = arith.addf %235, %251 : vector<4x8x8xf32>
    %cst_97 = arith.constant dense<0xFF800000> : vector<4x8xf32>
    %253 = vector.multi_reduction <maximumf>, %252, %cst_97 [2] : vector<4x8x8xf32> to vector<4x8xf32>
    %254 = vector.shape_cast %253 : vector<4x8xf32> to vector<4x8x1xf32>
    %255 = vector.broadcast %254 : vector<4x8x1xf32> to vector<4x8x8xf32>
    %256 = arith.subf %252, %255 : vector<4x8x8xf32>
    %257 = math.exp %256 : vector<4x8x8xf32>
    %cst_98 = arith.constant dense<0.000000e+00> : vector<4x8xf32>
    %258 = vector.multi_reduction <add>, %257, %cst_98 [2] : vector<4x8x8xf32> to vector<4x8xf32>
    %259 = vector.shape_cast %258 : vector<4x8xf32> to vector<4x8x1xf32>
    %260 = tpu.reciprocal %259 {approx = true} : vector<4x8x1xf32> -> vector<4x8x1xf32>
    %261 = vector.broadcast %260 : vector<4x8x1xf32> to vector<4x8x8xf32>
    %262 = arith.mulf %257, %261 : vector<4x8x8xf32>
    "tpu.trace_start"() <{level = 10 : i32, message = "hnm,hmd->hnd"}> : () -> ()
    %cst_99 = arith.constant dense<0.000000e+00> : vector<4x8x16xf32>
    %263 = tpu.matmul %262, %232, %cst_99 {dimension_numbers = #tpu.dot_dimension_numbers<[2], [1], [1], [2], [0, 0, 0, 1, 1, 2], [0], [0]>} : vector<4x8x8xf32>, vector<4x8x16xf32>, vector<4x8x16xf32> -> vector<4x8x16xf32>
    "tpu.trace_stop"() : () -> ()
    %264 = vector.extract_strided_slice %263 {offsets = [0, 0, 0], sizes = [1, 8, 16], strides = [1, 1, 1]} : vector<4x8x16xf32> to vector<1x8x16xf32>
    %265 = vector.shape_cast %264 : vector<1x8x16xf32> to vector<8x16xf32>
    %266 = vector.extract_strided_slice %263 {offsets = [1, 0, 0], sizes = [1, 8, 16], strides = [1, 1, 1]} : vector<4x8x16xf32> to vector<1x8x16xf32>
    %267 = vector.shape_cast %266 : vector<1x8x16xf32> to vector<8x16xf32>
    %268 = vector.extract_strided_slice %263 {offsets = [2, 0, 0], sizes = [1, 8, 16], strides = [1, 1, 1]} : vector<4x8x16xf32> to vector<1x8x16xf32>
    %269 = vector.shape_cast %268 : vector<1x8x16xf32> to vector<8x16xf32>
    %270 = vector.extract_strided_slice %263 {offsets = [3, 0, 0], sizes = [1, 8, 16], strides = [1, 1, 1]} : vector<4x8x16xf32> to vector<1x8x16xf32>
    %271 = vector.shape_cast %270 : vector<1x8x16xf32> to vector<8x16xf32>
    %272 = tpu.concatenate %265, %267, %269, %271 in 1 : vector<8x16xf32>, vector<8x16xf32>, vector<8x16xf32>, vector<8x16xf32> -> vector<8x64xf32>
    %273 = arith.mulf %272, %4 : vector<8x64xf32>
    %c0_100 = arith.constant 0 : index
    %c1_101 = arith.constant 1 : index
    %c0_102 = arith.constant 0 : index
    %c0_103 = arith.constant 0 : index
    %274 = vector.load %arg6[%c0_100, %c1_101, %c0_102, %c0_103] : memref<3x2x64x32xf32, #tpu.memory_space<vmem>>, vector<1x1x64x32xf32>
    %275 = vector.shape_cast %274 : vector<1x1x64x32xf32> to vector<64x32xf32>
    %cst_104 = arith.constant dense<0.000000e+00> : vector<8x32xf32>
    %276 = tpu.matmul %273, %275, %cst_104 {dimension_numbers = #tpu.dot_dimension_numbers<[1], [0], [0], [1], [0, 0, 1, 1], [], []>} : vector<8x64xf32>, vector<64x32xf32>, vector<8x32xf32> -> vector<8x32xf32>
    %277 = arith.addf %168, %276 : vector<8x32xf32>
    %278 = vector.broadcast %170 : vector<1x32xf32> to vector<8x32xf32>
    %279 = arith.addf %277, %278 : vector<8x32xf32>
    %cst_105 = arith.constant dense<0.000000e+00> : vector<8xf32>
    %280 = vector.multi_reduction <add>, %279, %cst_105 [1] : vector<8x32xf32> to vector<8xf32>
    %281 = vector.shape_cast %280 : vector<8xf32> to vector<8x1xf32>
    %cst_106 = arith.constant 3.200000e+01 : f32
    %282 = vector.broadcast %cst_106 : f32 to vector<8x1xf32>
    %283 = arith.divf %281, %282 : vector<8x1xf32>
    %284 = vector.broadcast %283 : vector<8x1xf32> to vector<8x32xf32>
    %285 = arith.subf %279, %284 : vector<8x32xf32>
    %286 = arith.mulf %285, %285 : vector<8x32xf32>
    %cst_107 = arith.constant dense<0.000000e+00> : vector<8xf32>
    %287 = vector.multi_reduction <add>, %286, %cst_107 [1] : vector<8x32xf32> to vector<8xf32>
    %288 = vector.shape_cast %287 : vector<8xf32> to vector<8x1xf32>
    %cst_108 = arith.constant 3.200000e+01 : f32
    %289 = vector.broadcast %cst_108 : f32 to vector<8x1xf32>
    %290 = arith.divf %288, %289 : vector<8x1xf32>
    %cst_109 = arith.constant 9.99999974E-6 : f32
    %291 = vector.broadcast %cst_109 : f32 to vector<8x1xf32>
    %292 = arith.addf %290, %291 : vector<8x1xf32>
    %293 = math.rsqrt %292 : vector<8x1xf32>
    %294 = vector.broadcast %293 : vector<8x1xf32> to vector<8x32xf32>
    %295 = arith.mulf %285, %294 : vector<8x32xf32>
    %296 = vector.broadcast %176 : vector<1x32xf32> to vector<8x32xf32>
    %297 = arith.mulf %295, %296 : vector<8x32xf32>
    %298 = vector.broadcast %178 : vector<1x32xf32> to vector<8x32xf32>
    %299 = arith.addf %297, %298 : vector<8x32xf32>
    %c0_110 = arith.constant 0 : index
    %c1_111 = arith.constant 1 : index
    %c0_112 = arith.constant 0 : index
    %c0_113 = arith.constant 0 : index
    %300 = vector.load %arg7[%c0_110, %c1_111, %c0_112, %c0_113] : memref<3x2x32x64xf32, #tpu.memory_space<vmem>>, vector<1x1x32x64xf32>
    %301 = vector.shape_cast %300 : vector<1x1x32x64xf32> to vector<32x64xf32>
    %cst_114 = arith.constant dense<0.000000e+00> : vector<8x64xf32>
    %302 = tpu.matmul %299, %301, %cst_114 {dimension_numbers = #tpu.dot_dimension_numbers<[1], [0], [0], [1], [0, 0, 1, 1], [], []>} : vector<8x32xf32>, vector<32x64xf32>, vector<8x64xf32> -> vector<8x64xf32>
    %303 = vector.broadcast %182 : vector<1x64xf32> to vector<8x64xf32>
    %304 = arith.addf %302, %303 : vector<8x64xf32>
    %305 = arith.mulf %304, %304 : vector<8x64xf32>
    %306 = arith.mulf %304, %305 : vector<8x64xf32>
    %cst_115 = arith.constant 4.471500e-02 : f32
    %307 = vector.broadcast %cst_115 : f32 to vector<8x64xf32>
    %308 = arith.mulf %307, %306 : vector<8x64xf32>
    %309 = arith.addf %304, %308 : vector<8x64xf32>
    %cst_116 = arith.constant 0.797884583 : f32
    %310 = vector.broadcast %cst_116 : f32 to vector<8x64xf32>
    %311 = arith.mulf %310, %309 : vector<8x64xf32>
    %312 = math.tanh %311 : vector<8x64xf32>
    %cst_117 = arith.constant 1.000000e+00 : f32
    %313 = vector.broadcast %cst_117 : f32 to vector<8x64xf32>
    %314 = arith.addf %313, %312 : vector<8x64xf32>
    %cst_118 = arith.constant 5.000000e-01 : f32
    %315 = vector.broadcast %cst_118 : f32 to vector<8x64xf32>
    %316 = arith.mulf %315, %314 : vector<8x64xf32>
    %317 = arith.mulf %304, %316 : vector<8x64xf32>
    %c0_119 = arith.constant 0 : index
    %c1_120 = arith.constant 1 : index
    %c0_121 = arith.constant 0 : index
    %c0_122 = arith.constant 0 : index
    %318 = vector.load %arg8[%c0_119, %c1_120, %c0_121, %c0_122] : memref<3x2x64x32xf32, #tpu.memory_space<vmem>>, vector<1x1x64x32xf32>
    %319 = vector.shape_cast %318 : vector<1x1x64x32xf32> to vector<64x32xf32>
    %cst_123 = arith.constant dense<0.000000e+00> : vector<8x32xf32>
    %320 = tpu.matmul %317, %319, %cst_123 {dimension_numbers = #tpu.dot_dimension_numbers<[1], [0], [0], [1], [0, 0, 1, 1], [], []>} : vector<8x64xf32>, vector<64x32xf32>, vector<8x32xf32> -> vector<8x32xf32>
    %321 = arith.addf %279, %320 : vector<8x32xf32>
    %322 = vector.broadcast %180 : vector<1x32xf32> to vector<8x32xf32>
    %323 = arith.addf %321, %322 : vector<8x32xf32>
    %324 = tpu.concatenate %0, %323 in 1 : vector<8x32xf32>, vector<8x32xf32> -> vector<8x64xf32>
    %c1_124 = arith.constant 1 : index
    %c0_125 = arith.constant 0 : index
    %c0_126 = arith.constant 0 : index
    %325 = vector.load %arg2[%c1_124, %c0_125, %c0_126] : memref<3x8x8xf32, #tpu.memory_space<vmem>>, vector<1x8x8xf32>
    %326 = vector.shape_cast %325 : vector<1x8x8xf32> to vector<8x8xf32>
    %c1_127 = arith.constant 1 : index
    %c14_128 = arith.constant 14 : index
    %c0_129 = arith.constant 0 : index
    %327 = vector.load %arg4[%c1_127, %c14_128, %c0_129] : memref<3x16x64xf32, #tpu.memory_space<vmem>>, vector<1x1x32xf32>
    %328 = vector.shape_cast %327 : vector<1x1x32xf32> to vector<1x32xf32>
    %c1_130 = arith.constant 1 : index
    %c0_131 = arith.constant 0 : index
    %c0_132 = arith.constant 0 : index
    %329 = vector.load %arg3[%c1_130, %c0_131, %c0_132] : memref<3x96x32xf32, #tpu.memory_space<vmem>>, vector<1x64x32xf32>
    %330 = vector.shape_cast %329 : vector<1x64x32xf32> to vector<64x32xf32>
    %cst_133 = arith.constant dense<0.000000e+00> : vector<8x32xf32>
    %331 = tpu.matmul %324, %330, %cst_133 {dimension_numbers = #tpu.dot_dimension_numbers<[1], [0], [0], [1], [0, 0, 1, 1], [], []>} : vector<8x64xf32>, vector<64x32xf32>, vector<8x32xf32> -> vector<8x32xf32>
    %332 = vector.broadcast %328 : vector<1x32xf32> to vector<8x32xf32>
    %333 = arith.addf %331, %332 : vector<8x32xf32>
    %c1_134 = arith.constant 1 : index
    %c0_135 = arith.constant 0 : index
    %c0_136 = arith.constant 0 : index
    %334 = vector.load %arg4[%c1_134, %c0_135, %c0_136] : memref<3x16x64xf32, #tpu.memory_space<vmem>>, vector<1x1x32xf32>
    %335 = vector.shape_cast %334 : vector<1x1x32xf32> to vector<1x32xf32>
    %c1_137 = arith.constant 1 : index
    %c1_138 = arith.constant 1 : index
    %c0_139 = arith.constant 0 : index
    %336 = vector.load %arg4[%c1_137, %c1_138, %c0_139] : memref<3x16x64xf32, #tpu.memory_space<vmem>>, vector<1x1x32xf32>
    %337 = vector.shape_cast %336 : vector<1x1x32xf32> to vector<1x32xf32>
    %c1_140 = arith.constant 1 : index
    %c2_141 = arith.constant 2 : index
    %c0_142 = arith.constant 0 : index
    %338 = vector.load %arg4[%c1_140, %c2_141, %c0_142] : memref<3x16x64xf32, #tpu.memory_space<vmem>>, vector<1x1x32xf32>
    %339 = vector.shape_cast %338 : vector<1x1x32xf32> to vector<1x32xf32>
    %c1_143 = arith.constant 1 : index
    %c3_144 = arith.constant 3 : index
    %c0_145 = arith.constant 0 : index
    %340 = vector.load %arg4[%c1_143, %c3_144, %c0_145] : memref<3x16x64xf32, #tpu.memory_space<vmem>>, vector<1x1x32xf32>
    %341 = vector.shape_cast %340 : vector<1x1x32xf32> to vector<1x32xf32>
    %c1_146 = arith.constant 1 : index
    %c4_147 = arith.constant 4 : index
    %c0_148 = arith.constant 0 : index
    %342 = vector.load %arg4[%c1_146, %c4_147, %c0_148] : memref<3x16x64xf32, #tpu.memory_space<vmem>>, vector<1x1x32xf32>
    %343 = vector.shape_cast %342 : vector<1x1x32xf32> to vector<1x32xf32>
    %c1_149 = arith.constant 1 : index
    %c5_150 = arith.constant 5 : index
    %c0_151 = arith.constant 0 : index
    %344 = vector.load %arg4[%c1_149, %c5_150, %c0_151] : memref<3x16x64xf32, #tpu.memory_space<vmem>>, vector<1x1x32xf32>
    %345 = vector.shape_cast %344 : vector<1x1x32xf32> to vector<1x32xf32>
    %c1_152 = arith.constant 1 : index
    %c6_153 = arith.constant 6 : index
    %c0_154 = arith.constant 0 : index
    %346 = vector.load %arg4[%c1_152, %c6_153, %c0_154] : memref<3x16x64xf32, #tpu.memory_space<vmem>>, vector<1x1x64xf32>
    %347 = vector.shape_cast %346 : vector<1x1x64xf32> to vector<1x64xf32>
    %cst_155 = arith.constant dense<0.000000e+00> : vector<8xf32>
    %348 = vector.multi_reduction <add>, %333, %cst_155 [1] : vector<8x32xf32> to vector<8xf32>
    %349 = vector.shape_cast %348 : vector<8xf32> to vector<8x1xf32>
    %cst_156 = arith.constant 3.200000e+01 : f32
    %350 = vector.broadcast %cst_156 : f32 to vector<8x1xf32>
    %351 = arith.divf %349, %350 : vector<8x1xf32>
    %352 = vector.broadcast %351 : vector<8x1xf32> to vector<8x32xf32>
    %353 = arith.subf %333, %352 : vector<8x32xf32>
    %354 = arith.mulf %353, %353 : vector<8x32xf32>
    %cst_157 = arith.constant dense<0.000000e+00> : vector<8xf32>
    %355 = vector.multi_reduction <add>, %354, %cst_157 [1] : vector<8x32xf32> to vector<8xf32>
    %356 = vector.shape_cast %355 : vector<8xf32> to vector<8x1xf32>
    %cst_158 = arith.constant 3.200000e+01 : f32
    %357 = vector.broadcast %cst_158 : f32 to vector<8x1xf32>
    %358 = arith.divf %356, %357 : vector<8x1xf32>
    %cst_159 = arith.constant 9.99999974E-6 : f32
    %359 = vector.broadcast %cst_159 : f32 to vector<8x1xf32>
    %360 = arith.addf %358, %359 : vector<8x1xf32>
    %361 = math.rsqrt %360 : vector<8x1xf32>
    %362 = vector.broadcast %361 : vector<8x1xf32> to vector<8x32xf32>
    %363 = arith.mulf %353, %362 : vector<8x32xf32>
    %364 = vector.broadcast %337 : vector<1x32xf32> to vector<8x32xf32>
    %365 = arith.mulf %363, %364 : vector<8x32xf32>
    %366 = vector.broadcast %339 : vector<1x32xf32> to vector<8x32xf32>
    %367 = arith.addf %365, %366 : vector<8x32xf32>
    %c1_160 = arith.constant 1 : index
    %c0_161 = arith.constant 0 : index
    %c0_162 = arith.constant 0 : index
    %c0_163 = arith.constant 0 : index
    %368 = vector.load %arg5[%c1_160, %c0_161, %c0_162, %c0_163] : memref<3x2x32x192xf32, #tpu.memory_space<vmem>>, vector<1x1x32x192xf32>
    %369 = vector.shape_cast %368 : vector<1x1x32x192xf32> to vector<32x192xf32>
    %cst_164 = arith.constant dense<0.000000e+00> : vector<8x192xf32>
    %370 = tpu.matmul %367, %369, %cst_164 {dimension_numbers = #tpu.dot_dimension_numbers<[1], [0], [0], [1], [0, 0, 1, 1], [], []>} : vector<8x32xf32>, vector<32x192xf32>, vector<8x192xf32> -> vector<8x192xf32>
    %371 = vector.extract_strided_slice %370 {offsets = [0, 0], sizes = [8, 16], strides = [1, 1]} : vector<8x192xf32> to vector<8x16xf32>
    %372 = vector.extract_strided_slice %370 {offsets = [0, 16], sizes = [8, 16], strides = [1, 1]} : vector<8x192xf32> to vector<8x16xf32>
    %373 = vector.extract_strided_slice %370 {offsets = [0, 32], sizes = [8, 16], strides = [1, 1]} : vector<8x192xf32> to vector<8x16xf32>
    %374 = vector.extract_strided_slice %370 {offsets = [0, 48], sizes = [8, 16], strides = [1, 1]} : vector<8x192xf32> to vector<8x16xf32>
    %375 = vector.shape_cast %371 : vector<8x16xf32> to vector<1x8x16xf32>
    %376 = vector.shape_cast %372 : vector<8x16xf32> to vector<1x8x16xf32>
    %377 = vector.shape_cast %373 : vector<8x16xf32> to vector<1x8x16xf32>
    %378 = vector.shape_cast %374 : vector<8x16xf32> to vector<1x8x16xf32>
    %379 = tpu.concatenate %375, %376, %377, %378 in 0 : vector<1x8x16xf32>, vector<1x8x16xf32>, vector<1x8x16xf32>, vector<1x8x16xf32> -> vector<4x8x16xf32>
    %380 = vector.extract_strided_slice %370 {offsets = [0, 64], sizes = [8, 16], strides = [1, 1]} : vector<8x192xf32> to vector<8x16xf32>
    %381 = vector.extract_strided_slice %370 {offsets = [0, 80], sizes = [8, 16], strides = [1, 1]} : vector<8x192xf32> to vector<8x16xf32>
    %382 = vector.extract_strided_slice %370 {offsets = [0, 96], sizes = [8, 16], strides = [1, 1]} : vector<8x192xf32> to vector<8x16xf32>
    %383 = vector.extract_strided_slice %370 {offsets = [0, 112], sizes = [8, 16], strides = [1, 1]} : vector<8x192xf32> to vector<8x16xf32>
    %384 = vector.shape_cast %380 : vector<8x16xf32> to vector<1x8x16xf32>
    %385 = vector.shape_cast %381 : vector<8x16xf32> to vector<1x8x16xf32>
    %386 = vector.shape_cast %382 : vector<8x16xf32> to vector<1x8x16xf32>
    %387 = vector.shape_cast %383 : vector<8x16xf32> to vector<1x8x16xf32>
    %388 = tpu.concatenate %384, %385, %386, %387 in 0 : vector<1x8x16xf32>, vector<1x8x16xf32>, vector<1x8x16xf32>, vector<1x8x16xf32> -> vector<4x8x16xf32>
    %389 = vector.extract_strided_slice %370 {offsets = [0, 128], sizes = [8, 16], strides = [1, 1]} : vector<8x192xf32> to vector<8x16xf32>
    %390 = vector.extract_strided_slice %370 {offsets = [0, 144], sizes = [8, 16], strides = [1, 1]} : vector<8x192xf32> to vector<8x16xf32>
    %391 = vector.extract_strided_slice %370 {offsets = [0, 160], sizes = [8, 16], strides = [1, 1]} : vector<8x192xf32> to vector<8x16xf32>
    %392 = vector.extract_strided_slice %370 {offsets = [0, 176], sizes = [8, 16], strides = [1, 1]} : vector<8x192xf32> to vector<8x16xf32>
    %393 = vector.shape_cast %389 : vector<8x16xf32> to vector<1x8x16xf32>
    %394 = vector.shape_cast %390 : vector<8x16xf32> to vector<1x8x16xf32>
    %395 = vector.shape_cast %391 : vector<8x16xf32> to vector<1x8x16xf32>
    %396 = vector.shape_cast %392 : vector<8x16xf32> to vector<1x8x16xf32>
    %397 = tpu.concatenate %393, %394, %395, %396 in 0 : vector<1x8x16xf32>, vector<1x8x16xf32>, vector<1x8x16xf32>, vector<1x8x16xf32> -> vector<4x8x16xf32>
    "tpu.trace_start"() <{level = 10 : i32, message = "hnd,hmd->hnm"}> : () -> ()
    %cst_165 = arith.constant dense<0.000000e+00> : vector<4x8x8xf32>
    %398 = tpu.matmul %379, %388, %cst_165 {dimension_numbers = #tpu.dot_dimension_numbers<[2], [2], [1], [1], [0, 0, 0, 1, 1, 1], [0], [0]>} : vector<4x8x16xf32>, vector<4x8x16xf32>, vector<4x8x8xf32> -> vector<4x8x8xf32>
    "tpu.trace_stop"() : () -> ()
    %cst_166 = arith.constant 2.500000e-01 : f32
    %399 = vector.broadcast %cst_166 : f32 to vector<4x8x8xf32>
    %400 = arith.mulf %398, %399 : vector<4x8x8xf32>
    %401 = vector.shape_cast %326 : vector<8x8xf32> to vector<1x8x8xf32>
    %402 = vector.broadcast %401 : vector<1x8x8xf32> to vector<4x8x8xf32>
    %403 = arith.mulf %400, %402 : vector<4x8x8xf32>
    %404 = arith.mulf %403, %403 : vector<4x8x8xf32>
    %cst_167 = arith.constant dense<0.000000e+00> : vector<4x8xf32>
    %405 = vector.multi_reduction <add>, %404, %cst_167 [2] : vector<4x8x8xf32> to vector<4x8xf32>
    %406 = vector.shape_cast %405 : vector<4x8xf32> to vector<4x8x1xf32>
    %407 = arith.mulf %400, %400 : vector<4x8x8xf32>
    %cst_168 = arith.constant dense<0.000000e+00> : vector<4x8xf32>
    %408 = vector.multi_reduction <add>, %407, %cst_168 [2] : vector<4x8x8xf32> to vector<4x8xf32>
    %409 = vector.shape_cast %408 : vector<4x8xf32> to vector<4x8x1xf32>
    %410 = math.sqrt %409 : vector<4x8x1xf32>
    %cst_169 = arith.constant 1.000000e-24 : f32
    %411 = vector.broadcast %cst_169 : f32 to vector<4x8x1xf32>
    %412 = arith.maximumf %406, %411 : vector<4x8x1xf32>
    %413 = math.rsqrt %412 : vector<4x8x1xf32>
    %414 = arith.mulf %410, %413 : vector<4x8x1xf32>
    %415 = vector.broadcast %414 : vector<4x8x1xf32> to vector<4x8x8xf32>
    %416 = arith.mulf %403, %415 : vector<4x8x8xf32>
    %417 = arith.addf %400, %416 : vector<4x8x8xf32>
    %cst_170 = arith.constant dense<0xFF800000> : vector<4x8xf32>
    %418 = vector.multi_reduction <maximumf>, %417, %cst_170 [2] : vector<4x8x8xf32> to vector<4x8xf32>
    %419 = vector.shape_cast %418 : vector<4x8xf32> to vector<4x8x1xf32>
    %420 = vector.broadcast %419 : vector<4x8x1xf32> to vector<4x8x8xf32>
    %421 = arith.subf %417, %420 : vector<4x8x8xf32>
    %422 = math.exp %421 : vector<4x8x8xf32>
    %cst_171 = arith.constant dense<0.000000e+00> : vector<4x8xf32>
    %423 = vector.multi_reduction <add>, %422, %cst_171 [2] : vector<4x8x8xf32> to vector<4x8xf32>
    %424 = vector.shape_cast %423 : vector<4x8xf32> to vector<4x8x1xf32>
    %425 = tpu.reciprocal %424 {approx = true} : vector<4x8x1xf32> -> vector<4x8x1xf32>
    %426 = vector.broadcast %425 : vector<4x8x1xf32> to vector<4x8x8xf32>
    %427 = arith.mulf %422, %426 : vector<4x8x8xf32>
    "tpu.trace_start"() <{level = 10 : i32, message = "hnm,hmd->hnd"}> : () -> ()
    %cst_172 = arith.constant dense<0.000000e+00> : vector<4x8x16xf32>
    %428 = tpu.matmul %427, %397, %cst_172 {dimension_numbers = #tpu.dot_dimension_numbers<[2], [1], [1], [2], [0, 0, 0, 1, 1, 2], [0], [0]>} : vector<4x8x8xf32>, vector<4x8x16xf32>, vector<4x8x16xf32> -> vector<4x8x16xf32>
    "tpu.trace_stop"() : () -> ()
    %429 = vector.extract_strided_slice %428 {offsets = [0, 0, 0], sizes = [1, 8, 16], strides = [1, 1, 1]} : vector<4x8x16xf32> to vector<1x8x16xf32>
    %430 = vector.shape_cast %429 : vector<1x8x16xf32> to vector<8x16xf32>
    %431 = vector.extract_strided_slice %428 {offsets = [1, 0, 0], sizes = [1, 8, 16], strides = [1, 1, 1]} : vector<4x8x16xf32> to vector<1x8x16xf32>
    %432 = vector.shape_cast %431 : vector<1x8x16xf32> to vector<8x16xf32>
    %433 = vector.extract_strided_slice %428 {offsets = [2, 0, 0], sizes = [1, 8, 16], strides = [1, 1, 1]} : vector<4x8x16xf32> to vector<1x8x16xf32>
    %434 = vector.shape_cast %433 : vector<1x8x16xf32> to vector<8x16xf32>
    %435 = vector.extract_strided_slice %428 {offsets = [3, 0, 0], sizes = [1, 8, 16], strides = [1, 1, 1]} : vector<4x8x16xf32> to vector<1x8x16xf32>
    %436 = vector.shape_cast %435 : vector<1x8x16xf32> to vector<8x16xf32>
    %437 = tpu.concatenate %430, %432, %434, %436 in 1 : vector<8x16xf32>, vector<8x16xf32>, vector<8x16xf32>, vector<8x16xf32> -> vector<8x64xf32>
    %438 = arith.mulf %437, %4 : vector<8x64xf32>
    %c1_173 = arith.constant 1 : index
    %c0_174 = arith.constant 0 : index
    %c0_175 = arith.constant 0 : index
    %c0_176 = arith.constant 0 : index
    %439 = vector.load %arg6[%c1_173, %c0_174, %c0_175, %c0_176] : memref<3x2x64x32xf32, #tpu.memory_space<vmem>>, vector<1x1x64x32xf32>
    %440 = vector.shape_cast %439 : vector<1x1x64x32xf32> to vector<64x32xf32>
    %cst_177 = arith.constant dense<0.000000e+00> : vector<8x32xf32>
    %441 = tpu.matmul %438, %440, %cst_177 {dimension_numbers = #tpu.dot_dimension_numbers<[1], [0], [0], [1], [0, 0, 1, 1], [], []>} : vector<8x64xf32>, vector<64x32xf32>, vector<8x32xf32> -> vector<8x32xf32>
    %442 = arith.addf %333, %441 : vector<8x32xf32>
    %443 = vector.broadcast %335 : vector<1x32xf32> to vector<8x32xf32>
    %444 = arith.addf %442, %443 : vector<8x32xf32>
    %cst_178 = arith.constant dense<0.000000e+00> : vector<8xf32>
    %445 = vector.multi_reduction <add>, %444, %cst_178 [1] : vector<8x32xf32> to vector<8xf32>
    %446 = vector.shape_cast %445 : vector<8xf32> to vector<8x1xf32>
    %cst_179 = arith.constant 3.200000e+01 : f32
    %447 = vector.broadcast %cst_179 : f32 to vector<8x1xf32>
    %448 = arith.divf %446, %447 : vector<8x1xf32>
    %449 = vector.broadcast %448 : vector<8x1xf32> to vector<8x32xf32>
    %450 = arith.subf %444, %449 : vector<8x32xf32>
    %451 = arith.mulf %450, %450 : vector<8x32xf32>
    %cst_180 = arith.constant dense<0.000000e+00> : vector<8xf32>
    %452 = vector.multi_reduction <add>, %451, %cst_180 [1] : vector<8x32xf32> to vector<8xf32>
    %453 = vector.shape_cast %452 : vector<8xf32> to vector<8x1xf32>
    %cst_181 = arith.constant 3.200000e+01 : f32
    %454 = vector.broadcast %cst_181 : f32 to vector<8x1xf32>
    %455 = arith.divf %453, %454 : vector<8x1xf32>
    %cst_182 = arith.constant 9.99999974E-6 : f32
    %456 = vector.broadcast %cst_182 : f32 to vector<8x1xf32>
    %457 = arith.addf %455, %456 : vector<8x1xf32>
    %458 = math.rsqrt %457 : vector<8x1xf32>
    %459 = vector.broadcast %458 : vector<8x1xf32> to vector<8x32xf32>
    %460 = arith.mulf %450, %459 : vector<8x32xf32>
    %461 = vector.broadcast %341 : vector<1x32xf32> to vector<8x32xf32>
    %462 = arith.mulf %460, %461 : vector<8x32xf32>
    %463 = vector.broadcast %343 : vector<1x32xf32> to vector<8x32xf32>
    %464 = arith.addf %462, %463 : vector<8x32xf32>
    %c1_183 = arith.constant 1 : index
    %c0_184 = arith.constant 0 : index
    %c0_185 = arith.constant 0 : index
    %c0_186 = arith.constant 0 : index
    %465 = vector.load %arg7[%c1_183, %c0_184, %c0_185, %c0_186] : memref<3x2x32x64xf32, #tpu.memory_space<vmem>>, vector<1x1x32x64xf32>
    %466 = vector.shape_cast %465 : vector<1x1x32x64xf32> to vector<32x64xf32>
    %cst_187 = arith.constant dense<0.000000e+00> : vector<8x64xf32>
    %467 = tpu.matmul %464, %466, %cst_187 {dimension_numbers = #tpu.dot_dimension_numbers<[1], [0], [0], [1], [0, 0, 1, 1], [], []>} : vector<8x32xf32>, vector<32x64xf32>, vector<8x64xf32> -> vector<8x64xf32>
    %468 = vector.broadcast %347 : vector<1x64xf32> to vector<8x64xf32>
    %469 = arith.addf %467, %468 : vector<8x64xf32>
    %470 = arith.mulf %469, %469 : vector<8x64xf32>
    %471 = arith.mulf %469, %470 : vector<8x64xf32>
    %cst_188 = arith.constant 4.471500e-02 : f32
    %472 = vector.broadcast %cst_188 : f32 to vector<8x64xf32>
    %473 = arith.mulf %472, %471 : vector<8x64xf32>
    %474 = arith.addf %469, %473 : vector<8x64xf32>
    %cst_189 = arith.constant 0.797884583 : f32
    %475 = vector.broadcast %cst_189 : f32 to vector<8x64xf32>
    %476 = arith.mulf %475, %474 : vector<8x64xf32>
    %477 = math.tanh %476 : vector<8x64xf32>
    %cst_190 = arith.constant 1.000000e+00 : f32
    %478 = vector.broadcast %cst_190 : f32 to vector<8x64xf32>
    %479 = arith.addf %478, %477 : vector<8x64xf32>
    %cst_191 = arith.constant 5.000000e-01 : f32
    %480 = vector.broadcast %cst_191 : f32 to vector<8x64xf32>
    %481 = arith.mulf %480, %479 : vector<8x64xf32>
    %482 = arith.mulf %469, %481 : vector<8x64xf32>
    %c1_192 = arith.constant 1 : index
    %c0_193 = arith.constant 0 : index
    %c0_194 = arith.constant 0 : index
    %c0_195 = arith.constant 0 : index
    %483 = vector.load %arg8[%c1_192, %c0_193, %c0_194, %c0_195] : memref<3x2x64x32xf32, #tpu.memory_space<vmem>>, vector<1x1x64x32xf32>
    %484 = vector.shape_cast %483 : vector<1x1x64x32xf32> to vector<64x32xf32>
    %cst_196 = arith.constant dense<0.000000e+00> : vector<8x32xf32>
    %485 = tpu.matmul %482, %484, %cst_196 {dimension_numbers = #tpu.dot_dimension_numbers<[1], [0], [0], [1], [0, 0, 1, 1], [], []>} : vector<8x64xf32>, vector<64x32xf32>, vector<8x32xf32> -> vector<8x32xf32>
    %486 = arith.addf %444, %485 : vector<8x32xf32>
    %487 = vector.broadcast %345 : vector<1x32xf32> to vector<8x32xf32>
    %488 = arith.addf %486, %487 : vector<8x32xf32>
    %c1_197 = arith.constant 1 : index
    %c7_198 = arith.constant 7 : index
    %c0_199 = arith.constant 0 : index
    %489 = vector.load %arg4[%c1_197, %c7_198, %c0_199] : memref<3x16x64xf32, #tpu.memory_space<vmem>>, vector<1x1x32xf32>
    %490 = vector.shape_cast %489 : vector<1x1x32xf32> to vector<1x32xf32>
    %c1_200 = arith.constant 1 : index
    %c8_201 = arith.constant 8 : index
    %c0_202 = arith.constant 0 : index
    %491 = vector.load %arg4[%c1_200, %c8_201, %c0_202] : memref<3x16x64xf32, #tpu.memory_space<vmem>>, vector<1x1x32xf32>
    %492 = vector.shape_cast %491 : vector<1x1x32xf32> to vector<1x32xf32>
    %c1_203 = arith.constant 1 : index
    %c9_204 = arith.constant 9 : index
    %c0_205 = arith.constant 0 : index
    %493 = vector.load %arg4[%c1_203, %c9_204, %c0_205] : memref<3x16x64xf32, #tpu.memory_space<vmem>>, vector<1x1x32xf32>
    %494 = vector.shape_cast %493 : vector<1x1x32xf32> to vector<1x32xf32>
    %c1_206 = arith.constant 1 : index
    %c10_207 = arith.constant 10 : index
    %c0_208 = arith.constant 0 : index
    %495 = vector.load %arg4[%c1_206, %c10_207, %c0_208] : memref<3x16x64xf32, #tpu.memory_space<vmem>>, vector<1x1x32xf32>
    %496 = vector.shape_cast %495 : vector<1x1x32xf32> to vector<1x32xf32>
    %c1_209 = arith.constant 1 : index
    %c11_210 = arith.constant 11 : index
    %c0_211 = arith.constant 0 : index
    %497 = vector.load %arg4[%c1_209, %c11_210, %c0_211] : memref<3x16x64xf32, #tpu.memory_space<vmem>>, vector<1x1x32xf32>
    %498 = vector.shape_cast %497 : vector<1x1x32xf32> to vector<1x32xf32>
    %c1_212 = arith.constant 1 : index
    %c12_213 = arith.constant 12 : index
    %c0_214 = arith.constant 0 : index
    %499 = vector.load %arg4[%c1_212, %c12_213, %c0_214] : memref<3x16x64xf32, #tpu.memory_space<vmem>>, vector<1x1x32xf32>
    %500 = vector.shape_cast %499 : vector<1x1x32xf32> to vector<1x32xf32>
    %c1_215 = arith.constant 1 : index
    %c13_216 = arith.constant 13 : index
    %c0_217 = arith.constant 0 : index
    %501 = vector.load %arg4[%c1_215, %c13_216, %c0_217] : memref<3x16x64xf32, #tpu.memory_space<vmem>>, vector<1x1x64xf32>
    %502 = vector.shape_cast %501 : vector<1x1x64xf32> to vector<1x64xf32>
    %cst_218 = arith.constant dense<0.000000e+00> : vector<8xf32>
    %503 = vector.multi_reduction <add>, %488, %cst_218 [1] : vector<8x32xf32> to vector<8xf32>
    %504 = vector.shape_cast %503 : vector<8xf32> to vector<8x1xf32>
    %cst_219 = arith.constant 3.200000e+01 : f32
    %505 = vector.broadcast %cst_219 : f32 to vector<8x1xf32>
    %506 = arith.divf %504, %505 : vector<8x1xf32>
    %507 = vector.broadcast %506 : vector<8x1xf32> to vector<8x32xf32>
    %508 = arith.subf %488, %507 : vector<8x32xf32>
    %509 = arith.mulf %508, %508 : vector<8x32xf32>
    %cst_220 = arith.constant dense<0.000000e+00> : vector<8xf32>
    %510 = vector.multi_reduction <add>, %509, %cst_220 [1] : vector<8x32xf32> to vector<8xf32>
    %511 = vector.shape_cast %510 : vector<8xf32> to vector<8x1xf32>
    %cst_221 = arith.constant 3.200000e+01 : f32
    %512 = vector.broadcast %cst_221 : f32 to vector<8x1xf32>
    %513 = arith.divf %511, %512 : vector<8x1xf32>
    %cst_222 = arith.constant 9.99999974E-6 : f32
    %514 = vector.broadcast %cst_222 : f32 to vector<8x1xf32>
    %515 = arith.addf %513, %514 : vector<8x1xf32>
    %516 = math.rsqrt %515 : vector<8x1xf32>
    %517 = vector.broadcast %516 : vector<8x1xf32> to vector<8x32xf32>
    %518 = arith.mulf %508, %517 : vector<8x32xf32>
    %519 = vector.broadcast %492 : vector<1x32xf32> to vector<8x32xf32>
    %520 = arith.mulf %518, %519 : vector<8x32xf32>
    %521 = vector.broadcast %494 : vector<1x32xf32> to vector<8x32xf32>
    %522 = arith.addf %520, %521 : vector<8x32xf32>
    %c1_223 = arith.constant 1 : index
    %c1_224 = arith.constant 1 : index
    %c0_225 = arith.constant 0 : index
    %c0_226 = arith.constant 0 : index
    %523 = vector.load %arg5[%c1_223, %c1_224, %c0_225, %c0_226] : memref<3x2x32x192xf32, #tpu.memory_space<vmem>>, vector<1x1x32x192xf32>
    %524 = vector.shape_cast %523 : vector<1x1x32x192xf32> to vector<32x192xf32>
    %cst_227 = arith.constant dense<0.000000e+00> : vector<8x192xf32>
    %525 = tpu.matmul %522, %524, %cst_227 {dimension_numbers = #tpu.dot_dimension_numbers<[1], [0], [0], [1], [0, 0, 1, 1], [], []>} : vector<8x32xf32>, vector<32x192xf32>, vector<8x192xf32> -> vector<8x192xf32>
    %526 = vector.extract_strided_slice %525 {offsets = [0, 0], sizes = [8, 16], strides = [1, 1]} : vector<8x192xf32> to vector<8x16xf32>
    %527 = vector.extract_strided_slice %525 {offsets = [0, 16], sizes = [8, 16], strides = [1, 1]} : vector<8x192xf32> to vector<8x16xf32>
    %528 = vector.extract_strided_slice %525 {offsets = [0, 32], sizes = [8, 16], strides = [1, 1]} : vector<8x192xf32> to vector<8x16xf32>
    %529 = vector.extract_strided_slice %525 {offsets = [0, 48], sizes = [8, 16], strides = [1, 1]} : vector<8x192xf32> to vector<8x16xf32>
    %530 = vector.shape_cast %526 : vector<8x16xf32> to vector<1x8x16xf32>
    %531 = vector.shape_cast %527 : vector<8x16xf32> to vector<1x8x16xf32>
    %532 = vector.shape_cast %528 : vector<8x16xf32> to vector<1x8x16xf32>
    %533 = vector.shape_cast %529 : vector<8x16xf32> to vector<1x8x16xf32>
    %534 = tpu.concatenate %530, %531, %532, %533 in 0 : vector<1x8x16xf32>, vector<1x8x16xf32>, vector<1x8x16xf32>, vector<1x8x16xf32> -> vector<4x8x16xf32>
    %535 = vector.extract_strided_slice %525 {offsets = [0, 64], sizes = [8, 16], strides = [1, 1]} : vector<8x192xf32> to vector<8x16xf32>
    %536 = vector.extract_strided_slice %525 {offsets = [0, 80], sizes = [8, 16], strides = [1, 1]} : vector<8x192xf32> to vector<8x16xf32>
    %537 = vector.extract_strided_slice %525 {offsets = [0, 96], sizes = [8, 16], strides = [1, 1]} : vector<8x192xf32> to vector<8x16xf32>
    %538 = vector.extract_strided_slice %525 {offsets = [0, 112], sizes = [8, 16], strides = [1, 1]} : vector<8x192xf32> to vector<8x16xf32>
    %539 = vector.shape_cast %535 : vector<8x16xf32> to vector<1x8x16xf32>
    %540 = vector.shape_cast %536 : vector<8x16xf32> to vector<1x8x16xf32>
    %541 = vector.shape_cast %537 : vector<8x16xf32> to vector<1x8x16xf32>
    %542 = vector.shape_cast %538 : vector<8x16xf32> to vector<1x8x16xf32>
    %543 = tpu.concatenate %539, %540, %541, %542 in 0 : vector<1x8x16xf32>, vector<1x8x16xf32>, vector<1x8x16xf32>, vector<1x8x16xf32> -> vector<4x8x16xf32>
    %544 = vector.extract_strided_slice %525 {offsets = [0, 128], sizes = [8, 16], strides = [1, 1]} : vector<8x192xf32> to vector<8x16xf32>
    %545 = vector.extract_strided_slice %525 {offsets = [0, 144], sizes = [8, 16], strides = [1, 1]} : vector<8x192xf32> to vector<8x16xf32>
    %546 = vector.extract_strided_slice %525 {offsets = [0, 160], sizes = [8, 16], strides = [1, 1]} : vector<8x192xf32> to vector<8x16xf32>
    %547 = vector.extract_strided_slice %525 {offsets = [0, 176], sizes = [8, 16], strides = [1, 1]} : vector<8x192xf32> to vector<8x16xf32>
    %548 = vector.shape_cast %544 : vector<8x16xf32> to vector<1x8x16xf32>
    %549 = vector.shape_cast %545 : vector<8x16xf32> to vector<1x8x16xf32>
    %550 = vector.shape_cast %546 : vector<8x16xf32> to vector<1x8x16xf32>
    %551 = vector.shape_cast %547 : vector<8x16xf32> to vector<1x8x16xf32>
    %552 = tpu.concatenate %548, %549, %550, %551 in 0 : vector<1x8x16xf32>, vector<1x8x16xf32>, vector<1x8x16xf32>, vector<1x8x16xf32> -> vector<4x8x16xf32>
    "tpu.trace_start"() <{level = 10 : i32, message = "hnd,hmd->hnm"}> : () -> ()
    %cst_228 = arith.constant dense<0.000000e+00> : vector<4x8x8xf32>
    %553 = tpu.matmul %534, %543, %cst_228 {dimension_numbers = #tpu.dot_dimension_numbers<[2], [2], [1], [1], [0, 0, 0, 1, 1, 1], [0], [0]>} : vector<4x8x16xf32>, vector<4x8x16xf32>, vector<4x8x8xf32> -> vector<4x8x8xf32>
    "tpu.trace_stop"() : () -> ()
    %cst_229 = arith.constant 2.500000e-01 : f32
    %554 = vector.broadcast %cst_229 : f32 to vector<4x8x8xf32>
    %555 = arith.mulf %553, %554 : vector<4x8x8xf32>
    %556 = vector.shape_cast %326 : vector<8x8xf32> to vector<1x8x8xf32>
    %557 = vector.broadcast %556 : vector<1x8x8xf32> to vector<4x8x8xf32>
    %558 = arith.mulf %555, %557 : vector<4x8x8xf32>
    %559 = arith.mulf %558, %558 : vector<4x8x8xf32>
    %cst_230 = arith.constant dense<0.000000e+00> : vector<4x8xf32>
    %560 = vector.multi_reduction <add>, %559, %cst_230 [2] : vector<4x8x8xf32> to vector<4x8xf32>
    %561 = vector.shape_cast %560 : vector<4x8xf32> to vector<4x8x1xf32>
    %562 = arith.mulf %555, %555 : vector<4x8x8xf32>
    %cst_231 = arith.constant dense<0.000000e+00> : vector<4x8xf32>
    %563 = vector.multi_reduction <add>, %562, %cst_231 [2] : vector<4x8x8xf32> to vector<4x8xf32>
    %564 = vector.shape_cast %563 : vector<4x8xf32> to vector<4x8x1xf32>
    %565 = math.sqrt %564 : vector<4x8x1xf32>
    %cst_232 = arith.constant 1.000000e-24 : f32
    %566 = vector.broadcast %cst_232 : f32 to vector<4x8x1xf32>
    %567 = arith.maximumf %561, %566 : vector<4x8x1xf32>
    %568 = math.rsqrt %567 : vector<4x8x1xf32>
    %569 = arith.mulf %565, %568 : vector<4x8x1xf32>
    %570 = vector.broadcast %569 : vector<4x8x1xf32> to vector<4x8x8xf32>
    %571 = arith.mulf %558, %570 : vector<4x8x8xf32>
    %572 = arith.addf %555, %571 : vector<4x8x8xf32>
    %cst_233 = arith.constant dense<0xFF800000> : vector<4x8xf32>
    %573 = vector.multi_reduction <maximumf>, %572, %cst_233 [2] : vector<4x8x8xf32> to vector<4x8xf32>
    %574 = vector.shape_cast %573 : vector<4x8xf32> to vector<4x8x1xf32>
    %575 = vector.broadcast %574 : vector<4x8x1xf32> to vector<4x8x8xf32>
    %576 = arith.subf %572, %575 : vector<4x8x8xf32>
    %577 = math.exp %576 : vector<4x8x8xf32>
    %cst_234 = arith.constant dense<0.000000e+00> : vector<4x8xf32>
    %578 = vector.multi_reduction <add>, %577, %cst_234 [2] : vector<4x8x8xf32> to vector<4x8xf32>
    %579 = vector.shape_cast %578 : vector<4x8xf32> to vector<4x8x1xf32>
    %580 = tpu.reciprocal %579 {approx = true} : vector<4x8x1xf32> -> vector<4x8x1xf32>
    %581 = vector.broadcast %580 : vector<4x8x1xf32> to vector<4x8x8xf32>
    %582 = arith.mulf %577, %581 : vector<4x8x8xf32>
    "tpu.trace_start"() <{level = 10 : i32, message = "hnm,hmd->hnd"}> : () -> ()
    %cst_235 = arith.constant dense<0.000000e+00> : vector<4x8x16xf32>
    %583 = tpu.matmul %582, %552, %cst_235 {dimension_numbers = #tpu.dot_dimension_numbers<[2], [1], [1], [2], [0, 0, 0, 1, 1, 2], [0], [0]>} : vector<4x8x8xf32>, vector<4x8x16xf32>, vector<4x8x16xf32> -> vector<4x8x16xf32>
    "tpu.trace_stop"() : () -> ()
    %584 = vector.extract_strided_slice %583 {offsets = [0, 0, 0], sizes = [1, 8, 16], strides = [1, 1, 1]} : vector<4x8x16xf32> to vector<1x8x16xf32>
    %585 = vector.shape_cast %584 : vector<1x8x16xf32> to vector<8x16xf32>
    %586 = vector.extract_strided_slice %583 {offsets = [1, 0, 0], sizes = [1, 8, 16], strides = [1, 1, 1]} : vector<4x8x16xf32> to vector<1x8x16xf32>
    %587 = vector.shape_cast %586 : vector<1x8x16xf32> to vector<8x16xf32>
    %588 = vector.extract_strided_slice %583 {offsets = [2, 0, 0], sizes = [1, 8, 16], strides = [1, 1, 1]} : vector<4x8x16xf32> to vector<1x8x16xf32>
    %589 = vector.shape_cast %588 : vector<1x8x16xf32> to vector<8x16xf32>
    %590 = vector.extract_strided_slice %583 {offsets = [3, 0, 0], sizes = [1, 8, 16], strides = [1, 1, 1]} : vector<4x8x16xf32> to vector<1x8x16xf32>
    %591 = vector.shape_cast %590 : vector<1x8x16xf32> to vector<8x16xf32>
    %592 = tpu.concatenate %585, %587, %589, %591 in 1 : vector<8x16xf32>, vector<8x16xf32>, vector<8x16xf32>, vector<8x16xf32> -> vector<8x64xf32>
    %593 = arith.mulf %592, %4 : vector<8x64xf32>
    %c1_236 = arith.constant 1 : index
    %c1_237 = arith.constant 1 : index
    %c0_238 = arith.constant 0 : index
    %c0_239 = arith.constant 0 : index
    %594 = vector.load %arg6[%c1_236, %c1_237, %c0_238, %c0_239] : memref<3x2x64x32xf32, #tpu.memory_space<vmem>>, vector<1x1x64x32xf32>
    %595 = vector.shape_cast %594 : vector<1x1x64x32xf32> to vector<64x32xf32>
    %cst_240 = arith.constant dense<0.000000e+00> : vector<8x32xf32>
    %596 = tpu.matmul %593, %595, %cst_240 {dimension_numbers = #tpu.dot_dimension_numbers<[1], [0], [0], [1], [0, 0, 1, 1], [], []>} : vector<8x64xf32>, vector<64x32xf32>, vector<8x32xf32> -> vector<8x32xf32>
    %597 = arith.addf %488, %596 : vector<8x32xf32>
    %598 = vector.broadcast %490 : vector<1x32xf32> to vector<8x32xf32>
    %599 = arith.addf %597, %598 : vector<8x32xf32>
    %cst_241 = arith.constant dense<0.000000e+00> : vector<8xf32>
    %600 = vector.multi_reduction <add>, %599, %cst_241 [1] : vector<8x32xf32> to vector<8xf32>
    %601 = vector.shape_cast %600 : vector<8xf32> to vector<8x1xf32>
    %cst_242 = arith.constant 3.200000e+01 : f32
    %602 = vector.broadcast %cst_242 : f32 to vector<8x1xf32>
    %603 = arith.divf %601, %602 : vector<8x1xf32>
    %604 = vector.broadcast %603 : vector<8x1xf32> to vector<8x32xf32>
    %605 = arith.subf %599, %604 : vector<8x32xf32>
    %606 = arith.mulf %605, %605 : vector<8x32xf32>
    %cst_243 = arith.constant dense<0.000000e+00> : vector<8xf32>
    %607 = vector.multi_reduction <add>, %606, %cst_243 [1] : vector<8x32xf32> to vector<8xf32>
    %608 = vector.shape_cast %607 : vector<8xf32> to vector<8x1xf32>
    %cst_244 = arith.constant 3.200000e+01 : f32
    %609 = vector.broadcast %cst_244 : f32 to vector<8x1xf32>
    %610 = arith.divf %608, %609 : vector<8x1xf32>
    %cst_245 = arith.constant 9.99999974E-6 : f32
    %611 = vector.broadcast %cst_245 : f32 to vector<8x1xf32>
    %612 = arith.addf %610, %611 : vector<8x1xf32>
    %613 = math.rsqrt %612 : vector<8x1xf32>
    %614 = vector.broadcast %613 : vector<8x1xf32> to vector<8x32xf32>
    %615 = arith.mulf %605, %614 : vector<8x32xf32>
    %616 = vector.broadcast %496 : vector<1x32xf32> to vector<8x32xf32>
    %617 = arith.mulf %615, %616 : vector<8x32xf32>
    %618 = vector.broadcast %498 : vector<1x32xf32> to vector<8x32xf32>
    %619 = arith.addf %617, %618 : vector<8x32xf32>
    %c1_246 = arith.constant 1 : index
    %c1_247 = arith.constant 1 : index
    %c0_248 = arith.constant 0 : index
    %c0_249 = arith.constant 0 : index
    %620 = vector.load %arg7[%c1_246, %c1_247, %c0_248, %c0_249] : memref<3x2x32x64xf32, #tpu.memory_space<vmem>>, vector<1x1x32x64xf32>
    %621 = vector.shape_cast %620 : vector<1x1x32x64xf32> to vector<32x64xf32>
    %cst_250 = arith.constant dense<0.000000e+00> : vector<8x64xf32>
    %622 = tpu.matmul %619, %621, %cst_250 {dimension_numbers = #tpu.dot_dimension_numbers<[1], [0], [0], [1], [0, 0, 1, 1], [], []>} : vector<8x32xf32>, vector<32x64xf32>, vector<8x64xf32> -> vector<8x64xf32>
    %623 = vector.broadcast %502 : vector<1x64xf32> to vector<8x64xf32>
    %624 = arith.addf %622, %623 : vector<8x64xf32>
    %625 = arith.mulf %624, %624 : vector<8x64xf32>
    %626 = arith.mulf %624, %625 : vector<8x64xf32>
    %cst_251 = arith.constant 4.471500e-02 : f32
    %627 = vector.broadcast %cst_251 : f32 to vector<8x64xf32>
    %628 = arith.mulf %627, %626 : vector<8x64xf32>
    %629 = arith.addf %624, %628 : vector<8x64xf32>
    %cst_252 = arith.constant 0.797884583 : f32
    %630 = vector.broadcast %cst_252 : f32 to vector<8x64xf32>
    %631 = arith.mulf %630, %629 : vector<8x64xf32>
    %632 = math.tanh %631 : vector<8x64xf32>
    %cst_253 = arith.constant 1.000000e+00 : f32
    %633 = vector.broadcast %cst_253 : f32 to vector<8x64xf32>
    %634 = arith.addf %633, %632 : vector<8x64xf32>
    %cst_254 = arith.constant 5.000000e-01 : f32
    %635 = vector.broadcast %cst_254 : f32 to vector<8x64xf32>
    %636 = arith.mulf %635, %634 : vector<8x64xf32>
    %637 = arith.mulf %624, %636 : vector<8x64xf32>
    %c1_255 = arith.constant 1 : index
    %c1_256 = arith.constant 1 : index
    %c0_257 = arith.constant 0 : index
    %c0_258 = arith.constant 0 : index
    %638 = vector.load %arg8[%c1_255, %c1_256, %c0_257, %c0_258] : memref<3x2x64x32xf32, #tpu.memory_space<vmem>>, vector<1x1x64x32xf32>
    %639 = vector.shape_cast %638 : vector<1x1x64x32xf32> to vector<64x32xf32>
    %cst_259 = arith.constant dense<0.000000e+00> : vector<8x32xf32>
    %640 = tpu.matmul %637, %639, %cst_259 {dimension_numbers = #tpu.dot_dimension_numbers<[1], [0], [0], [1], [0, 0, 1, 1], [], []>} : vector<8x64xf32>, vector<64x32xf32>, vector<8x32xf32> -> vector<8x32xf32>
    %641 = arith.addf %599, %640 : vector<8x32xf32>
    %642 = vector.broadcast %500 : vector<1x32xf32> to vector<8x32xf32>
    %643 = arith.addf %641, %642 : vector<8x32xf32>
    %644 = tpu.concatenate %324, %643 in 1 : vector<8x64xf32>, vector<8x32xf32> -> vector<8x96xf32>
    %c2_260 = arith.constant 2 : index
    %c0_261 = arith.constant 0 : index
    %c0_262 = arith.constant 0 : index
    %645 = vector.load %arg2[%c2_260, %c0_261, %c0_262] : memref<3x8x8xf32, #tpu.memory_space<vmem>>, vector<1x8x8xf32>
    %646 = vector.shape_cast %645 : vector<1x8x8xf32> to vector<8x8xf32>
    %c2_263 = arith.constant 2 : index
    %c14_264 = arith.constant 14 : index
    %c0_265 = arith.constant 0 : index
    %647 = vector.load %arg4[%c2_263, %c14_264, %c0_265] : memref<3x16x64xf32, #tpu.memory_space<vmem>>, vector<1x1x32xf32>
    %648 = vector.shape_cast %647 : vector<1x1x32xf32> to vector<1x32xf32>
    %c2_266 = arith.constant 2 : index
    %c0_267 = arith.constant 0 : index
    %c0_268 = arith.constant 0 : index
    %649 = vector.load %arg3[%c2_266, %c0_267, %c0_268] : memref<3x96x32xf32, #tpu.memory_space<vmem>>, vector<1x96x32xf32>
    %650 = vector.shape_cast %649 : vector<1x96x32xf32> to vector<96x32xf32>
    %cst_269 = arith.constant dense<0.000000e+00> : vector<8x32xf32>
    %651 = tpu.matmul %644, %650, %cst_269 {dimension_numbers = #tpu.dot_dimension_numbers<[1], [0], [0], [1], [0, 0, 1, 1], [], []>} : vector<8x96xf32>, vector<96x32xf32>, vector<8x32xf32> -> vector<8x32xf32>
    %652 = vector.broadcast %648 : vector<1x32xf32> to vector<8x32xf32>
    %653 = arith.addf %651, %652 : vector<8x32xf32>
    %c2_270 = arith.constant 2 : index
    %c0_271 = arith.constant 0 : index
    %c0_272 = arith.constant 0 : index
    %654 = vector.load %arg4[%c2_270, %c0_271, %c0_272] : memref<3x16x64xf32, #tpu.memory_space<vmem>>, vector<1x1x32xf32>
    %655 = vector.shape_cast %654 : vector<1x1x32xf32> to vector<1x32xf32>
    %c2_273 = arith.constant 2 : index
    %c1_274 = arith.constant 1 : index
    %c0_275 = arith.constant 0 : index
    %656 = vector.load %arg4[%c2_273, %c1_274, %c0_275] : memref<3x16x64xf32, #tpu.memory_space<vmem>>, vector<1x1x32xf32>
    %657 = vector.shape_cast %656 : vector<1x1x32xf32> to vector<1x32xf32>
    %c2_276 = arith.constant 2 : index
    %c2_277 = arith.constant 2 : index
    %c0_278 = arith.constant 0 : index
    %658 = vector.load %arg4[%c2_276, %c2_277, %c0_278] : memref<3x16x64xf32, #tpu.memory_space<vmem>>, vector<1x1x32xf32>
    %659 = vector.shape_cast %658 : vector<1x1x32xf32> to vector<1x32xf32>
    %c2_279 = arith.constant 2 : index
    %c3_280 = arith.constant 3 : index
    %c0_281 = arith.constant 0 : index
    %660 = vector.load %arg4[%c2_279, %c3_280, %c0_281] : memref<3x16x64xf32, #tpu.memory_space<vmem>>, vector<1x1x32xf32>
    %661 = vector.shape_cast %660 : vector<1x1x32xf32> to vector<1x32xf32>
    %c2_282 = arith.constant 2 : index
    %c4_283 = arith.constant 4 : index
    %c0_284 = arith.constant 0 : index
    %662 = vector.load %arg4[%c2_282, %c4_283, %c0_284] : memref<3x16x64xf32, #tpu.memory_space<vmem>>, vector<1x1x32xf32>
    %663 = vector.shape_cast %662 : vector<1x1x32xf32> to vector<1x32xf32>
    %c2_285 = arith.constant 2 : index
    %c5_286 = arith.constant 5 : index
    %c0_287 = arith.constant 0 : index
    %664 = vector.load %arg4[%c2_285, %c5_286, %c0_287] : memref<3x16x64xf32, #tpu.memory_space<vmem>>, vector<1x1x32xf32>
    %665 = vector.shape_cast %664 : vector<1x1x32xf32> to vector<1x32xf32>
    %c2_288 = arith.constant 2 : index
    %c6_289 = arith.constant 6 : index
    %c0_290 = arith.constant 0 : index
    %666 = vector.load %arg4[%c2_288, %c6_289, %c0_290] : memref<3x16x64xf32, #tpu.memory_space<vmem>>, vector<1x1x64xf32>
    %667 = vector.shape_cast %666 : vector<1x1x64xf32> to vector<1x64xf32>
    %cst_291 = arith.constant dense<0.000000e+00> : vector<8xf32>
    %668 = vector.multi_reduction <add>, %653, %cst_291 [1] : vector<8x32xf32> to vector<8xf32>
    %669 = vector.shape_cast %668 : vector<8xf32> to vector<8x1xf32>
    %cst_292 = arith.constant 3.200000e+01 : f32
    %670 = vector.broadcast %cst_292 : f32 to vector<8x1xf32>
    %671 = arith.divf %669, %670 : vector<8x1xf32>
    %672 = vector.broadcast %671 : vector<8x1xf32> to vector<8x32xf32>
    %673 = arith.subf %653, %672 : vector<8x32xf32>
    %674 = arith.mulf %673, %673 : vector<8x32xf32>
    %cst_293 = arith.constant dense<0.000000e+00> : vector<8xf32>
    %675 = vector.multi_reduction <add>, %674, %cst_293 [1] : vector<8x32xf32> to vector<8xf32>
    %676 = vector.shape_cast %675 : vector<8xf32> to vector<8x1xf32>
    %cst_294 = arith.constant 3.200000e+01 : f32
    %677 = vector.broadcast %cst_294 : f32 to vector<8x1xf32>
    %678 = arith.divf %676, %677 : vector<8x1xf32>
    %cst_295 = arith.constant 9.99999974E-6 : f32
    %679 = vector.broadcast %cst_295 : f32 to vector<8x1xf32>
    %680 = arith.addf %678, %679 : vector<8x1xf32>
    %681 = math.rsqrt %680 : vector<8x1xf32>
    %682 = vector.broadcast %681 : vector<8x1xf32> to vector<8x32xf32>
    %683 = arith.mulf %673, %682 : vector<8x32xf32>
    %684 = vector.broadcast %657 : vector<1x32xf32> to vector<8x32xf32>
    %685 = arith.mulf %683, %684 : vector<8x32xf32>
    %686 = vector.broadcast %659 : vector<1x32xf32> to vector<8x32xf32>
    %687 = arith.addf %685, %686 : vector<8x32xf32>
    %c2_296 = arith.constant 2 : index
    %c0_297 = arith.constant 0 : index
    %c0_298 = arith.constant 0 : index
    %c0_299 = arith.constant 0 : index
    %688 = vector.load %arg5[%c2_296, %c0_297, %c0_298, %c0_299] : memref<3x2x32x192xf32, #tpu.memory_space<vmem>>, vector<1x1x32x192xf32>
    %689 = vector.shape_cast %688 : vector<1x1x32x192xf32> to vector<32x192xf32>
    %cst_300 = arith.constant dense<0.000000e+00> : vector<8x192xf32>
    %690 = tpu.matmul %687, %689, %cst_300 {dimension_numbers = #tpu.dot_dimension_numbers<[1], [0], [0], [1], [0, 0, 1, 1], [], []>} : vector<8x32xf32>, vector<32x192xf32>, vector<8x192xf32> -> vector<8x192xf32>
    %691 = vector.extract_strided_slice %690 {offsets = [0, 0], sizes = [8, 16], strides = [1, 1]} : vector<8x192xf32> to vector<8x16xf32>
    %692 = vector.extract_strided_slice %690 {offsets = [0, 16], sizes = [8, 16], strides = [1, 1]} : vector<8x192xf32> to vector<8x16xf32>
    %693 = vector.extract_strided_slice %690 {offsets = [0, 32], sizes = [8, 16], strides = [1, 1]} : vector<8x192xf32> to vector<8x16xf32>
    %694 = vector.extract_strided_slice %690 {offsets = [0, 48], sizes = [8, 16], strides = [1, 1]} : vector<8x192xf32> to vector<8x16xf32>
    %695 = vector.shape_cast %691 : vector<8x16xf32> to vector<1x8x16xf32>
    %696 = vector.shape_cast %692 : vector<8x16xf32> to vector<1x8x16xf32>
    %697 = vector.shape_cast %693 : vector<8x16xf32> to vector<1x8x16xf32>
    %698 = vector.shape_cast %694 : vector<8x16xf32> to vector<1x8x16xf32>
    %699 = tpu.concatenate %695, %696, %697, %698 in 0 : vector<1x8x16xf32>, vector<1x8x16xf32>, vector<1x8x16xf32>, vector<1x8x16xf32> -> vector<4x8x16xf32>
    %700 = vector.extract_strided_slice %690 {offsets = [0, 64], sizes = [8, 16], strides = [1, 1]} : vector<8x192xf32> to vector<8x16xf32>
    %701 = vector.extract_strided_slice %690 {offsets = [0, 80], sizes = [8, 16], strides = [1, 1]} : vector<8x192xf32> to vector<8x16xf32>
    %702 = vector.extract_strided_slice %690 {offsets = [0, 96], sizes = [8, 16], strides = [1, 1]} : vector<8x192xf32> to vector<8x16xf32>
    %703 = vector.extract_strided_slice %690 {offsets = [0, 112], sizes = [8, 16], strides = [1, 1]} : vector<8x192xf32> to vector<8x16xf32>
    %704 = vector.shape_cast %700 : vector<8x16xf32> to vector<1x8x16xf32>
    %705 = vector.shape_cast %701 : vector<8x16xf32> to vector<1x8x16xf32>
    %706 = vector.shape_cast %702 : vector<8x16xf32> to vector<1x8x16xf32>
    %707 = vector.shape_cast %703 : vector<8x16xf32> to vector<1x8x16xf32>
    %708 = tpu.concatenate %704, %705, %706, %707 in 0 : vector<1x8x16xf32>, vector<1x8x16xf32>, vector<1x8x16xf32>, vector<1x8x16xf32> -> vector<4x8x16xf32>
    %709 = vector.extract_strided_slice %690 {offsets = [0, 128], sizes = [8, 16], strides = [1, 1]} : vector<8x192xf32> to vector<8x16xf32>
    %710 = vector.extract_strided_slice %690 {offsets = [0, 144], sizes = [8, 16], strides = [1, 1]} : vector<8x192xf32> to vector<8x16xf32>
    %711 = vector.extract_strided_slice %690 {offsets = [0, 160], sizes = [8, 16], strides = [1, 1]} : vector<8x192xf32> to vector<8x16xf32>
    %712 = vector.extract_strided_slice %690 {offsets = [0, 176], sizes = [8, 16], strides = [1, 1]} : vector<8x192xf32> to vector<8x16xf32>
    %713 = vector.shape_cast %709 : vector<8x16xf32> to vector<1x8x16xf32>
    %714 = vector.shape_cast %710 : vector<8x16xf32> to vector<1x8x16xf32>
    %715 = vector.shape_cast %711 : vector<8x16xf32> to vector<1x8x16xf32>
    %716 = vector.shape_cast %712 : vector<8x16xf32> to vector<1x8x16xf32>
    %717 = tpu.concatenate %713, %714, %715, %716 in 0 : vector<1x8x16xf32>, vector<1x8x16xf32>, vector<1x8x16xf32>, vector<1x8x16xf32> -> vector<4x8x16xf32>
    "tpu.trace_start"() <{level = 10 : i32, message = "hnd,hmd->hnm"}> : () -> ()
    %cst_301 = arith.constant dense<0.000000e+00> : vector<4x8x8xf32>
    %718 = tpu.matmul %699, %708, %cst_301 {dimension_numbers = #tpu.dot_dimension_numbers<[2], [2], [1], [1], [0, 0, 0, 1, 1, 1], [0], [0]>} : vector<4x8x16xf32>, vector<4x8x16xf32>, vector<4x8x8xf32> -> vector<4x8x8xf32>
    "tpu.trace_stop"() : () -> ()
    %cst_302 = arith.constant 2.500000e-01 : f32
    %719 = vector.broadcast %cst_302 : f32 to vector<4x8x8xf32>
    %720 = arith.mulf %718, %719 : vector<4x8x8xf32>
    %721 = vector.shape_cast %646 : vector<8x8xf32> to vector<1x8x8xf32>
    %722 = vector.broadcast %721 : vector<1x8x8xf32> to vector<4x8x8xf32>
    %723 = arith.mulf %720, %722 : vector<4x8x8xf32>
    %724 = arith.mulf %723, %723 : vector<4x8x8xf32>
    %cst_303 = arith.constant dense<0.000000e+00> : vector<4x8xf32>
    %725 = vector.multi_reduction <add>, %724, %cst_303 [2] : vector<4x8x8xf32> to vector<4x8xf32>
    %726 = vector.shape_cast %725 : vector<4x8xf32> to vector<4x8x1xf32>
    %727 = arith.mulf %720, %720 : vector<4x8x8xf32>
    %cst_304 = arith.constant dense<0.000000e+00> : vector<4x8xf32>
    %728 = vector.multi_reduction <add>, %727, %cst_304 [2] : vector<4x8x8xf32> to vector<4x8xf32>
    %729 = vector.shape_cast %728 : vector<4x8xf32> to vector<4x8x1xf32>
    %730 = math.sqrt %729 : vector<4x8x1xf32>
    %cst_305 = arith.constant 1.000000e-24 : f32
    %731 = vector.broadcast %cst_305 : f32 to vector<4x8x1xf32>
    %732 = arith.maximumf %726, %731 : vector<4x8x1xf32>
    %733 = math.rsqrt %732 : vector<4x8x1xf32>
    %734 = arith.mulf %730, %733 : vector<4x8x1xf32>
    %735 = vector.broadcast %734 : vector<4x8x1xf32> to vector<4x8x8xf32>
    %736 = arith.mulf %723, %735 : vector<4x8x8xf32>
    %737 = arith.addf %720, %736 : vector<4x8x8xf32>
    %cst_306 = arith.constant dense<0xFF800000> : vector<4x8xf32>
    %738 = vector.multi_reduction <maximumf>, %737, %cst_306 [2] : vector<4x8x8xf32> to vector<4x8xf32>
    %739 = vector.shape_cast %738 : vector<4x8xf32> to vector<4x8x1xf32>
    %740 = vector.broadcast %739 : vector<4x8x1xf32> to vector<4x8x8xf32>
    %741 = arith.subf %737, %740 : vector<4x8x8xf32>
    %742 = math.exp %741 : vector<4x8x8xf32>
    %cst_307 = arith.constant dense<0.000000e+00> : vector<4x8xf32>
    %743 = vector.multi_reduction <add>, %742, %cst_307 [2] : vector<4x8x8xf32> to vector<4x8xf32>
    %744 = vector.shape_cast %743 : vector<4x8xf32> to vector<4x8x1xf32>
    %745 = tpu.reciprocal %744 {approx = true} : vector<4x8x1xf32> -> vector<4x8x1xf32>
    %746 = vector.broadcast %745 : vector<4x8x1xf32> to vector<4x8x8xf32>
    %747 = arith.mulf %742, %746 : vector<4x8x8xf32>
    "tpu.trace_start"() <{level = 10 : i32, message = "hnm,hmd->hnd"}> : () -> ()
    %cst_308 = arith.constant dense<0.000000e+00> : vector<4x8x16xf32>
    %748 = tpu.matmul %747, %717, %cst_308 {dimension_numbers = #tpu.dot_dimension_numbers<[2], [1], [1], [2], [0, 0, 0, 1, 1, 2], [0], [0]>} : vector<4x8x8xf32>, vector<4x8x16xf32>, vector<4x8x16xf32> -> vector<4x8x16xf32>
    "tpu.trace_stop"() : () -> ()
    %749 = vector.extract_strided_slice %748 {offsets = [0, 0, 0], sizes = [1, 8, 16], strides = [1, 1, 1]} : vector<4x8x16xf32> to vector<1x8x16xf32>
    %750 = vector.shape_cast %749 : vector<1x8x16xf32> to vector<8x16xf32>
    %751 = vector.extract_strided_slice %748 {offsets = [1, 0, 0], sizes = [1, 8, 16], strides = [1, 1, 1]} : vector<4x8x16xf32> to vector<1x8x16xf32>
    %752 = vector.shape_cast %751 : vector<1x8x16xf32> to vector<8x16xf32>
    %753 = vector.extract_strided_slice %748 {offsets = [2, 0, 0], sizes = [1, 8, 16], strides = [1, 1, 1]} : vector<4x8x16xf32> to vector<1x8x16xf32>
    %754 = vector.shape_cast %753 : vector<1x8x16xf32> to vector<8x16xf32>
    %755 = vector.extract_strided_slice %748 {offsets = [3, 0, 0], sizes = [1, 8, 16], strides = [1, 1, 1]} : vector<4x8x16xf32> to vector<1x8x16xf32>
    %756 = vector.shape_cast %755 : vector<1x8x16xf32> to vector<8x16xf32>
    %757 = tpu.concatenate %750, %752, %754, %756 in 1 : vector<8x16xf32>, vector<8x16xf32>, vector<8x16xf32>, vector<8x16xf32> -> vector<8x64xf32>
    %758 = arith.mulf %757, %4 : vector<8x64xf32>
    %c2_309 = arith.constant 2 : index
    %c0_310 = arith.constant 0 : index
    %c0_311 = arith.constant 0 : index
    %c0_312 = arith.constant 0 : index
    %759 = vector.load %arg6[%c2_309, %c0_310, %c0_311, %c0_312] : memref<3x2x64x32xf32, #tpu.memory_space<vmem>>, vector<1x1x64x32xf32>
    %760 = vector.shape_cast %759 : vector<1x1x64x32xf32> to vector<64x32xf32>
    %cst_313 = arith.constant dense<0.000000e+00> : vector<8x32xf32>
    %761 = tpu.matmul %758, %760, %cst_313 {dimension_numbers = #tpu.dot_dimension_numbers<[1], [0], [0], [1], [0, 0, 1, 1], [], []>} : vector<8x64xf32>, vector<64x32xf32>, vector<8x32xf32> -> vector<8x32xf32>
    %762 = arith.addf %653, %761 : vector<8x32xf32>
    %763 = vector.broadcast %655 : vector<1x32xf32> to vector<8x32xf32>
    %764 = arith.addf %762, %763 : vector<8x32xf32>
    %cst_314 = arith.constant dense<0.000000e+00> : vector<8xf32>
    %765 = vector.multi_reduction <add>, %764, %cst_314 [1] : vector<8x32xf32> to vector<8xf32>
    %766 = vector.shape_cast %765 : vector<8xf32> to vector<8x1xf32>
    %cst_315 = arith.constant 3.200000e+01 : f32
    %767 = vector.broadcast %cst_315 : f32 to vector<8x1xf32>
    %768 = arith.divf %766, %767 : vector<8x1xf32>
    %769 = vector.broadcast %768 : vector<8x1xf32> to vector<8x32xf32>
    %770 = arith.subf %764, %769 : vector<8x32xf32>
    %771 = arith.mulf %770, %770 : vector<8x32xf32>
    %cst_316 = arith.constant dense<0.000000e+00> : vector<8xf32>
    %772 = vector.multi_reduction <add>, %771, %cst_316 [1] : vector<8x32xf32> to vector<8xf32>
    %773 = vector.shape_cast %772 : vector<8xf32> to vector<8x1xf32>
    %cst_317 = arith.constant 3.200000e+01 : f32
    %774 = vector.broadcast %cst_317 : f32 to vector<8x1xf32>
    %775 = arith.divf %773, %774 : vector<8x1xf32>
    %cst_318 = arith.constant 9.99999974E-6 : f32
    %776 = vector.broadcast %cst_318 : f32 to vector<8x1xf32>
    %777 = arith.addf %775, %776 : vector<8x1xf32>
    %778 = math.rsqrt %777 : vector<8x1xf32>
    %779 = vector.broadcast %778 : vector<8x1xf32> to vector<8x32xf32>
    %780 = arith.mulf %770, %779 : vector<8x32xf32>
    %781 = vector.broadcast %661 : vector<1x32xf32> to vector<8x32xf32>
    %782 = arith.mulf %780, %781 : vector<8x32xf32>
    %783 = vector.broadcast %663 : vector<1x32xf32> to vector<8x32xf32>
    %784 = arith.addf %782, %783 : vector<8x32xf32>
    %c2_319 = arith.constant 2 : index
    %c0_320 = arith.constant 0 : index
    %c0_321 = arith.constant 0 : index
    %c0_322 = arith.constant 0 : index
    %785 = vector.load %arg7[%c2_319, %c0_320, %c0_321, %c0_322] : memref<3x2x32x64xf32, #tpu.memory_space<vmem>>, vector<1x1x32x64xf32>
    %786 = vector.shape_cast %785 : vector<1x1x32x64xf32> to vector<32x64xf32>
    %cst_323 = arith.constant dense<0.000000e+00> : vector<8x64xf32>
    %787 = tpu.matmul %784, %786, %cst_323 {dimension_numbers = #tpu.dot_dimension_numbers<[1], [0], [0], [1], [0, 0, 1, 1], [], []>} : vector<8x32xf32>, vector<32x64xf32>, vector<8x64xf32> -> vector<8x64xf32>
    %788 = vector.broadcast %667 : vector<1x64xf32> to vector<8x64xf32>
    %789 = arith.addf %787, %788 : vector<8x64xf32>
    %790 = arith.mulf %789, %789 : vector<8x64xf32>
    %791 = arith.mulf %789, %790 : vector<8x64xf32>
    %cst_324 = arith.constant 4.471500e-02 : f32
    %792 = vector.broadcast %cst_324 : f32 to vector<8x64xf32>
    %793 = arith.mulf %792, %791 : vector<8x64xf32>
    %794 = arith.addf %789, %793 : vector<8x64xf32>
    %cst_325 = arith.constant 0.797884583 : f32
    %795 = vector.broadcast %cst_325 : f32 to vector<8x64xf32>
    %796 = arith.mulf %795, %794 : vector<8x64xf32>
    %797 = math.tanh %796 : vector<8x64xf32>
    %cst_326 = arith.constant 1.000000e+00 : f32
    %798 = vector.broadcast %cst_326 : f32 to vector<8x64xf32>
    %799 = arith.addf %798, %797 : vector<8x64xf32>
    %cst_327 = arith.constant 5.000000e-01 : f32
    %800 = vector.broadcast %cst_327 : f32 to vector<8x64xf32>
    %801 = arith.mulf %800, %799 : vector<8x64xf32>
    %802 = arith.mulf %789, %801 : vector<8x64xf32>
    %c2_328 = arith.constant 2 : index
    %c0_329 = arith.constant 0 : index
    %c0_330 = arith.constant 0 : index
    %c0_331 = arith.constant 0 : index
    %803 = vector.load %arg8[%c2_328, %c0_329, %c0_330, %c0_331] : memref<3x2x64x32xf32, #tpu.memory_space<vmem>>, vector<1x1x64x32xf32>
    %804 = vector.shape_cast %803 : vector<1x1x64x32xf32> to vector<64x32xf32>
    %cst_332 = arith.constant dense<0.000000e+00> : vector<8x32xf32>
    %805 = tpu.matmul %802, %804, %cst_332 {dimension_numbers = #tpu.dot_dimension_numbers<[1], [0], [0], [1], [0, 0, 1, 1], [], []>} : vector<8x64xf32>, vector<64x32xf32>, vector<8x32xf32> -> vector<8x32xf32>
    %806 = arith.addf %764, %805 : vector<8x32xf32>
    %807 = vector.broadcast %665 : vector<1x32xf32> to vector<8x32xf32>
    %808 = arith.addf %806, %807 : vector<8x32xf32>
    %c2_333 = arith.constant 2 : index
    %c7_334 = arith.constant 7 : index
    %c0_335 = arith.constant 0 : index
    %809 = vector.load %arg4[%c2_333, %c7_334, %c0_335] : memref<3x16x64xf32, #tpu.memory_space<vmem>>, vector<1x1x32xf32>
    %810 = vector.shape_cast %809 : vector<1x1x32xf32> to vector<1x32xf32>
    %c2_336 = arith.constant 2 : index
    %c8_337 = arith.constant 8 : index
    %c0_338 = arith.constant 0 : index
    %811 = vector.load %arg4[%c2_336, %c8_337, %c0_338] : memref<3x16x64xf32, #tpu.memory_space<vmem>>, vector<1x1x32xf32>
    %812 = vector.shape_cast %811 : vector<1x1x32xf32> to vector<1x32xf32>
    %c2_339 = arith.constant 2 : index
    %c9_340 = arith.constant 9 : index
    %c0_341 = arith.constant 0 : index
    %813 = vector.load %arg4[%c2_339, %c9_340, %c0_341] : memref<3x16x64xf32, #tpu.memory_space<vmem>>, vector<1x1x32xf32>
    %814 = vector.shape_cast %813 : vector<1x1x32xf32> to vector<1x32xf32>
    %c2_342 = arith.constant 2 : index
    %c10_343 = arith.constant 10 : index
    %c0_344 = arith.constant 0 : index
    %815 = vector.load %arg4[%c2_342, %c10_343, %c0_344] : memref<3x16x64xf32, #tpu.memory_space<vmem>>, vector<1x1x32xf32>
    %816 = vector.shape_cast %815 : vector<1x1x32xf32> to vector<1x32xf32>
    %c2_345 = arith.constant 2 : index
    %c11_346 = arith.constant 11 : index
    %c0_347 = arith.constant 0 : index
    %817 = vector.load %arg4[%c2_345, %c11_346, %c0_347] : memref<3x16x64xf32, #tpu.memory_space<vmem>>, vector<1x1x32xf32>
    %818 = vector.shape_cast %817 : vector<1x1x32xf32> to vector<1x32xf32>
    %c2_348 = arith.constant 2 : index
    %c12_349 = arith.constant 12 : index
    %c0_350 = arith.constant 0 : index
    %819 = vector.load %arg4[%c2_348, %c12_349, %c0_350] : memref<3x16x64xf32, #tpu.memory_space<vmem>>, vector<1x1x32xf32>
    %820 = vector.shape_cast %819 : vector<1x1x32xf32> to vector<1x32xf32>
    %c2_351 = arith.constant 2 : index
    %c13_352 = arith.constant 13 : index
    %c0_353 = arith.constant 0 : index
    %821 = vector.load %arg4[%c2_351, %c13_352, %c0_353] : memref<3x16x64xf32, #tpu.memory_space<vmem>>, vector<1x1x64xf32>
    %822 = vector.shape_cast %821 : vector<1x1x64xf32> to vector<1x64xf32>
    %cst_354 = arith.constant dense<0.000000e+00> : vector<8xf32>
    %823 = vector.multi_reduction <add>, %808, %cst_354 [1] : vector<8x32xf32> to vector<8xf32>
    %824 = vector.shape_cast %823 : vector<8xf32> to vector<8x1xf32>
    %cst_355 = arith.constant 3.200000e+01 : f32
    %825 = vector.broadcast %cst_355 : f32 to vector<8x1xf32>
    %826 = arith.divf %824, %825 : vector<8x1xf32>
    %827 = vector.broadcast %826 : vector<8x1xf32> to vector<8x32xf32>
    %828 = arith.subf %808, %827 : vector<8x32xf32>
    %829 = arith.mulf %828, %828 : vector<8x32xf32>
    %cst_356 = arith.constant dense<0.000000e+00> : vector<8xf32>
    %830 = vector.multi_reduction <add>, %829, %cst_356 [1] : vector<8x32xf32> to vector<8xf32>
    %831 = vector.shape_cast %830 : vector<8xf32> to vector<8x1xf32>
    %cst_357 = arith.constant 3.200000e+01 : f32
    %832 = vector.broadcast %cst_357 : f32 to vector<8x1xf32>
    %833 = arith.divf %831, %832 : vector<8x1xf32>
    %cst_358 = arith.constant 9.99999974E-6 : f32
    %834 = vector.broadcast %cst_358 : f32 to vector<8x1xf32>
    %835 = arith.addf %833, %834 : vector<8x1xf32>
    %836 = math.rsqrt %835 : vector<8x1xf32>
    %837 = vector.broadcast %836 : vector<8x1xf32> to vector<8x32xf32>
    %838 = arith.mulf %828, %837 : vector<8x32xf32>
    %839 = vector.broadcast %812 : vector<1x32xf32> to vector<8x32xf32>
    %840 = arith.mulf %838, %839 : vector<8x32xf32>
    %841 = vector.broadcast %814 : vector<1x32xf32> to vector<8x32xf32>
    %842 = arith.addf %840, %841 : vector<8x32xf32>
    %c2_359 = arith.constant 2 : index
    %c1_360 = arith.constant 1 : index
    %c0_361 = arith.constant 0 : index
    %c0_362 = arith.constant 0 : index
    %843 = vector.load %arg5[%c2_359, %c1_360, %c0_361, %c0_362] : memref<3x2x32x192xf32, #tpu.memory_space<vmem>>, vector<1x1x32x192xf32>
    %844 = vector.shape_cast %843 : vector<1x1x32x192xf32> to vector<32x192xf32>
    %cst_363 = arith.constant dense<0.000000e+00> : vector<8x192xf32>
    %845 = tpu.matmul %842, %844, %cst_363 {dimension_numbers = #tpu.dot_dimension_numbers<[1], [0], [0], [1], [0, 0, 1, 1], [], []>} : vector<8x32xf32>, vector<32x192xf32>, vector<8x192xf32> -> vector<8x192xf32>
    %846 = vector.extract_strided_slice %845 {offsets = [0, 0], sizes = [8, 16], strides = [1, 1]} : vector<8x192xf32> to vector<8x16xf32>
    %847 = vector.extract_strided_slice %845 {offsets = [0, 16], sizes = [8, 16], strides = [1, 1]} : vector<8x192xf32> to vector<8x16xf32>
    %848 = vector.extract_strided_slice %845 {offsets = [0, 32], sizes = [8, 16], strides = [1, 1]} : vector<8x192xf32> to vector<8x16xf32>
    %849 = vector.extract_strided_slice %845 {offsets = [0, 48], sizes = [8, 16], strides = [1, 1]} : vector<8x192xf32> to vector<8x16xf32>
    %850 = vector.shape_cast %846 : vector<8x16xf32> to vector<1x8x16xf32>
    %851 = vector.shape_cast %847 : vector<8x16xf32> to vector<1x8x16xf32>
    %852 = vector.shape_cast %848 : vector<8x16xf32> to vector<1x8x16xf32>
    %853 = vector.shape_cast %849 : vector<8x16xf32> to vector<1x8x16xf32>
    %854 = tpu.concatenate %850, %851, %852, %853 in 0 : vector<1x8x16xf32>, vector<1x8x16xf32>, vector<1x8x16xf32>, vector<1x8x16xf32> -> vector<4x8x16xf32>
    %855 = vector.extract_strided_slice %845 {offsets = [0, 64], sizes = [8, 16], strides = [1, 1]} : vector<8x192xf32> to vector<8x16xf32>
    %856 = vector.extract_strided_slice %845 {offsets = [0, 80], sizes = [8, 16], strides = [1, 1]} : vector<8x192xf32> to vector<8x16xf32>
    %857 = vector.extract_strided_slice %845 {offsets = [0, 96], sizes = [8, 16], strides = [1, 1]} : vector<8x192xf32> to vector<8x16xf32>
    %858 = vector.extract_strided_slice %845 {offsets = [0, 112], sizes = [8, 16], strides = [1, 1]} : vector<8x192xf32> to vector<8x16xf32>
    %859 = vector.shape_cast %855 : vector<8x16xf32> to vector<1x8x16xf32>
    %860 = vector.shape_cast %856 : vector<8x16xf32> to vector<1x8x16xf32>
    %861 = vector.shape_cast %857 : vector<8x16xf32> to vector<1x8x16xf32>
    %862 = vector.shape_cast %858 : vector<8x16xf32> to vector<1x8x16xf32>
    %863 = tpu.concatenate %859, %860, %861, %862 in 0 : vector<1x8x16xf32>, vector<1x8x16xf32>, vector<1x8x16xf32>, vector<1x8x16xf32> -> vector<4x8x16xf32>
    %864 = vector.extract_strided_slice %845 {offsets = [0, 128], sizes = [8, 16], strides = [1, 1]} : vector<8x192xf32> to vector<8x16xf32>
    %865 = vector.extract_strided_slice %845 {offsets = [0, 144], sizes = [8, 16], strides = [1, 1]} : vector<8x192xf32> to vector<8x16xf32>
    %866 = vector.extract_strided_slice %845 {offsets = [0, 160], sizes = [8, 16], strides = [1, 1]} : vector<8x192xf32> to vector<8x16xf32>
    %867 = vector.extract_strided_slice %845 {offsets = [0, 176], sizes = [8, 16], strides = [1, 1]} : vector<8x192xf32> to vector<8x16xf32>
    %868 = vector.shape_cast %864 : vector<8x16xf32> to vector<1x8x16xf32>
    %869 = vector.shape_cast %865 : vector<8x16xf32> to vector<1x8x16xf32>
    %870 = vector.shape_cast %866 : vector<8x16xf32> to vector<1x8x16xf32>
    %871 = vector.shape_cast %867 : vector<8x16xf32> to vector<1x8x16xf32>
    %872 = tpu.concatenate %868, %869, %870, %871 in 0 : vector<1x8x16xf32>, vector<1x8x16xf32>, vector<1x8x16xf32>, vector<1x8x16xf32> -> vector<4x8x16xf32>
    "tpu.trace_start"() <{level = 10 : i32, message = "hnd,hmd->hnm"}> : () -> ()
    %cst_364 = arith.constant dense<0.000000e+00> : vector<4x8x8xf32>
    %873 = tpu.matmul %854, %863, %cst_364 {dimension_numbers = #tpu.dot_dimension_numbers<[2], [2], [1], [1], [0, 0, 0, 1, 1, 1], [0], [0]>} : vector<4x8x16xf32>, vector<4x8x16xf32>, vector<4x8x8xf32> -> vector<4x8x8xf32>
    "tpu.trace_stop"() : () -> ()
    %cst_365 = arith.constant 2.500000e-01 : f32
    %874 = vector.broadcast %cst_365 : f32 to vector<4x8x8xf32>
    %875 = arith.mulf %873, %874 : vector<4x8x8xf32>
    %876 = vector.shape_cast %646 : vector<8x8xf32> to vector<1x8x8xf32>
    %877 = vector.broadcast %876 : vector<1x8x8xf32> to vector<4x8x8xf32>
    %878 = arith.mulf %875, %877 : vector<4x8x8xf32>
    %879 = arith.mulf %878, %878 : vector<4x8x8xf32>
    %cst_366 = arith.constant dense<0.000000e+00> : vector<4x8xf32>
    %880 = vector.multi_reduction <add>, %879, %cst_366 [2] : vector<4x8x8xf32> to vector<4x8xf32>
    %881 = vector.shape_cast %880 : vector<4x8xf32> to vector<4x8x1xf32>
    %882 = arith.mulf %875, %875 : vector<4x8x8xf32>
    %cst_367 = arith.constant dense<0.000000e+00> : vector<4x8xf32>
    %883 = vector.multi_reduction <add>, %882, %cst_367 [2] : vector<4x8x8xf32> to vector<4x8xf32>
    %884 = vector.shape_cast %883 : vector<4x8xf32> to vector<4x8x1xf32>
    %885 = math.sqrt %884 : vector<4x8x1xf32>
    %cst_368 = arith.constant 1.000000e-24 : f32
    %886 = vector.broadcast %cst_368 : f32 to vector<4x8x1xf32>
    %887 = arith.maximumf %881, %886 : vector<4x8x1xf32>
    %888 = math.rsqrt %887 : vector<4x8x1xf32>
    %889 = arith.mulf %885, %888 : vector<4x8x1xf32>
    %890 = vector.broadcast %889 : vector<4x8x1xf32> to vector<4x8x8xf32>
    %891 = arith.mulf %878, %890 : vector<4x8x8xf32>
    %892 = arith.addf %875, %891 : vector<4x8x8xf32>
    %cst_369 = arith.constant dense<0xFF800000> : vector<4x8xf32>
    %893 = vector.multi_reduction <maximumf>, %892, %cst_369 [2] : vector<4x8x8xf32> to vector<4x8xf32>
    %894 = vector.shape_cast %893 : vector<4x8xf32> to vector<4x8x1xf32>
    %895 = vector.broadcast %894 : vector<4x8x1xf32> to vector<4x8x8xf32>
    %896 = arith.subf %892, %895 : vector<4x8x8xf32>
    %897 = math.exp %896 : vector<4x8x8xf32>
    %cst_370 = arith.constant dense<0.000000e+00> : vector<4x8xf32>
    %898 = vector.multi_reduction <add>, %897, %cst_370 [2] : vector<4x8x8xf32> to vector<4x8xf32>
    %899 = vector.shape_cast %898 : vector<4x8xf32> to vector<4x8x1xf32>
    %900 = tpu.reciprocal %899 {approx = true} : vector<4x8x1xf32> -> vector<4x8x1xf32>
    %901 = vector.broadcast %900 : vector<4x8x1xf32> to vector<4x8x8xf32>
    %902 = arith.mulf %897, %901 : vector<4x8x8xf32>
    "tpu.trace_start"() <{level = 10 : i32, message = "hnm,hmd->hnd"}> : () -> ()
    %cst_371 = arith.constant dense<0.000000e+00> : vector<4x8x16xf32>
    %903 = tpu.matmul %902, %872, %cst_371 {dimension_numbers = #tpu.dot_dimension_numbers<[2], [1], [1], [2], [0, 0, 0, 1, 1, 2], [0], [0]>} : vector<4x8x8xf32>, vector<4x8x16xf32>, vector<4x8x16xf32> -> vector<4x8x16xf32>
    "tpu.trace_stop"() : () -> ()
    %904 = vector.extract_strided_slice %903 {offsets = [0, 0, 0], sizes = [1, 8, 16], strides = [1, 1, 1]} : vector<4x8x16xf32> to vector<1x8x16xf32>
    %905 = vector.shape_cast %904 : vector<1x8x16xf32> to vector<8x16xf32>
    %906 = vector.extract_strided_slice %903 {offsets = [1, 0, 0], sizes = [1, 8, 16], strides = [1, 1, 1]} : vector<4x8x16xf32> to vector<1x8x16xf32>
    %907 = vector.shape_cast %906 : vector<1x8x16xf32> to vector<8x16xf32>
    %908 = vector.extract_strided_slice %903 {offsets = [2, 0, 0], sizes = [1, 8, 16], strides = [1, 1, 1]} : vector<4x8x16xf32> to vector<1x8x16xf32>
    %909 = vector.shape_cast %908 : vector<1x8x16xf32> to vector<8x16xf32>
    %910 = vector.extract_strided_slice %903 {offsets = [3, 0, 0], sizes = [1, 8, 16], strides = [1, 1, 1]} : vector<4x8x16xf32> to vector<1x8x16xf32>
    %911 = vector.shape_cast %910 : vector<1x8x16xf32> to vector<8x16xf32>
    %912 = tpu.concatenate %905, %907, %909, %911 in 1 : vector<8x16xf32>, vector<8x16xf32>, vector<8x16xf32>, vector<8x16xf32> -> vector<8x64xf32>
    %913 = arith.mulf %912, %4 : vector<8x64xf32>
    %c2_372 = arith.constant 2 : index
    %c1_373 = arith.constant 1 : index
    %c0_374 = arith.constant 0 : index
    %c0_375 = arith.constant 0 : index
    %914 = vector.load %arg6[%c2_372, %c1_373, %c0_374, %c0_375] : memref<3x2x64x32xf32, #tpu.memory_space<vmem>>, vector<1x1x64x32xf32>
    %915 = vector.shape_cast %914 : vector<1x1x64x32xf32> to vector<64x32xf32>
    %cst_376 = arith.constant dense<0.000000e+00> : vector<8x32xf32>
    %916 = tpu.matmul %913, %915, %cst_376 {dimension_numbers = #tpu.dot_dimension_numbers<[1], [0], [0], [1], [0, 0, 1, 1], [], []>} : vector<8x64xf32>, vector<64x32xf32>, vector<8x32xf32> -> vector<8x32xf32>
    %917 = arith.addf %808, %916 : vector<8x32xf32>
    %918 = vector.broadcast %810 : vector<1x32xf32> to vector<8x32xf32>
    %919 = arith.addf %917, %918 : vector<8x32xf32>
    %cst_377 = arith.constant dense<0.000000e+00> : vector<8xf32>
    %920 = vector.multi_reduction <add>, %919, %cst_377 [1] : vector<8x32xf32> to vector<8xf32>
    %921 = vector.shape_cast %920 : vector<8xf32> to vector<8x1xf32>
    %cst_378 = arith.constant 3.200000e+01 : f32
    %922 = vector.broadcast %cst_378 : f32 to vector<8x1xf32>
    %923 = arith.divf %921, %922 : vector<8x1xf32>
    %924 = vector.broadcast %923 : vector<8x1xf32> to vector<8x32xf32>
    %925 = arith.subf %919, %924 : vector<8x32xf32>
    %926 = arith.mulf %925, %925 : vector<8x32xf32>
    %cst_379 = arith.constant dense<0.000000e+00> : vector<8xf32>
    %927 = vector.multi_reduction <add>, %926, %cst_379 [1] : vector<8x32xf32> to vector<8xf32>
    %928 = vector.shape_cast %927 : vector<8xf32> to vector<8x1xf32>
    %cst_380 = arith.constant 3.200000e+01 : f32
    %929 = vector.broadcast %cst_380 : f32 to vector<8x1xf32>
    %930 = arith.divf %928, %929 : vector<8x1xf32>
    %cst_381 = arith.constant 9.99999974E-6 : f32
    %931 = vector.broadcast %cst_381 : f32 to vector<8x1xf32>
    %932 = arith.addf %930, %931 : vector<8x1xf32>
    %933 = math.rsqrt %932 : vector<8x1xf32>
    %934 = vector.broadcast %933 : vector<8x1xf32> to vector<8x32xf32>
    %935 = arith.mulf %925, %934 : vector<8x32xf32>
    %936 = vector.broadcast %816 : vector<1x32xf32> to vector<8x32xf32>
    %937 = arith.mulf %935, %936 : vector<8x32xf32>
    %938 = vector.broadcast %818 : vector<1x32xf32> to vector<8x32xf32>
    %939 = arith.addf %937, %938 : vector<8x32xf32>
    %c2_382 = arith.constant 2 : index
    %c1_383 = arith.constant 1 : index
    %c0_384 = arith.constant 0 : index
    %c0_385 = arith.constant 0 : index
    %940 = vector.load %arg7[%c2_382, %c1_383, %c0_384, %c0_385] : memref<3x2x32x64xf32, #tpu.memory_space<vmem>>, vector<1x1x32x64xf32>
    %941 = vector.shape_cast %940 : vector<1x1x32x64xf32> to vector<32x64xf32>
    %cst_386 = arith.constant dense<0.000000e+00> : vector<8x64xf32>
    %942 = tpu.matmul %939, %941, %cst_386 {dimension_numbers = #tpu.dot_dimension_numbers<[1], [0], [0], [1], [0, 0, 1, 1], [], []>} : vector<8x32xf32>, vector<32x64xf32>, vector<8x64xf32> -> vector<8x64xf32>
    %943 = vector.broadcast %822 : vector<1x64xf32> to vector<8x64xf32>
    %944 = arith.addf %942, %943 : vector<8x64xf32>
    %945 = arith.mulf %944, %944 : vector<8x64xf32>
    %946 = arith.mulf %944, %945 : vector<8x64xf32>
    %cst_387 = arith.constant 4.471500e-02 : f32
    %947 = vector.broadcast %cst_387 : f32 to vector<8x64xf32>
    %948 = arith.mulf %947, %946 : vector<8x64xf32>
    %949 = arith.addf %944, %948 : vector<8x64xf32>
    %cst_388 = arith.constant 0.797884583 : f32
    %950 = vector.broadcast %cst_388 : f32 to vector<8x64xf32>
    %951 = arith.mulf %950, %949 : vector<8x64xf32>
    %952 = math.tanh %951 : vector<8x64xf32>
    %cst_389 = arith.constant 1.000000e+00 : f32
    %953 = vector.broadcast %cst_389 : f32 to vector<8x64xf32>
    %954 = arith.addf %953, %952 : vector<8x64xf32>
    %cst_390 = arith.constant 5.000000e-01 : f32
    %955 = vector.broadcast %cst_390 : f32 to vector<8x64xf32>
    %956 = arith.mulf %955, %954 : vector<8x64xf32>
    %957 = arith.mulf %944, %956 : vector<8x64xf32>
    %c2_391 = arith.constant 2 : index
    %c1_392 = arith.constant 1 : index
    %c0_393 = arith.constant 0 : index
    %c0_394 = arith.constant 0 : index
    %958 = vector.load %arg8[%c2_391, %c1_392, %c0_393, %c0_394] : memref<3x2x64x32xf32, #tpu.memory_space<vmem>>, vector<1x1x64x32xf32>
    %959 = vector.shape_cast %958 : vector<1x1x64x32xf32> to vector<64x32xf32>
    %cst_395 = arith.constant dense<0.000000e+00> : vector<8x32xf32>
    %960 = tpu.matmul %957, %959, %cst_395 {dimension_numbers = #tpu.dot_dimension_numbers<[1], [0], [0], [1], [0, 0, 1, 1], [], []>} : vector<8x64xf32>, vector<64x32xf32>, vector<8x32xf32> -> vector<8x32xf32>
    %961 = arith.addf %919, %960 : vector<8x32xf32>
    %962 = vector.broadcast %820 : vector<1x32xf32> to vector<8x32xf32>
    %963 = arith.addf %961, %962 : vector<8x32xf32>
    %964 = tpu.concatenate %323, %643, %963 in 1 : vector<8x32xf32>, vector<8x32xf32>, vector<8x32xf32> -> vector<8x96xf32>
    %c0_396 = arith.constant 0 : index
    %c0_397 = arith.constant 0 : index
    %965 = vector.load %arg9[%c0_396, %c0_397] : memref<8x96xf32, #tpu.memory_space<vmem>>, vector<8x96xf32>
    tpu.vector_store %arg9[%c0_396, %c0_397], %964 {strides = array<i32>} : memref<8x96xf32, #tpu.memory_space<vmem>>, vector<8x96xf32>,
    return
  }
  func.func @transform_0(%arg0: i32) -> (i32, i32) {
    %c0_i32 = arith.constant 0 : i32
    %c0_i32_0 = arith.constant 0 : i32
    return %arg0, %c0_i32 : i32, i32
  }
  func.func @transform_1(%arg0: i32) -> (i32, i32, i32) {
    %c0_i32 = arith.constant 0 : i32
    %c0_i32_0 = arith.constant 0 : i32
    %c0_i32_1 = arith.constant 0 : i32
    %c0_i32_2 = arith.constant 0 : i32
    return %c0_i32, %c0_i32_0, %c0_i32_1 : i32, i32, i32
  }
  func.func @transform_2(%arg0: i32) -> (i32, i32, i32) {
    %c0_i32 = arith.constant 0 : i32
    %c0_i32_0 = arith.constant 0 : i32
    %c0_i32_1 = arith.constant 0 : i32
    %c0_i32_2 = arith.constant 0 : i32
    return %c0_i32, %c0_i32_0, %c0_i32_1 : i32, i32, i32
  }
  func.func @transform_3(%arg0: i32) -> (i32, i32, i32) {
    %c0_i32 = arith.constant 0 : i32
    %c0_i32_0 = arith.constant 0 : i32
    %c0_i32_1 = arith.constant 0 : i32
    %c0_i32_2 = arith.constant 0 : i32
    return %c0_i32, %c0_i32_0, %c0_i32_1 : i32, i32, i32
  }
  func.func @transform_4(%arg0: i32) -> (i32, i32, i32, i32) {
    %c0_i32 = arith.constant 0 : i32
    %c0_i32_0 = arith.constant 0 : i32
    %c0_i32_1 = arith.constant 0 : i32
    %c0_i32_2 = arith.constant 0 : i32
    %c0_i32_3 = arith.constant 0 : i32
    return %c0_i32, %c0_i32_0, %c0_i32_1, %c0_i32_2 : i32, i32, i32, i32
  }
  func.func @transform_5(%arg0: i32) -> (i32, i32, i32, i32) {
    %c0_i32 = arith.constant 0 : i32
    %c0_i32_0 = arith.constant 0 : i32
    %c0_i32_1 = arith.constant 0 : i32
    %c0_i32_2 = arith.constant 0 : i32
    %c0_i32_3 = arith.constant 0 : i32
    return %c0_i32, %c0_i32_0, %c0_i32_1, %c0_i32_2 : i32, i32, i32, i32
  }
  func.func @transform_6(%arg0: i32) -> (i32, i32, i32, i32) {
    %c0_i32 = arith.constant 0 : i32
    %c0_i32_0 = arith.constant 0 : i32
    %c0_i32_1 = arith.constant 0 : i32
    %c0_i32_2 = arith.constant 0 : i32
    %c0_i32_3 = arith.constant 0 : i32
    return %c0_i32, %c0_i32_0, %c0_i32_1, %c0_i32_2 : i32, i32, i32, i32
  }
  func.func @transform_7(%arg0: i32) -> (i32, i32, i32, i32) {
    %c0_i32 = arith.constant 0 : i32
    %c0_i32_0 = arith.constant 0 : i32
    %c0_i32_1 = arith.constant 0 : i32
    %c0_i32_2 = arith.constant 0 : i32
    %c0_i32_3 = arith.constant 0 : i32
    return %c0_i32, %c0_i32_0, %c0_i32_1, %c0_i32_2 : i32, i32, i32, i32
  }
  func.func @transform_8(%arg0: i32) -> (i32, i32) {
    %c0_i32 = arith.constant 0 : i32
    %c0_i32_0 = arith.constant 0 : i32
    return %arg0, %c0_i32 : i32, i32
  }
}

</mosaic_0001>

<llo_original>
// kernel: airwayformer_forward.1
$region0: #{airwayformer_forward.1}
  #allocation0 [shape = 'u32[]', space=smem, size = 0x4, offset = 0x4, fixed_abs, tag = 'smem constant byte address 0x4 - core index']
  #allocation1 [shape = 'u32[72,128]{1,0:T(1,128)}', space=vmem, size = 0x9000, scoped, tag = 'internal scratch']
  %s0 = inlined_call_operand.vmem [shape: f32[16,32], index: 0, kind: input, shape index: {}]
  %s1 = inlined_call_operand.vmem [shape: f32[3,8,8], index: 1, kind: input, shape index: {}]
  %s2 = inlined_call_operand.vmem [shape: f32[3,96,32], index: 2, kind: input, shape index: {}]
  %s3 = inlined_call_operand.vmem [shape: f32[3,16,64], index: 3, kind: input, shape index: {}]
  %s4 = inlined_call_operand.vmem [shape: f32[3,2,32,192], index: 4, kind: input, shape index: {}]
  %s5 = inlined_call_operand.vmem [shape: f32[3,2,64,32], index: 5, kind: input, shape index: {}]
  %s6 = inlined_call_operand.vmem [shape: f32[3,2,32,64], index: 6, kind: input, shape index: {}]
  %s7 = inlined_call_operand.vmem [shape: f32[3,2,64,32], index: 7, kind: input, shape index: {}]
  %s8 = inlined_call_operand.vmem [shape: f32[16,96], index: 8, kind: output, shape index: {}]
  %s9 = sld [smem:[#allocation0]]
  $region65: #{airwayformer_forward.1} parent=0
    _
  %s11 = ssub.s32 1, %s9
  %s12 = scalar_select 0, %s11, %s9
  loop: start=0, step=1, limit=4
  $region2: #{airwayformer_forward.1} parent=0 // loop_pre_header
    _
  $region3: #{airwayformer_forward.1} parent=0 // loop_header
    %s14 = sphi 0, %s18
    %p15 = scmp.ge.s32.totalorder %s14, 4
    %s24 = sphi 0, %s26
    %s27 = sphi 0, %s24
    %s28 = sphi 0, %s27
    %s44 = sphi 0, %s28
    %s48 = sphi 0, %s48
    %s50 = sphi 0, %s48
    %s51 = sphi 0, %s50
    %s65 = sphi 0, %s51
    %s69 = sphi 0, %s69
    %s71 = sphi 0, %s69
    %s72 = sphi 0, %s71
    %s86 = sphi 0, %s72
    %s90 = sphi 0, %s90
    %s92 = sphi 0, %s90
    %s93 = sphi 0, %s92
    %s107 = sphi 0, %s93
    %s111 = sphi 0, %s111
    %s113 = sphi 0, %s111
    %s114 = sphi 0, %s113
    %s128 = sphi 0, %s114
    %s132 = sphi 0, %s132
    %s134 = sphi 0, %s132
    %s135 = sphi 0, %s134
    %s149 = sphi 0, %s135
    %s153 = sphi 0, %s153
    %s155 = sphi 0, %s153
    %s156 = sphi 0, %s155
    %s170 = sphi 0, %s156
    %s174 = sphi 0, %s174
    %s176 = sphi 0, %s174
    %s177 = sphi 0, %s176
    %s191 = sphi 0, %s177
    %s197 = sphi 0, %s199
    %s200 = sphi 0, %s197
    %s201 = sphi 0, %s200
    %s217 = sphi 0, %s201
  $region4: #{airwayformer_forward.1} parent=0 // loop_header_branch
    %17 = sbr.rel (%p15) target = $region8
  $region5: #{airwayformer_forward.1} parent=0 // loop_body
    %s19 = ssub.s32 %s14, 1
    %s20 = ssub.s32 %s14, 2
    %s21 = sadd.s32 %s14, 1
    %s22 = ssub.s32 %s14, %s21
    %p23 = scmp.eq.s32.totalorder %s22, 0
    %s25 = sadd.s32 %s24, 1
    %s26 = scalar_select %p23, %s24, %s25
    %p29 = pneg %p23
    %p30 = scmp.eq.s32.totalorder %s14, 1
    %p31 = por %p29, %p30
    %p32 = scmp.ne.s32.totalorder %s24, %s27
    %p33 = scmp.eq.s32.totalorder %s14, 0
    %p34 = por %p32, %p33
    %p35 = scmp.ne.s32.totalorder %s24, %s27
    %p36 = scmp.eq.s32.totalorder %s19, 1
    %p37 = por %p35, %p36
    %p38 = scmp.ne.s32.totalorder %s27, %s28
    %p39 = scmp.eq.s32.totalorder %s19, 0
    %p40 = por %p38, %p39
    %p41 = scmp.ne.s32.totalorder %s27, %s28
    %p42 = scmp.eq.s32.totalorder %s20, 1
    %p43 = por %p41, %p42
    %p45 = scmp.ne.s32.totalorder %s28, %s44
    %p46 = scmp.eq.s32.totalorder %s20, 0
    %p47 = por %p45, %p46
    %s49 = sadd.s32 %s48, 1
    %p52 = scmp.eq.s32.totalorder %s14, 1
    %p53 = scmp.ne.s32.totalorder %s48, %s50
    %p54 = scmp.eq.s32.totalorder %s14, 0
    %p55 = por %p53, %p54
    %p56 = scmp.ne.s32.totalorder %s48, %s50
    %p57 = scmp.eq.s32.totalorder %s19, 1
    %p58 = por %p56, %p57
    %p59 = scmp.ne.s32.totalorder %s50, %s51
    %p60 = scmp.eq.s32.totalorder %s19, 0
    %p61 = por %p59, %p60
    %p62 = scmp.ne.s32.totalorder %s50, %s51
    %p63 = scmp.eq.s32.totalorder %s20, 1
    %p64 = por %p62, %p63
    %p66 = scmp.ne.s32.totalorder %s51, %s65
    %p67 = scmp.eq.s32.totalorder %s20, 0
    %p68 = por %p66, %p67
    %s70 = sadd.s32 %s69, 1
    %p73 = scmp.eq.s32.totalorder %s14, 1
    %p74 = scmp.ne.s32.totalorder %s69, %s71
    %p75 = scmp.eq.s32.totalorder %s14, 0
    %p76 = por %p74, %p75
    %p77 = scmp.ne.s32.totalorder %s69, %s71
    %p78 = scmp.eq.s32.totalorder %s19, 1
    %p79 = por %p77, %p78
    %p80 = scmp.ne.s32.totalorder %s71, %s72
    %p81 = scmp.eq.s32.totalorder %s19, 0
    %p82 = por %p80, %p81
    %p83 = scmp.ne.s32.totalorder %s71, %s72
    %p84 = scmp.eq.s32.totalorder %s20, 1
    %p85 = por %p83, %p84
    %p87 = scmp.ne.s32.totalorder %s72, %s86
    %p88 = scmp.eq.s32.totalorder %s20, 0
    %p89 = por %p87, %p88
    %s91 = sadd.s32 %s90, 1
    %p94 = scmp.eq.s32.totalorder %s14, 1
    %p95 = scmp.ne.s32.totalorder %s90, %s92
    %p96 = scmp.eq.s32.totalorder %s14, 0
    %p97 = por %p95, %p96
    %p98 = scmp.ne.s32.totalorder %s90, %s92
    %p99 = scmp.eq.s32.totalorder %s19, 1
    %p100 = por %p98, %p99
    %p101 = scmp.ne.s32.totalorder %s92, %s93
    %p102 = scmp.eq.s32.totalorder %s19, 0
    %p103 = por %p101, %p102
    %p104 = scmp.ne.s32.totalorder %s92, %s93
    %p105 = scmp.eq.s32.totalorder %s20, 1
    %p106 = por %p104, %p105
    %p108 = scmp.ne.s32.totalorder %s93, %s107
    %p109 = scmp.eq.s32.totalorder %s20, 0
    %p110 = por %p108, %p109
    %s112 = sadd.s32 %s111, 1
    %p115 = scmp.eq.s32.totalorder %s14, 1
    %p116 = scmp.ne.s32.totalorder %s111, %s113
    %p117 = scmp.eq.s32.totalorder %s14, 0
    %p118 = por %p116, %p117
    %p119 = scmp.ne.s32.totalorder %s111, %s113
    %p120 = scmp.eq.s32.totalorder %s19, 1
    %p121 = por %p119, %p120
    %p122 = scmp.ne.s32.totalorder %s113, %s114
    %p123 = scmp.eq.s32.totalorder %s19, 0
    %p124 = por %p122, %p123
    %p125 = scmp.ne.s32.totalorder %s113, %s114
    %p126 = scmp.eq.s32.totalorder %s20, 1
    %p127 = por %p125, %p126
    %p129 = scmp.ne.s32.totalorder %s114, %s128
    %p130 = scmp.eq.s32.totalorder %s20, 0
    %p131 = por %p129, %p130
    %s133 = sadd.s32 %s132, 1
    %p136 = scmp.eq.s32.totalorder %s14, 1
    %p137 = scmp.ne.s32.totalorder %s132, %s134
    %p138 = scmp.eq.s32.totalorder %s14, 0
    %p139 = por %p137, %p138
    %p140 = scmp.ne.s32.totalorder %s132, %s134
    %p141 = scmp.eq.s32.totalorder %s19, 1
    %p142 = por %p140, %p141
    %p143 = scmp.ne.s32.totalorder %s134, %s135
    %p144 = scmp.eq.s32.totalorder %s19, 0
    %p145 = por %p143, %p144
    %p146 = scmp.ne.s32.totalorder %s134, %s135
    %p147 = scmp.eq.s32.totalorder %s20, 1
    %p148 = por %p146, %p147
    %p150 = scmp.ne.s32.totalorder %s135, %s149
    %p151 = scmp.eq.s32.totalorder %s20, 0
    %p152 = por %p150, %p151
    %s154 = sadd.s32 %s153, 1
    %p157 = scmp.eq.s32.totalorder %s14, 1
    %p158 = scmp.ne.s32.totalorder %s153, %s155
    %p159 = scmp.eq.s32.totalorder %s14, 0
    %p160 = por %p158, %p159
    %p161 = scmp.ne.s32.totalorder %s153, %s155
    %p162 = scmp.eq.s32.totalorder %s19, 1
    %p163 = por %p161, %p162
    %p164 = scmp.ne.s32.totalorder %s155, %s156
    %p165 = scmp.eq.s32.totalorder %s19, 0
    %p166 = por %p164, %p165
    %p167 = scmp.ne.s32.totalorder %s155, %s156
    %p168 = scmp.eq.s32.totalorder %s20, 1
    %p169 = por %p167, %p168
    %p171 = scmp.ne.s32.totalorder %s156, %s170
    %p172 = scmp.eq.s32.totalorder %s20, 0
    %p173 = por %p171, %p172
    %s175 = sadd.s32 %s174, 1
    %p178 = scmp.eq.s32.totalorder %s14, 1
    %p179 = scmp.ne.s32.totalorder %s174, %s176
    %p180 = scmp.eq.s32.totalorder %s14, 0
    %p181 = por %p179, %p180
    %p182 = scmp.ne.s32.totalorder %s174, %s176
    %p183 = scmp.eq.s32.totalorder %s19, 1
    %p184 = por %p182, %p183
    %p185 = scmp.ne.s32.totalorder %s176, %s177
    %p186 = scmp.eq.s32.totalorder %s19, 0
    %p187 = por %p185, %p186
    %p188 = scmp.ne.s32.totalorder %s176, %s177
    %p189 = scmp.eq.s32.totalorder %s20, 1
    %p190 = por %p188, %p189
    %p192 = scmp.ne.s32.totalorder %s177, %s191
    %p193 = scmp.eq.s32.totalorder %s20, 0
    %p194 = por %p192, %p193
    %s195 = ssub.s32 %s14, %s21
    %p196 = scmp.eq.s32.totalorder %s195, 0
    %s198 = sadd.s32 %s197, 1
    %s199 = scalar_select %p196, %s197, %s198
    %p202 = pneg %p196
    %p203 = scmp.eq.s32.totalorder %s14, 1
    %p204 = por %p202, %p203
    %p205 = scmp.ne.s32.totalorder %s197, %s200
    %p206 = scmp.eq.s32.totalorder %s14, 0
    %p207 = por %p205, %p206
    %p208 = scmp.ne.s32.totalorder %s197, %s200
    %p209 = scmp.eq.s32.totalorder %s19, 1
    %p210 = por %p208, %p209
    %p211 = scmp.ne.s32.totalorder %s200, %s201
    %p212 = scmp.eq.s32.totalorder %s19, 0
    %p213 = por %p211, %p212
    %p214 = scmp.ne.s32.totalorder %s200, %s201
    %p215 = scmp.eq.s32.totalorder %s20, 1
    %p216 = por %p214, %p215
    %p218 = scmp.ne.s32.totalorder %s201, %s217
    %p219 = scmp.eq.s32.totalorder %s20, 0
    %p220 = por %p218, %p219
    %p221 = scmp.le.s32.totalorder 1, %s14
    %p222 = scmp.lt.s32.totalorder %s14, 3
    %p223 = pnand %p221, %p222
    %p224 = pneg %p223
    // Predicated region
    $region9: #{airwayformer_forward.1} parent=5 // pred_check
      _
    $region10: #{airwayformer_forward.1} parent=5 // pred_check_branch
      %226 = sbr.rel (%p223) target = $region12
    $region11: #{airwayformer_forward.1} parent=5 // pred_region
      %s227 = ssub.s32 %s14, 1
      // Predicated region
      $region13: #{airwayformer_forward.1} parent=11 // pred_check
        %p228 = pneg %p61
      $region14: #{airwayformer_forward.1} parent=11 // pred_check_branch
        %230 = sbr.rel (%p228) target = $region16
      $region15: #{airwayformer_forward.1} parent=11 // pred_region
        _
      $region16: #{airwayformer_forward.1} parent=11 // pred_fallthru
        _
      // Predicated region
      $region17: #{airwayformer_forward.1} parent=11 // pred_check
        %p231 = pneg %p82
      $region18: #{airwayformer_forward.1} parent=11 // pred_check_branch
        %233 = sbr.rel (%p231) target = $region20
      $region19: #{airwayformer_forward.1} parent=11 // pred_region
        _
      $region20: #{airwayformer_forward.1} parent=11 // pred_fallthru
        _
      // Predicated region
      $region21: #{airwayformer_forward.1} parent=11 // pred_check
        %p234 = pneg %p103
      $region22: #{airwayformer_forward.1} parent=11 // pred_check_branch
        %236 = sbr.rel (%p234) target = $region24
      $region23: #{airwayformer_forward.1} parent=11 // pred_region
        _
      $region24: #{airwayformer_forward.1} parent=11 // pred_fallthru
        _
      // Predicated region
      $region25: #{airwayformer_forward.1} parent=11 // pred_check
        %p237 = pneg %p124
      $region26: #{airwayformer_forward.1} parent=11 // pred_check_branch
        %239 = sbr.rel (%p237) target = $region28
      $region27: #{airwayformer_forward.1} parent=11 // pred_region
        _
      $region28: #{airwayformer_forward.1} parent=11 // pred_fallthru
        _
      // Predicated region
      $region29: #{airwayformer_forward.1} parent=11 // pred_check
        %p240 = pneg %p145
      $region30: #{airwayformer_forward.1} parent=11 // pred_check_branch
        %242 = sbr.rel (%p240) target = $region32
      $region31: #{airwayformer_forward.1} parent=11 // pred_region
        _
      $region32: #{airwayformer_forward.1} parent=11 // pred_fallthru
        _
      // Predicated region
      $region33: #{airwayformer_forward.1} parent=11 // pred_check
        %p243 = pneg %p166
      $region34: #{airwayformer_forward.1} parent=11 // pred_check_branch
        %245 = sbr.rel (%p243) target = $region36
      $region35: #{airwayformer_forward.1} parent=11 // pred_region
        _
      $region36: #{airwayformer_forward.1} parent=11 // pred_fallthru
        _
      // Predicated region
      $region37: #{airwayformer_forward.1} parent=11 // pred_check
        %p246 = pneg %p187
      $region38: #{airwayformer_forward.1} parent=11 // pred_check_branch
        %248 = sbr.rel (%p246) target = $region40
      $region39: #{airwayformer_forward.1} parent=11 // pred_region
        _
      $region40: #{airwayformer_forward.1} parent=11 // pred_fallthru
        _
    $region12: #{airwayformer_forward.1} parent=5 // pred_fallthru
      _
    %p249 = scmp.lt.s32.totalorder %s14, 2
    // Predicated region
    $region41: #{airwayformer_forward.1} parent=5 // pred_check
      %p250 = pneg %p249
    $region42: #{airwayformer_forward.1} parent=5 // pred_check_branch
      %252 = sbr.rel (%p250) target = $region44
    $region43: #{airwayformer_forward.1} parent=5 // pred_region
      // Predicated region
      $region45: #{airwayformer_forward.1} parent=43 // pred_check
        %p253 = pneg %p34
      $region46: #{airwayformer_forward.1} parent=43 // pred_check_branch
        %255 = sbr.rel (%p253) target = $region48
      $region47: #{airwayformer_forward.1} parent=43 // pred_region
        %p256 = scmp.lt.s32.totalorder %s14, 1
        %s257 = scalar_select %p256, %s14, 1
        %s258 = smul.addr %s257, 8
        %s259 = scalar_lea.vmem %s0, %s258
      $region48: #{airwayformer_forward.1} parent=43 // pred_fallthru
        _
    $region44: #{airwayformer_forward.1} parent=5 // pred_fallthru
      _
    %p260 = scmp.le.s32.totalorder 1, %s14
    %p261 = scmp.lt.s32.totalorder %s14, 3
    %p262 = pnand %p260, %p261
    %p263 = pneg %p262
    // Predicated region
    $region49: #{airwayformer_forward.1} parent=5 // pred_check
      _
    $region50: #{airwayformer_forward.1} parent=5 // pred_check_branch
      %265 = sbr.rel (%p262) target = $region52
    $region51: #{airwayformer_forward.1} parent=5 // pred_region
      %s266 = ssub.s32 %s14, 1
      %p267 = scmp.lt.s32.totalorder %s19, 1
      %s268 = scalar_select %p267, %s19, 1
      %s269 = smul.addr %s268, 8
      %s270 = scalar_lea.vmem %s0, %s269
      %p271 = pneg %p40
      %p272 = pneg %p37
      %p273 = pneg %p61
      %p274 = pneg %p58
      %p275 = pneg %p82
      %p276 = pneg %p79
      %p277 = pneg %p103
      %p278 = pneg %p100
      %p279 = pneg %p124
      %p280 = pneg %p121
      %p281 = pneg %p145
      %p282 = pneg %p142
      %p283 = pneg %p166
      %p284 = pneg %p163
      %p285 = pneg %p187
      %p286 = pneg %p184
      %p287 = pneg %p213
      %p288 = pneg %p210
      %p289 = scmp.lt.s32.totalorder %s19, 1
      %s290 = scalar_select %p289, %s19, 1
      %s291 = smul.addr %s290, 8
      %s292 = scalar_lea.vmem %s8, %s291
      %p293 = scmp.lt.s32.totalorder %s19, 1
      %s294 = scalar_select %p293, %s19, 1
      %s295 = smul.addr %s294, 8
      %s296 = scalar_lea.vmem %s0, %s295
      %p297 = scmp.lt.s32.totalorder %s19, 1
      %s298 = scalar_select %p297, %s19, 1
      %s299 = smul.addr %s298, 8
      %s300 = scalar_lea.vmem %s8, %s299
      %v301 = vld [vmem:[%s296] sm:$0xff]
      %v302 = vld [vmem:[%s3 + $0xf] sm:$0x1]
      %v303 = vperm.slane %v302, 0
      %v304 = vld [vmem:[%s1] sm:$0xff]
      %v305 = vld [vmem:[%s3 + $0xe] sm:$0x1]
      %v306 = vld [vmem:[%s2] sm:$0xff]
      %v307 = vld [vmem:[%s2 + $0x8] sm:$0xff]
      %v308 = vld [vmem:[%s2 + $0x10] sm:$0xff]
      %v309 = vld [vmem:[%s2 + $0x18] sm:$0xff]
      %v310 = vperm.slane %v305, 0
      %vm311 = vcmask 261120
      %v313 = vsel %vm311, %v301, 0
      %315 = vmatpush.msra.mxu0 0.0
      %316 = vmatpush.msra.mxu0 0.0
      %317 = vmatpush.msra.mxu0 0.0
      %318 = vmatpush.msra.mxu0 0.0
      %319 = vmatpush.msra.mxu0 0.0
      %320 = vmatpush.msra.mxu0 0.0
      %321 = vmatpush.msra.mxu0 0.0
      %322 = vmatpush.msra.mxu0 0.0
      %323 = vmatpush.msra.mxu0 0.0
      %324 = vmatpush.msra.mxu0 0.0
      %325 = vmatpush.msra.mxu0 0.0
      %326 = vmatpush.msra.mxu0 0.0
      %327 = vmatpush.msra.mxu0 %v309
      %328 = vmatpush.msra.mxu0 %v308
      %329 = vmatpush.msra.mxu0 %v307
      %330 = vmatpush.msra.mxu0 %v306
      %331 = vmatmul.f32.gmra.mxu0 %v313
      %v332 = vpop.f32.mrf.mxu0
      %v333 = vadd.f32 %v310, %v332
      %334 = vdwg.mxu0
      %v335 = vld [vmem:[%s3] sm:$0x1]
      %v336 = vld [vmem:[%s3 + $0x1] sm:$0x1]
      %v337 = vld [vmem:[%s3 + $0x2] sm:$0x1]
      %v338 = vld [vmem:[%s3 + $0x3] sm:$0x1]
      %v339 = vld [vmem:[%s3 + $0x4] sm:$0x1]
      %v340 = vld [vmem:[%s3 + $0x5] sm:$0x1]
      %v341 = vld [vmem:[%s3 + $0x6] sm:$0x1]
      %v342 = vsel %vm311, %v333, 0.0
      %343 = vadd.xlane.f32.xlu0 %v342
      %v344 = vpop.xlane.xlu0 %343
      %v345 = vrcp.pop 32.0
      %v346 = vmul.f32 32.0, %v345
      %v347 = vsub.f32 1.0, %v346
      %v348 = vmul.f32 %v345, %v347
      %v349 = vadd.f32 %v345, %v348
      %vm350 = vweird.f32 %v345
      %v351 = vsel %vm350, %v345, %v349
      %v352 = vmul.f32 %v344, %v351
      %v353 = vsub.f32 %v333, %v352
      %v354 = vmul.f32 %v353, %v353
      %v355 = vsel %vm311, %v354, 0.0
      %356 = vadd.xlane.f32.xlu0 %v355
      %v357 = vpop.xlane.xlu0 %356
      %v358 = vmul.f32 %v357, %v351
      %v359 = vadd.f32 %v358, 1e-05
      %v360 = vrsqrt.pop %v359
      %v361 = vmul.f32 %v360, %v359
      %v362 = vmul.f32 %v361, %v360
      %v363 = vmul.f32 0.5, %v362
      %v364 = vsub.f32 1.5, %v363
      %v365 = vmul.f32 %v360, %v364
      %vm366 = vweird.f32 %v359
      %vm367 = vweird.f32 %v360
      %vm368 = vmor %vm366, %vm367
      %v369 = vsel %vm368, %v360, %v365
      %v370 = vmul.f32 %v353, %v369
      %v371 = vperm.slane %v336, 0
      %v372 = vmul.f32 %v370, %v371
      %v373 = vperm.slane %v337, 0
      %v374 = vadd.f32 %v372, %v373
      %v375 = vld [vmem:[%s4] sm:$0xff]
      %v376 = vld [vmem:[%s4 + $0x8] sm:$0xff]
      %v377 = vld [vmem:[%s4 + $0x10] sm:$0xff]
      %v378 = vld [vmem:[%s4 + $0x18] sm:$0xff]
      %v379 = vld [vmem:[%s4 + $0x20] sm:$0xff]
      %v380 = vld [vmem:[%s4 + $0x28] sm:$0xff]
      %v381 = vld [vmem:[%s4 + $0x30] sm:$0xff]
      %v382 = vld [vmem:[%s4 + $0x38] sm:$0xff]
      %v384 = vsel %vm311, %v374, 0
      %386 = vmatpush.msra.mxu0 0.0
      %387 = vmatpush.msra.mxu0 0.0
      %388 = vmatpush.msra.mxu0 0.0
      %389 = vmatpush.msra.mxu0 0.0
      %390 = vmatpush.msra.mxu0 0.0
      %391 = vmatpush.msra.mxu0 0.0
      %392 = vmatpush.msra.mxu0 0.0
      %393 = vmatpush.msra.mxu0 0.0
      %394 = vmatpush.msra.mxu0 0.0
      %395 = vmatpush.msra.mxu0 0.0
      %396 = vmatpush.msra.mxu0 0.0
      %397 = vmatpush.msra.mxu0 0.0
      %398 = vmatpush.msra.mxu0 %v381
      %399 = vmatpush.msra.mxu0 %v379
      %400 = vmatpush.msra.mxu0 %v377
      %401 = vmatpush.msra.mxu0 %v375
      %402 = vmatmul.f32.gmra.mxu0 %v384
      %v403 = vpop.f32.mrf.mxu0
      %v404 = vadd.f32 0.0, %v403
      %405 = vdwg.mxu0
      %406 = vmatpush.msra.mxu0 0.0
      %407 = vmatpush.msra.mxu0 0.0
      %408 = vmatpush.msra.mxu0 0.0
      %409 = vmatpush.msra.mxu0 0.0
      %410 = vmatpush.msra.mxu0 0.0
      %411 = vmatpush.msra.mxu0 0.0
      %412 = vmatpush.msra.mxu0 0.0
      %413 = vmatpush.msra.mxu0 0.0
      %414 = vmatpush.msra.mxu0 0.0
      %415 = vmatpush.msra.mxu0 0.0
      %416 = vmatpush.msra.mxu0 0.0
      %417 = vmatpush.msra.mxu0 0.0
      %418 = vmatpush.msra.mxu0 %v382
      %419 = vmatpush.msra.mxu0 %v380
      %420 = vmatpush.msra.mxu0 %v378
      %421 = vmatpush.msra.mxu0 %v376
      %422 = vmatmul.f32.gmra.mxu0 %v384
      %v423 = vpop.f32.mrf.mxu0
      %v424 = vadd.f32 0.0, %v423
      %425 = vdwg.mxu0
      %427 = vrot.lane.b32.xlu0 %v404, 112
      %v428 = vpop.permute.xlu0 %427
      %429 = vrot.lane.b32.xlu0 %v404, 96
      %v430 = vpop.permute.xlu0 %429
      %431 = vrot.lane.b32.xlu0 %v404, 80
      %v432 = vpop.permute.xlu0 %431
      %434 = vrot.lane.b32.xlu0 %v424, 112
      %v435 = vpop.permute.xlu0 %434
      %437 = vrot.lane.b32.xlu0 %v424, 96
      %v438 = vpop.permute.xlu0 %437
      %440 = vrot.lane.b32.xlu0 %v424, 80
      %v441 = vpop.permute.xlu0 %440
      %443 = vrot.lane.b32.xlu0 %v404, 64
      %v444 = vpop.permute.xlu0 %443
      %vm445 = vcmask 130048
      %v446 = vsel %vm445, %v404, 0
      %v448 = vsel %vm445, %v444, 0
      %450 = vmatpush.xpose.msra.mxu0 0.0
      %451 = vmatpush.xpose.msra.mxu0 0.0
      %452 = vmatpush.xpose.msra.mxu0 0.0
      %453 = vmatpush.xpose.msra.mxu0 0.0
      %454 = vmatpush.xpose.msra.mxu0 0.0
      %455 = vmatpush.xpose.msra.mxu0 0.0
      %456 = vmatpush.xpose.msra.mxu0 0.0
      %457 = vmatpush.xpose.msra.mxu0 0.0
      %458 = vmatpush.xpose.msra.mxu0 0.0
      %459 = vmatpush.xpose.msra.mxu0 0.0
      %460 = vmatpush.xpose.msra.mxu0 0.0
      %461 = vmatpush.xpose.msra.mxu0 0.0
      %462 = vmatpush.xpose.msra.mxu0 0.0
      %463 = vmatpush.xpose.msra.mxu0 0.0
      %464 = vmatpush.xpose.msra.mxu0 0.0
      %465 = vmatpush.xpose.msra.mxu0 %v448
      %466 = vmatmul.f32.gmra.mxu0 %v446
      %v467 = vpop.f32.mrf.mxu0
      %v468 = vadd.f32 0.0, %v467
      %469 = vdwg.mxu0
      %470 = vrot.lane.b32.xlu0 %v428, 64
      %v471 = vpop.permute.xlu0 %470
      %v472 = vsel %vm445, %v428, 0
      %v474 = vsel %vm445, %v471, 0
      %476 = vmatpush.xpose.msra.mxu0 0.0
      %477 = vmatpush.xpose.msra.mxu0 0.0
      %478 = vmatpush.xpose.msra.mxu0 0.0
      %479 = vmatpush.xpose.msra.mxu0 0.0
      %480 = vmatpush.xpose.msra.mxu0 0.0
      %481 = vmatpush.xpose.msra.mxu0 0.0
      %482 = vmatpush.xpose.msra.mxu0 0.0
      %483 = vmatpush.xpose.msra.mxu0 0.0
      %484 = vmatpush.xpose.msra.mxu0 0.0
      %485 = vmatpush.xpose.msra.mxu0 0.0
      %486 = vmatpush.xpose.msra.mxu0 0.0
      %487 = vmatpush.xpose.msra.mxu0 0.0
      %488 = vmatpush.xpose.msra.mxu0 0.0
      %489 = vmatpush.xpose.msra.mxu0 0.0
      %490 = vmatpush.xpose.msra.mxu0 0.0
      %491 = vmatpush.xpose.msra.mxu0 %v474
      %492 = vmatmul.f32.gmra.mxu0 %v472
      %v493 = vpop.f32.mrf.mxu0
      %v494 = vadd.f32 0.0, %v493
      %495 = vdwg.mxu0
      %496 = vrot.lane.b32.xlu0 %v430, 64
      %v497 = vpop.permute.xlu0 %496
      %v498 = vsel %vm445, %v430, 0
      %v500 = vsel %vm445, %v497, 0
      %502 = vmatpush.xpose.msra.mxu0 0.0
      %503 = vmatpush.xpose.msra.mxu0 0.0
      %504 = vmatpush.xpose.msra.mxu0 0.0
      %505 = vmatpush.xpose.msra.mxu0 0.0
      %506 = vmatpush.xpose.msra.mxu0 0.0
      %507 = vmatpush.xpose.msra.mxu0 0.0
      %508 = vmatpush.xpose.msra.mxu0 0.0
      %509 = vmatpush.xpose.msra.mxu0 0.0
      %510 = vmatpush.xpose.msra.mxu0 0.0
      %511 = vmatpush.xpose.msra.mxu0 0.0
      %512 = vmatpush.xpose.msra.mxu0 0.0
      %513 = vmatpush.xpose.msra.mxu0 0.0
      %514 = vmatpush.xpose.msra.mxu0 0.0
      %515 = vmatpush.xpose.msra.mxu0 0.0
      %516 = vmatpush.xpose.msra.mxu0 0.0
      %517 = vmatpush.xpose.msra.mxu0 %v500
      %518 = vmatmul.f32.gmra.mxu0 %v498
      %v519 = vpop.f32.mrf.mxu0
      %v520 = vadd.f32 0.0, %v519
      %521 = vdwg.mxu0
      %522 = vrot.lane.b32.xlu0 %v432, 64
      %v523 = vpop.permute.xlu0 %522
      %v524 = vsel %vm445, %v432, 0
      %v526 = vsel %vm445, %v523, 0
      %528 = vmatpush.xpose.msra.mxu0 0.0
      %529 = vmatpush.xpose.msra.mxu0 0.0
      %530 = vmatpush.xpose.msra.mxu0 0.0
      %531 = vmatpush.xpose.msra.mxu0 0.0
      %532 = vmatpush.xpose.msra.mxu0 0.0
      %533 = vmatpush.xpose.msra.mxu0 0.0
      %534 = vmatpush.xpose.msra.mxu0 0.0
      %535 = vmatpush.xpose.msra.mxu0 0.0
      %536 = vmatpush.xpose.msra.mxu0 0.0
      %537 = vmatpush.xpose.msra.mxu0 0.0
      %538 = vmatpush.xpose.msra.mxu0 0.0
      %539 = vmatpush.xpose.msra.mxu0 0.0
      %540 = vmatpush.xpose.msra.mxu0 0.0
      %541 = vmatpush.xpose.msra.mxu0 0.0
      %542 = vmatpush.xpose.msra.mxu0 0.0
      %543 = vmatpush.xpose.msra.mxu0 %v526
      %544 = vmatmul.f32.gmra.mxu0 %v524
      %v545 = vpop.f32.mrf.mxu0
      %v546 = vadd.f32 0.0, %v545
      %547 = vdwg.mxu0
      %v548 = vmul.f32 %v468, 0.25
      %v549 = vmul.f32 %v494, 0.25
      %v550 = vmul.f32 %v520, 0.25
      %v551 = vmul.f32 %v546, 0.25
      %v552 = vmul.f32 %v548, %v304
      %v553 = vmul.f32 %v549, %v304
      %v554 = vmul.f32 %v550, %v304
      %v555 = vmul.f32 %v551, %v304
      %v556 = vmul.f32 %v552, %v552
      %v557 = vmul.f32 %v553, %v553
      %v558 = vmul.f32 %v554, %v554
      %v559 = vmul.f32 %v555, %v555
      %vm560 = vcmask 64512
      %v561 = vsel %vm560, %v556, 0.0
      %562 = vadd.xlane.f32.xlu0 %v561
      %v563 = vpop.xlane.xlu0 %562
      %v564 = vsel %vm560, %v557, 0.0
      %565 = vadd.xlane.f32.xlu0 %v564
      %v566 = vpop.xlane.xlu0 %565
      %v567 = vsel %vm560, %v558, 0.0
      %568 = vadd.xlane.f32.xlu0 %v567
      %v569 = vpop.xlane.xlu0 %568
      %v570 = vsel %vm560, %v559, 0.0
      %571 = vadd.xlane.f32.xlu0 %v570
      %v572 = vpop.xlane.xlu0 %571
      %v573 = vmul.f32 %v548, %v548
      %v574 = vmul.f32 %v549, %v549
      %v575 = vmul.f32 %v550, %v550
      %v576 = vmul.f32 %v551, %v551
      %v577 = vsel %vm560, %v573, 0.0
      %578 = vadd.xlane.f32.xlu0 %v577
      %v579 = vpop.xlane.xlu0 %578
      %v580 = vsel %vm560, %v574, 0.0
      %581 = vadd.xlane.f32.xlu0 %v580
      %v582 = vpop.xlane.xlu0 %581
      %v583 = vsel %vm560, %v575, 0.0
      %584 = vadd.xlane.f32.xlu0 %v583
      %v585 = vpop.xlane.xlu0 %584
      %v586 = vsel %vm560, %v576, 0.0
      %587 = vadd.xlane.f32.xlu0 %v586
      %v588 = vpop.xlane.xlu0 %587
      %v589 = vrsqrt.pop %v579
      %v590 = vmul.f32 %v589, %v579
      %v591 = vmul.f32 %v590, %v589
      %v592 = vmul.f32 0.5, %v591
      %v593 = vsub.f32 1.5, %v592
      %v594 = vmul.f32 %v589, %v593
      %v595 = vmul.f32 %v579, %v594
      %vm596 = vcmp.eq.f32.partialorder %v579, inf
      %v597 = vsel %vm596, %v579, %v595
      %vm598 = vcmp.eq.f32.partialorder %v579, 0.0
      %v599 = vand.u32 %v579, 2147483648
      %v600 = vsel %vm598, %v599, %v597
      %v601 = vrsqrt.pop %v582
      %v602 = vmul.f32 %v601, %v582
      %v603 = vmul.f32 %v602, %v601
      %v604 = vmul.f32 0.5, %v603
      %v605 = vsub.f32 1.5, %v604
      %v606 = vmul.f32 %v601, %v605
      %v607 = vmul.f32 %v582, %v606
      %vm608 = vcmp.eq.f32.partialorder %v582, inf
      %v609 = vsel %vm608, %v582, %v607
      %vm610 = vcmp.eq.f32.partialorder %v582, 0.0
      %v611 = vand.u32 %v582, 2147483648
      %v612 = vsel %vm610, %v611, %v609
      %v613 = vrsqrt.pop %v585
      %v614 = vmul.f32 %v613, %v585
      %v615 = vmul.f32 %v614, %v613
      %v616 = vmul.f32 0.5, %v615
      %v617 = vsub.f32 1.5, %v616
      %v618 = vmul.f32 %v613, %v617
      %v619 = vmul.f32 %v585, %v618
      %vm620 = vcmp.eq.f32.partialorder %v585, inf
      %v621 = vsel %vm620, %v585, %v619
      %vm622 = vcmp.eq.f32.partialorder %v585, 0.0
      %v623 = vand.u32 %v585, 2147483648
      %v624 = vsel %vm622, %v623, %v621
      %v625 = vrsqrt.pop %v588
      %v626 = vmul.f32 %v625, %v588
      %v627 = vmul.f32 %v626, %v625
      %v628 = vmul.f32 0.5, %v627
      %v629 = vsub.f32 1.5, %v628
      %v630 = vmul.f32 %v625, %v629
      %v631 = vmul.f32 %v588, %v630
      %vm632 = vcmp.eq.f32.partialorder %v588, inf
      %v633 = vsel %vm632, %v588, %v631
      %vm634 = vcmp.eq.f32.partialorder %v588, 0.0
      %v635 = vand.u32 %v588, 2147483648
      %v636 = vsel %vm634, %v635, %v633
      %v637 = vmax.f32 %v563, 1e-24
      %v638 = vmax.f32 %v566, 1e-24
      %v639 = vmax.f32 %v569, 1e-24
      %v640 = vmax.f32 %v572, 1e-24
      %v641 = vrsqrt.pop %v637
      %v642 = vmul.f32 %v641, %v637
      %v643 = vmul.f32 %v642, %v641
      %v644 = vmul.f32 0.5, %v643
      %v645 = vsub.f32 1.5, %v644
      %v646 = vmul.f32 %v641, %v645
      %vm647 = vweird.f32 %v637
      %vm648 = vweird.f32 %v641
      %vm649 = vmor %vm647, %vm648
      %v650 = vsel %vm649, %v641, %v646
      %v651 = vrsqrt.pop %v638
      %v652 = vmul.f32 %v651, %v638
      %v653 = vmul.f32 %v652, %v651
      %v654 = vmul.f32 0.5, %v653
      %v655 = vsub.f32 1.5, %v654
      %v656 = vmul.f32 %v651, %v655
      %vm657 = vweird.f32 %v638
      %vm658 = vweird.f32 %v651
      %vm659 = vmor %vm657, %vm658
      %v660 = vsel %vm659, %v651, %v656
      %v661 = vrsqrt.pop %v639
      %v662 = vmul.f32 %v661, %v639
      %v663 = vmul.f32 %v662, %v661
      %v664 = vmul.f32 0.5, %v663
      %v665 = vsub.f32 1.5, %v664
      %v666 = vmul.f32 %v661, %v665
      %vm667 = vweird.f32 %v639
      %vm668 = vweird.f32 %v661
      %vm669 = vmor %vm667, %vm668
      %v670 = vsel %vm669, %v661, %v666
      %v671 = vrsqrt.pop %v640
      %v672 = vmul.f32 %v671, %v640
      %v673 = vmul.f32 %v672, %v671
      %v674 = vmul.f32 0.5, %v673
      %v675 = vsub.f32 1.5, %v674
      %v676 = vmul.f32 %v671, %v675
      %vm677 = vweird.f32 %v640
      %vm678 = vweird.f32 %v671
      %vm679 = vmor %vm677, %vm678
      %v680 = vsel %vm679, %v671, %v676
      %v681 = vmul.f32 %v600, %v650
      %v682 = vmul.f32 %v612, %v660
      %v683 = vmul.f32 %v624, %v670
      %v684 = vmul.f32 %v636, %v680
      %v685 = vmul.f32 %v552, %v681
      %v686 = vmul.f32 %v553, %v682
      %v687 = vmul.f32 %v554, %v683
      %v688 = vmul.f32 %v555, %v684
      %v689 = vadd.f32 %v548, %v685
      %v690 = vadd.f32 %v549, %v686
      %v691 = vadd.f32 %v550, %v687
      %v692 = vadd.f32 %v551, %v688
      %v693 = vsel %vm560, %v689, -inf
      %694 = vmax.xlane.f32.xlu0 %v693
      %v695 = vpop.xlane.xlu0 %694
      %v696 = vsel %vm560, %v690, -inf
      %697 = vmax.xlane.f32.xlu0 %v696
      %v698 = vpop.xlane.xlu0 %697
      %v699 = vsel %vm560, %v691, -inf
      %700 = vmax.xlane.f32.xlu0 %v699
      %v701 = vpop.xlane.xlu0 %700
      %v702 = vsel %vm560, %v692, -inf
      %703 = vmax.xlane.f32.xlu0 %v702
      %v704 = vpop.xlane.xlu0 %703
      %v705 = vsub.f32 %v689, %v695
      %v706 = vsub.f32 %v690, %v698
      %v707 = vsub.f32 %v691, %v701
      %v708 = vsub.f32 %v692, %v704
      %v709 = vmul.f32 %v705, 1.442695
      %v710 = vpow.pop %v709
      %v711 = vmul.f32 %v706, 1.442695
      %v712 = vpow.pop %v711
      %v713 = vmul.f32 %v707, 1.442695
      %v714 = vpow.pop %v713
      %v715 = vmul.f32 %v708, 1.442695
      %v716 = vpow.pop %v715
      %v717 = vsel %vm560, %v710, 0.0
      %718 = vadd.xlane.f32.xlu0 %v717
      %v719 = vpop.xlane.xlu0 %718
      %v720 = vsel %vm560, %v712, 0.0
      %721 = vadd.xlane.f32.xlu0 %v720
      %v722 = vpop.xlane.xlu0 %721
      %v723 = vsel %vm560, %v714, 0.0
      %724 = vadd.xlane.f32.xlu0 %v723
      %v725 = vpop.xlane.xlu0 %724
      %v726 = vsel %vm560, %v716, 0.0
      %727 = vadd.xlane.f32.xlu0 %v726
      %v728 = vpop.xlane.xlu0 %727
      %v729 = vrcp.pop %v719
      %v730 = vrcp.pop %v722
      %v731 = vrcp.pop %v725
      %v732 = vrcp.pop %v728
      %v733 = vmul.f32 %v710, %v729
      %v734 = vmul.f32 %v712, %v730
      %v735 = vmul.f32 %v714, %v731
      %v736 = vmul.f32 %v716, %v732
      %v738 = vsel %vm560, %v733, 0
      %740 = vmatpush.msra.mxu0 0.0
      %741 = vmatpush.msra.mxu0 0.0
      %742 = vmatpush.msra.mxu0 0.0
      %743 = vmatpush.msra.mxu0 0.0
      %744 = vmatpush.msra.mxu0 0.0
      %745 = vmatpush.msra.mxu0 0.0
      %746 = vmatpush.msra.mxu0 0.0
      %747 = vmatpush.msra.mxu0 0.0
      %748 = vmatpush.msra.mxu0 0.0
      %749 = vmatpush.msra.mxu0 0.0
      %750 = vmatpush.msra.mxu0 0.0
      %751 = vmatpush.msra.mxu0 0.0
      %752 = vmatpush.msra.mxu0 0.0
      %753 = vmatpush.msra.mxu0 0.0
      %754 = vmatpush.msra.mxu0 0.0
      %755 = vmatpush.msra.mxu0 %v424
      %756 = vmatmul.f32.gmra.mxu0 %v738
      %v757 = vpop.f32.mrf.mxu0
      %v758 = vadd.f32 0.0, %v757
      %759 = vdwg.mxu0
      %v761 = vsel %vm560, %v734, 0
      %763 = vmatpush.msra.mxu0 0.0
      %764 = vmatpush.msra.mxu0 0.0
      %765 = vmatpush.msra.mxu0 0.0
      %766 = vmatpush.msra.mxu0 0.0
      %767 = vmatpush.msra.mxu0 0.0
      %768 = vmatpush.msra.mxu0 0.0
      %769 = vmatpush.msra.mxu0 0.0
      %770 = vmatpush.msra.mxu0 0.0
      %771 = vmatpush.msra.mxu0 0.0
      %772 = vmatpush.msra.mxu0 0.0
      %773 = vmatpush.msra.mxu0 0.0
      %774 = vmatpush.msra.mxu0 0.0
      %775 = vmatpush.msra.mxu0 0.0
      %776 = vmatpush.msra.mxu0 0.0
      %777 = vmatpush.msra.mxu0 0.0
      %778 = vmatpush.msra.mxu0 %v435
      %779 = vmatmul.f32.gmra.mxu0 %v761
      %v780 = vpop.f32.mrf.mxu0
      %v781 = vadd.f32 0.0, %v780
      %782 = vdwg.mxu0
      %v784 = vsel %vm560, %v735, 0
      %786 = vmatpush.msra.mxu0 0.0
      %787 = vmatpush.msra.mxu0 0.0
      %788 = vmatpush.msra.mxu0 0.0
      %789 = vmatpush.msra.mxu0 0.0
      %790 = vmatpush.msra.mxu0 0.0
      %791 = vmatpush.msra.mxu0 0.0
      %792 = vmatpush.msra.mxu0 0.0
      %793 = vmatpush.msra.mxu0 0.0
      %794 = vmatpush.msra.mxu0 0.0
      %795 = vmatpush.msra.mxu0 0.0
      %796 = vmatpush.msra.mxu0 0.0
      %797 = vmatpush.msra.mxu0 0.0
      %798 = vmatpush.msra.mxu0 0.0
      %799 = vmatpush.msra.mxu0 0.0
      %800 = vmatpush.msra.mxu0 0.0
      %801 = vmatpush.msra.mxu0 %v438
      %802 = vmatmul.f32.gmra.mxu0 %v784
      %v803 = vpop.f32.mrf.mxu0
      %v804 = vadd.f32 0.0, %v803
      %805 = vdwg.mxu0
      %v807 = vsel %vm560, %v736, 0
      %809 = vmatpush.msra.mxu0 0.0
      %810 = vmatpush.msra.mxu0 0.0
      %811 = vmatpush.msra.mxu0 0.0
      %812 = vmatpush.msra.mxu0 0.0
      %813 = vmatpush.msra.mxu0 0.0
      %814 = vmatpush.msra.mxu0 0.0
      %815 = vmatpush.msra.mxu0 0.0
      %816 = vmatpush.msra.mxu0 0.0
      %817 = vmatpush.msra.mxu0 0.0
      %818 = vmatpush.msra.mxu0 0.0
      %819 = vmatpush.msra.mxu0 0.0
      %820 = vmatpush.msra.mxu0 0.0
      %821 = vmatpush.msra.mxu0 0.0
      %822 = vmatpush.msra.mxu0 0.0
      %823 = vmatpush.msra.mxu0 0.0
      %824 = vmatpush.msra.mxu0 %v441
      %825 = vmatmul.f32.gmra.mxu0 %v807
      %v826 = vpop.f32.mrf.mxu0
      %v827 = vadd.f32 0.0, %v826
      %828 = vdwg.mxu0
      %830 = vrot.lane.b32.xlu0 %v781, 16
      %v831 = vpop.permute.xlu0 %830
      %834 = vrot.lane.b32.xlu0 %v804, 32
      %v835 = vpop.permute.xlu0 %834
      %838 = vrot.lane.b32.xlu0 %v827, 48
      %v839 = vpop.permute.xlu0 %838
      %v841 = vsel %vm445, %v758, %v831
      %v842 = vsel %vm311, %v841, %v835
      %vm843 = vcmask 392192
      %v844 = vsel %vm843, %v842, %v839
      %v845 = vmul.f32 %v844, %v303
      %v846 = vld [vmem:[%s5] sm:$0xff]
      %v847 = vld [vmem:[%s5 + $0x8] sm:$0xff]
      %v848 = vld [vmem:[%s5 + $0x10] sm:$0xff]
      %v849 = vld [vmem:[%s5 + $0x18] sm:$0xff]
      %v850 = vld [vmem:[%s5 + $0x20] sm:$0xff]
      %v851 = vld [vmem:[%s5 + $0x28] sm:$0xff]
      %v852 = vld [vmem:[%s5 + $0x30] sm:$0xff]
      %v853 = vld [vmem:[%s5 + $0x38] sm:$0xff]
      %vm854 = vcmask 523264
      %v856 = vsel %vm854, %v845, 0
      %858 = vmatpush.msra.mxu0 0.0
      %859 = vmatpush.msra.mxu0 0.0
      %860 = vmatpush.msra.mxu0 0.0
      %861 = vmatpush.msra.mxu0 0.0
      %862 = vmatpush.msra.mxu0 0.0
      %863 = vmatpush.msra.mxu0 0.0
      %864 = vmatpush.msra.mxu0 0.0
      %865 = vmatpush.msra.mxu0 0.0
      %866 = vmatpush.msra.mxu0 %v853
      %867 = vmatpush.msra.mxu0 %v852
      %868 = vmatpush.msra.mxu0 %v851
      %869 = vmatpush.msra.mxu0 %v850
      %870 = vmatpush.msra.mxu0 %v849
      %871 = vmatpush.msra.mxu0 %v848
      %872 = vmatpush.msra.mxu0 %v847
      %873 = vmatpush.msra.mxu0 %v846
      %874 = vmatmul.f32.gmra.mxu0 %v856
      %v875 = vpop.f32.mrf.mxu0
      %v876 = vadd.f32 0.0, %v875
      %877 = vdwg.mxu0
      %v878 = vadd.f32 %v333, %v876
      %v879 = vperm.slane %v335, 0
      %v880 = vadd.f32 %v878, %v879
      %v881 = vsel %vm311, %v880, 0.0
      %882 = vadd.xlane.f32.xlu0 %v881
      %v883 = vpop.xlane.xlu0 %882
      %v884 = vmul.f32 %v883, %v351
      %v885 = vsub.f32 %v880, %v884
      %v886 = vmul.f32 %v885, %v885
      %v887 = vsel %vm311, %v886, 0.0
      %888 = vadd.xlane.f32.xlu0 %v887
      %v889 = vpop.xlane.xlu0 %888
      %v890 = vmul.f32 %v889, %v351
      %v891 = vadd.f32 %v890, 1e-05
      %v892 = vrsqrt.pop %v891
      %v893 = vmul.f32 %v892, %v891
      %v894 = vmul.f32 %v893, %v892
      %v895 = vmul.f32 0.5, %v894
      %v896 = vsub.f32 1.5, %v895
      %v897 = vmul.f32 %v892, %v896
      %vm898 = vweird.f32 %v891
      %vm899 = vweird.f32 %v892
      %vm900 = vmor %vm898, %vm899
      %v901 = vsel %vm900, %v892, %v897
      %v902 = vmul.f32 %v885, %v901
      %v903 = vperm.slane %v338, 0
      %v904 = vmul.f32 %v902, %v903
      %v905 = vperm.slane %v339, 0
      %v906 = vadd.f32 %v904, %v905
      %v907 = vld [vmem:[%s6] sm:$0xff]
      %v908 = vld [vmem:[%s6 + $0x8] sm:$0xff]
      %v909 = vld [vmem:[%s6 + $0x10] sm:$0xff]
      %v910 = vld [vmem:[%s6 + $0x18] sm:$0xff]
      %v911 = vperm.slane %v341, 0
      %v913 = vsel %vm311, %v906, 0
      %915 = vmatpush.msra.mxu0 0.0
      %916 = vmatpush.msra.mxu0 0.0
      %917 = vmatpush.msra.mxu0 0.0
      %918 = vmatpush.msra.mxu0 0.0
      %919 = vmatpush.msra.mxu0 0.0
      %920 = vmatpush.msra.mxu0 0.0
      %921 = vmatpush.msra.mxu0 0.0
      %922 = vmatpush.msra.mxu0 0.0
      %923 = vmatpush.msra.mxu0 0.0
      %924 = vmatpush.msra.mxu0 0.0
      %925 = vmatpush.msra.mxu0 0.0
      %926 = vmatpush.msra.mxu0 0.0
      %927 = vmatpush.msra.mxu0 %v910
      %928 = vmatpush.msra.mxu0 %v909
      %929 = vmatpush.msra.mxu0 %v908
      %930 = vmatpush.msra.mxu0 %v907
      %931 = vmatmul.f32.gmra.mxu0 %v913
      %v932 = vpop.f32.mrf.mxu0
      %v933 = vadd.f32 %v911, %v932
      %934 = vdwg.mxu0
      %v935 = vmul.f32 %v933, %v933
      %v936 = vmul.f32 %v933, %v935
      %v937 = vmul.f32 %v936, 0.044715
      %v938 = vadd.f32 %v933, %v937
      %v939 = vmul.f32 %v938, 0.7978846
      %v940 = vtanh.pop %v939
      %v941 = vadd.f32 %v940, 1.0
      %v942 = vmul.f32 %v941, 0.5
      %v943 = vmul.f32 %v933, %v942
      %v944 = vld [vmem:[%s7] sm:$0xff]
      %v945 = vld [vmem:[%s7 + $0x8] sm:$0xff]
      %v946 = vld [vmem:[%s7 + $0x10] sm:$0xff]
      %v947 = vld [vmem:[%s7 + $0x18] sm:$0xff]
      %v948 = vld [vmem:[%s7 + $0x20] sm:$0xff]
      %v949 = vld [vmem:[%s7 + $0x28] sm:$0xff]
      %v950 = vld [vmem:[%s7 + $0x30] sm:$0xff]
      %v951 = vld [vmem:[%s7 + $0x38] sm:$0xff]
      %v953 = vsel %vm854, %v943, 0
      %955 = vmatpush.msra.mxu0 0.0
      %956 = vmatpush.msra.mxu0 0.0
      %957 = vmatpush.msra.mxu0 0.0
      %958 = vmatpush.msra.mxu0 0.0
      %959 = vmatpush.msra.mxu0 0.0
      %960 = vmatpush.msra.mxu0 0.0
      %961 = vmatpush.msra.mxu0 0.0
      %962 = vmatpush.msra.mxu0 0.0
      %963 = vmatpush.msra.mxu0 %v951
      %964 = vmatpush.msra.mxu0 %v950
      %965 = vmatpush.msra.mxu0 %v949
      %966 = vmatpush.msra.mxu0 %v948
      %967 = vmatpush.msra.mxu0 %v947
      %968 = vmatpush.msra.mxu0 %v946
      %969 = vmatpush.msra.mxu0 %v945
      %970 = vmatpush.msra.mxu0 %v944
      %971 = vmatmul.f32.gmra.mxu0 %v953
      %v972 = vpop.f32.mrf.mxu0
      %v973 = vadd.f32 0.0, %v972
      %974 = vdwg.mxu0
      %v975 = vadd.f32 %v880, %v973
      %v976 = vperm.slane %v340, 0
      %v977 = vadd.f32 %v975, %v976
      %v978 = vld [vmem:[%s3 + $0x7] sm:$0x1]
      %v979 = vld [vmem:[%s3 + $0x8] sm:$0x1]
      %v980 = vld [vmem:[%s3 + $0x9] sm:$0x1]
      %v981 = vld [vmem:[%s3 + $0xa] sm:$0x1]
      %v982 = vld [vmem:[%s3 + $0xb] sm:$0x1]
      %v983 = vld [vmem:[%s3 + $0xc] sm:$0x1]
      %v984 = vld [vmem:[%s3 + $0xd] sm:$0x1]
      %v985 = vsel %vm311, %v977, 0.0
      %986 = vadd.xlane.f32.xlu0 %v985
      %v987 = vpop.xlane.xlu0 %986
      %v988 = vmul.f32 %v987, %v351
      %v989 = vsub.f32 %v977, %v988
      %v990 = vmul.f32 %v989, %v989
      %v991 = vsel %vm311, %v990, 0.0
      %992 = vadd.xlane.f32.xlu0 %v991
      %v993 = vpop.xlane.xlu0 %992
      %v994 = vmul.f32 %v993, %v351
      %v995 = vadd.f32 %v994, 1e-05
      %v996 = vrsqrt.pop %v995
      %v997 = vmul.f32 %v996, %v995
      %v998 = vmul.f32 %v997, %v996
      %v999 = vmul.f32 0.5, %v998
      %v1000 = vsub.f32 1.5, %v999
      %v1001 = vmul.f32 %v996, %v1000
      %vm1002 = vweird.f32 %v995
      %vm1003 = vweird.f32 %v996
      %vm1004 = vmor %vm1002, %vm1003
      %v1005 = vsel %vm1004, %v996, %v1001
      %v1006 = vmul.f32 %v989, %v1005
      %v1007 = vperm.slane %v979, 0
      %v1008 = vmul.f32 %v1006, %v1007
      %v1009 = vperm.slane %v980, 0
      %v1010 = vadd.f32 %v1008, %v1009
      %s1011 = scalar_lea.vmem %s4, 64
      %v1012 = vld [vmem:[%s1011] sm:$0xff]
      %v1013 = vld [vmem:[%s1011 + $0x8] sm:$0xff]
      %v1014 = vld [vmem:[%s1011 + $0x10] sm:$0xff]
      %v1015 = vld [vmem:[%s1011 + $0x18] sm:$0xff]
      %v1016 = vld [vmem:[%s1011 + $0x20] sm:$0xff]
      %v1017 = vld [vmem:[%s1011 + $0x28] sm:$0xff]
      %v1018 = vld [vmem:[%s1011 + $0x30] sm:$0xff]
      %v1019 = vld [vmem:[%s1011 + $0x38] sm:$0xff]
      %v1021 = vsel %vm311, %v1010, 0
      %1023 = vmatpush.msra.mxu0 0.0
      %1024 = vmatpush.msra.mxu0 0.0
      %1025 = vmatpush.msra.mxu0 0.0
      %1026 = vmatpush.msra.mxu0 0.0
      %1027 = vmatpush.msra.mxu0 0.0
      %1028 = vmatpush.msra.mxu0 0.0
      %1029 = vmatpush.msra.mxu0 0.0
      %1030 = vmatpush.msra.mxu0 0.0
      %1031 = vmatpush.msra.mxu0 0.0
      %1032 = vmatpush.msra.mxu0 0.0
      %1033 = vmatpush.msra.mxu0 0.0
      %1034 = vmatpush.msra.mxu0 0.0
      %1035 = vmatpush.msra.mxu0 %v1018
      %1036 = vmatpush.msra.mxu0 %v1016
      %1037 = vmatpush.msra.mxu0 %v1014
      %1038 = vmatpush.msra.mxu0 %v1012
      %1039 = vmatmul.f32.gmra.mxu0 %v1021
      %v1040 = vpop.f32.mrf.mxu0
      %v1041 = vadd.f32 0.0, %v1040
      %1042 = vdwg.mxu0
      %1043 = vmatpush.msra.mxu0 0.0
      %1044 = vmatpush.msra.mxu0 0.0
      %1045 = vmatpush.msra.mxu0 0.0
      %1046 = vmatpush.msra.mxu0 0.0
      %1047 = vmatpush.msra.mxu0 0.0
      %1048 = vmatpush.msra.mxu0 0.0
      %1049 = vmatpush.msra.mxu0 0.0
      %1050 = vmatpush.msra.mxu0 0.0
      %1051 = vmatpush.msra.mxu0 0.0
      %1052 = vmatpush.msra.mxu0 0.0
      %1053 = vmatpush.msra.mxu0 0.0
      %1054 = vmatpush.msra.mxu0 0.0
      %1055 = vmatpush.msra.mxu0 %v1019
      %1056 = vmatpush.msra.mxu0 %v1017
      %1057 = vmatpush.msra.mxu0 %v1015
      %1058 = vmatpush.msra.mxu0 %v1013
      %1059 = vmatmul.f32.gmra.mxu0 %v1021
      %v1060 = vpop.f32.mrf.mxu0
      %v1061 = vadd.f32 0.0, %v1060
      %1062 = vdwg.mxu0
      %1064 = vrot.lane.b32.xlu0 %v1041, 112
      %v1065 = vpop.permute.xlu0 %1064
      %1066 = vrot.lane.b32.xlu0 %v1041, 96
      %v1067 = vpop.permute.xlu0 %1066
      %1068 = vrot.lane.b32.xlu0 %v1041, 80
      %v1069 = vpop.permute.xlu0 %1068
      %1071 = vrot.lane.b32.xlu0 %v1061, 112
      %v1072 = vpop.permute.xlu0 %1071
      %1074 = vrot.lane.b32.xlu0 %v1061, 96
      %v1075 = vpop.permute.xlu0 %1074
      %1077 = vrot.lane.b32.xlu0 %v1061, 80
      %v1078 = vpop.permute.xlu0 %1077
      %1080 = vrot.lane.b32.xlu0 %v1041, 64
      %v1081 = vpop.permute.xlu0 %1080
      %v1082 = vsel %vm445, %v1041, 0
      %v1084 = vsel %vm445, %v1081, 0
      %1086 = vmatpush.xpose.msra.mxu0 0.0
      %1087 = vmatpush.xpose.msra.mxu0 0.0
      %1088 = vmatpush.xpose.msra.mxu0 0.0
      %1089 = vmatpush.xpose.msra.mxu0 0.0
      %1090 = vmatpush.xpose.msra.mxu0 0.0
      %1091 = vmatpush.xpose.msra.mxu0 0.0
      %1092 = vmatpush.xpose.msra.mxu0 0.0
      %1093 = vmatpush.xpose.msra.mxu0 0.0
      %1094 = vmatpush.xpose.msra.mxu0 0.0
      %1095 = vmatpush.xpose.msra.mxu0 0.0
      %1096 = vmatpush.xpose.msra.mxu0 0.0
      %1097 = vmatpush.xpose.msra.mxu0 0.0
      %1098 = vmatpush.xpose.msra.mxu0 0.0
      %1099 = vmatpush.xpose.msra.mxu0 0.0
      %1100 = vmatpush.xpose.msra.mxu0 0.0
      %1101 = vmatpush.xpose.msra.mxu0 %v1084
      %1102 = vmatmul.f32.gmra.mxu0 %v1082
      %v1103 = vpop.f32.mrf.mxu0
      %v1104 = vadd.f32 0.0, %v1103
      %1105 = vdwg.mxu0
      %1106 = vrot.lane.b32.xlu0 %v1065, 64
      %v1107 = vpop.permute.xlu0 %1106
      %v1108 = vsel %vm445, %v1065, 0
      %v1110 = vsel %vm445, %v1107, 0
      %1112 = vmatpush.xpose.msra.mxu0 0.0
      %1113 = vmatpush.xpose.msra.mxu0 0.0
      %1114 = vmatpush.xpose.msra.mxu0 0.0
      %1115 = vmatpush.xpose.msra.mxu0 0.0
      %1116 = vmatpush.xpose.msra.mxu0 0.0
      %1117 = vmatpush.xpose.msra.mxu0 0.0
      %1118 = vmatpush.xpose.msra.mxu0 0.0
      %1119 = vmatpush.xpose.msra.mxu0 0.0
      %1120 = vmatpush.xpose.msra.mxu0 0.0
      %1121 = vmatpush.xpose.msra.mxu0 0.0
      %1122 = vmatpush.xpose.msra.mxu0 0.0
      %1123 = vmatpush.xpose.msra.mxu0 0.0
      %1124 = vmatpush.xpose.msra.mxu0 0.0
      %1125 = vmatpush.xpose.msra.mxu0 0.0
      %1126 = vmatpush.xpose.msra.mxu0 0.0
      %1127 = vmatpush.xpose.msra.mxu0 %v1110
      %1128 = vmatmul.f32.gmra.mxu0 %v1108
      %v1129 = vpop.f32.mrf.mxu0
      %v1130 = vadd.f32 0.0, %v1129
      %1131 = vdwg.mxu0
      %1132 = vrot.lane.b32.xlu0 %v1067, 64
      %v1133 = vpop.permute.xlu0 %1132
      %v1134 = vsel %vm445, %v1067, 0
      %v1136 = vsel %vm445, %v1133, 0
      %1138 = vmatpush.xpose.msra.mxu0 0.0
      %1139 = vmatpush.xpose.msra.mxu0 0.0
      %1140 = vmatpush.xpose.msra.mxu0 0.0
      %1141 = vmatpush.xpose.msra.mxu0 0.0
      %1142 = vmatpush.xpose.msra.mxu0 0.0
      %1143 = vmatpush.xpose.msra.mxu0 0.0
      %1144 = vmatpush.xpose.msra.mxu0 0.0
      %1145 = vmatpush.xpose.msra.mxu0 0.0
      %1146 = vmatpush.xpose.msra.mxu0 0.0
      %1147 = vmatpush.xpose.msra.mxu0 0.0
      %1148 = vmatpush.xpose.msra.mxu0 0.0
      %1149 = vmatpush.xpose.msra.mxu0 0.0
      %1150 = vmatpush.xpose.msra.mxu0 0.0
      %1151 = vmatpush.xpose.msra.mxu0 0.0
      %1152 = vmatpush.xpose.msra.mxu0 0.0
      %1153 = vmatpush.xpose.msra.mxu0 %v1136
      %1154 = vmatmul.f32.gmra.mxu0 %v1134
      %v1155 = vpop.f32.mrf.mxu0
      %v1156 = vadd.f32 0.0, %v1155
      %1157 = vdwg.mxu0
      %1158 = vrot.lane.b32.xlu0 %v1069, 64
      %v1159 = vpop.permute.xlu0 %1158
      %v1160 = vsel %vm445, %v1069, 0
      %v1162 = vsel %vm445, %v1159, 0
      %1164 = vmatpush.xpose.msra.mxu0 0.0
      %1165 = vmatpush.xpose.msra.mxu0 0.0
      %1166 = vmatpush.xpose.msra.mxu0 0.0
      %1167 = vmatpush.xpose.msra.mxu0 0.0
      %1168 = vmatpush.xpose.msra.mxu0 0.0
      %1169 = vmatpush.xpose.msra.mxu0 0.0
      %1170 = vmatpush.xpose.msra.mxu0 0.0
      %1171 = vmatpush.xpose.msra.mxu0 0.0
      %1172 = vmatpush.xpose.msra.mxu0 0.0
      %1173 = vmatpush.xpose.msra.mxu0 0.0
      %1174 = vmatpush.xpose.msra.mxu0 0.0
      %1175 = vmatpush.xpose.msra.mxu0 0.0
      %1176 = vmatpush.xpose.msra.mxu0 0.0
      %1177 = vmatpush.xpose.msra.mxu0 0.0
      %1178 = vmatpush.xpose.msra.mxu0 0.0
      %1179 = vmatpush.xpose.msra.mxu0 %v1162
      %1180 = vmatmul.f32.gmra.mxu0 %v1160
      %v1181 = vpop.f32.mrf.mxu0
      %v1182 = vadd.f32 0.0, %v1181
      %1183 = vdwg.mxu0
      %v1184 = vmul.f32 %v1104, 0.25
      %v1185 = vmul.f32 %v1130, 0.25
      %v1186 = vmul.f32 %v1156, 0.25
      %v1187 = vmul.f32 %v1182, 0.25
      %v1188 = vmul.f32 %v1184, %v304
      %v1189 = vmul.f32 %v1185, %v304
      %v1190 = vmul.f32 %v1186, %v304
      %v1191 = vmul.f32 %v1187, %v304
      %v1192 = vmul.f32 %v1188, %v1188
      %v1193 = vmul.f32 %v1189, %v1189
      %v1194 = vmul.f32 %v1190, %v1190
      %v1195 = vmul.f32 %v1191, %v1191
      %v1196 = vsel %vm560, %v1192, 0.0
      %1197 = vadd.xlane.f32.xlu0 %v1196
      %v1198 = vpop.xlane.xlu0 %1197
      %v1199 = vsel %vm560, %v1193, 0.0
      %1200 = vadd.xlane.f32.xlu0 %v1199
      %v1201 = vpop.xlane.xlu0 %1200
      %v1202 = vsel %vm560, %v1194, 0.0
      %1203 = vadd.xlane.f32.xlu0 %v1202
      %v1204 = vpop.xlane.xlu0 %1203
      %v1205 = vsel %vm560, %v1195, 0.0
      %1206 = vadd.xlane.f32.xlu0 %v1205
      %v1207 = vpop.xlane.xlu0 %1206
      %v1208 = vmul.f32 %v1184, %v1184
      %v1209 = vmul.f32 %v1185, %v1185
      %v1210 = vmul.f32 %v1186, %v1186
      %v1211 = vmul.f32 %v1187, %v1187
      %v1212 = vsel %vm560, %v1208, 0.0
      %1213 = vadd.xlane.f32.xlu0 %v1212
      %v1214 = vpop.xlane.xlu0 %1213
      %v1215 = vsel %vm560, %v1209, 0.0
      %1216 = vadd.xlane.f32.xlu0 %v1215
      %v1217 = vpop.xlane.xlu0 %1216
      %v1218 = vsel %vm560, %v1210, 0.0
      %1219 = vadd.xlane.f32.xlu0 %v1218
      %v1220 = vpop.xlane.xlu0 %1219
      %v1221 = vsel %vm560, %v1211, 0.0
      %1222 = vadd.xlane.f32.xlu0 %v1221
      %v1223 = vpop.xlane.xlu0 %1222
      %v1224 = vrsqrt.pop %v1214
      %v1225 = vmul.f32 %v1224, %v1214
      %v1226 = vmul.f32 %v1225, %v1224
      %v1227 = vmul.f32 0.5, %v1226
      %v1228 = vsub.f32 1.5, %v1227
      %v1229 = vmul.f32 %v1224, %v1228
      %v1230 = vmul.f32 %v1214, %v1229
      %vm1231 = vcmp.eq.f32.partialorder %v1214, inf
      %v1232 = vsel %vm1231, %v1214, %v1230
      %vm1233 = vcmp.eq.f32.partialorder %v1214, 0.0
      %v1234 = vand.u32 %v1214, 2147483648
      %v1235 = vsel %vm1233, %v1234, %v1232
      %v1236 = vrsqrt.pop %v1217
      %v1237 = vmul.f32 %v1236, %v1217
      %v1238 = vmul.f32 %v1237, %v1236
      %v1239 = vmul.f32 0.5, %v1238
      %v1240 = vsub.f32 1.5, %v1239
      %v1241 = vmul.f32 %v1236, %v1240
      %v1242 = vmul.f32 %v1217, %v1241
      %vm1243 = vcmp.eq.f32.partialorder %v1217, inf
      %v1244 = vsel %vm1243, %v1217, %v1242
      %vm1245 = vcmp.eq.f32.partialorder %v1217, 0.0
      %v1246 = vand.u32 %v1217, 2147483648
      %v1247 = vsel %vm1245, %v1246, %v1244
      %v1248 = vrsqrt.pop %v1220
      %v1249 = vmul.f32 %v1248, %v1220
      %v1250 = vmul.f32 %v1249, %v1248
      %v1251 = vmul.f32 0.5, %v1250
      %v1252 = vsub.f32 1.5, %v1251
      %v1253 = vmul.f32 %v1248, %v1252
      %v1254 = vmul.f32 %v1220, %v1253
      %vm1255 = vcmp.eq.f32.partialorder %v1220, inf
      %v1256 = vsel %vm1255, %v1220, %v1254
      %vm1257 = vcmp.eq.f32.partialorder %v1220, 0.0
      %v1258 = vand.u32 %v1220, 2147483648
      %v1259 = vsel %vm1257, %v1258, %v1256
      %v1260 = vrsqrt.pop %v1223
      %v1261 = vmul.f32 %v1260, %v1223
      %v1262 = vmul.f32 %v1261, %v1260
      %v1263 = vmul.f32 0.5, %v1262
      %v1264 = vsub.f32 1.5, %v1263
      %v1265 = vmul.f32 %v1260, %v1264
      %v1266 = vmul.f32 %v1223, %v1265
      %vm1267 = vcmp.eq.f32.partialorder %v1223, inf
      %v1268 = vsel %vm1267, %v1223, %v1266
      %vm1269 = vcmp.eq.f32.partialorder %v1223, 0.0
      %v1270 = vand.u32 %v1223, 2147483648
      %v1271 = vsel %vm1269, %v1270, %v1268
      %v1272 = vmax.f32 %v1198, 1e-24
      %v1273 = vmax.f32 %v1201, 1e-24
      %v1274 = vmax.f32 %v1204, 1e-24
      %v1275 = vmax.f32 %v1207, 1e-24
      %v1276 = vrsqrt.pop %v1272
      %v1277 = vmul.f32 %v1276, %v1272
      %v1278 = vmul.f32 %v1277, %v1276
      %v1279 = vmul.f32 0.5, %v1278
      %v1280 = vsub.f32 1.5, %v1279
      %v1281 = vmul.f32 %v1276, %v1280
      %vm1282 = vweird.f32 %v1272
      %vm1283 = vweird.f32 %v1276
      %vm1284 = vmor %vm1282, %vm1283
      %v1285 = vsel %vm1284, %v1276, %v1281
      %v1286 = vrsqrt.pop %v1273
      %v1287 = vmul.f32 %v1286, %v1273
      %v1288 = vmul.f32 %v1287, %v1286
      %v1289 = vmul.f32 0.5, %v1288
      %v1290 = vsub.f32 1.5, %v1289
      %v1291 = vmul.f32 %v1286, %v1290
      %vm1292 = vweird.f32 %v1273
      %vm1293 = vweird.f32 %v1286
      %vm1294 = vmor %vm1292, %vm1293
      %v1295 = vsel %vm1294, %v1286, %v1291
      %v1296 = vrsqrt.pop %v1274
      %v1297 = vmul.f32 %v1296, %v1274
      %v1298 = vmul.f32 %v1297, %v1296
      %v1299 = vmul.f32 0.5, %v1298
      %v1300 = vsub.f32 1.5, %v1299
      %v1301 = vmul.f32 %v1296, %v1300
      %vm1302 = vweird.f32 %v1274
      %vm1303 = vweird.f32 %v1296
      %vm1304 = vmor %vm1302, %vm1303
      %v1305 = vsel %vm1304, %v1296, %v1301
      %v1306 = vrsqrt.pop %v1275
      %v1307 = vmul.f32 %v1306, %v1275
      %v1308 = vmul.f32 %v1307, %v1306
      %v1309 = vmul.f32 0.5, %v1308
      %v1310 = vsub.f32 1.5, %v1309
      %v1311 = vmul.f32 %v1306, %v1310
      %vm1312 = vweird.f32 %v1275
      %vm1313 = vweird.f32 %v1306
      %vm1314 = vmor %vm1312, %vm1313
      %v1315 = vsel %vm1314, %v1306, %v1311
      %v1316 = vmul.f32 %v1235, %v1285
      %v1317 = vmul.f32 %v1247, %v1295
      %v1318 = vmul.f32 %v1259, %v1305
      %v1319 = vmul.f32 %v1271, %v1315
      %v1320 = vmul.f32 %v1188, %v1316
      %v1321 = vmul.f32 %v1189, %v1317
      %v1322 = vmul.f32 %v1190, %v1318
      %v1323 = vmul.f32 %v1191, %v1319
      %v1324 = vadd.f32 %v1184, %v1320
      %v1325 = vadd.f32 %v1185, %v1321
      %v1326 = vadd.f32 %v1186, %v1322
      %v1327 = vadd.f32 %v1187, %v1323
      %v1328 = vsel %vm560, %v1324, -inf
      %1329 = vmax.xlane.f32.xlu0 %v1328
      %v1330 = vpop.xlane.xlu0 %1329
      %v1331 = vsel %vm560, %v1325, -inf
      %1332 = vmax.xlane.f32.xlu0 %v1331
      %v1333 = vpop.xlane.xlu0 %1332
      %v1334 = vsel %vm560, %v1326, -inf
      %1335 = vmax.xlane.f32.xlu0 %v1334
      %v1336 = vpop.xlane.xlu0 %1335
      %v1337 = vsel %vm560, %v1327, -inf
      %1338 = vmax.xlane.f32.xlu0 %v1337
      %v1339 = vpop.xlane.xlu0 %1338
      %v1340 = vsub.f32 %v1324, %v1330
      %v1341 = vsub.f32 %v1325, %v1333
      %v1342 = vsub.f32 %v1326, %v1336
      %v1343 = vsub.f32 %v1327, %v1339
      %v1344 = vmul.f32 %v1340, 1.442695
      %v1345 = vpow.pop %v1344
      %v1346 = vmul.f32 %v1341, 1.442695
      %v1347 = vpow.pop %v1346
      %v1348 = vmul.f32 %v1342, 1.442695
      %v1349 = vpow.pop %v1348
      %v1350 = vmul.f32 %v1343, 1.442695
      %v1351 = vpow.pop %v1350
      %v1352 = vsel %vm560, %v1345, 0.0
      %1353 = vadd.xlane.f32.xlu0 %v1352
      %v1354 = vpop.xlane.xlu0 %1353
      %v1355 = vsel %vm560, %v1347, 0.0
      %1356 = vadd.xlane.f32.xlu0 %v1355
      %v1357 = vpop.xlane.xlu0 %1356
      %v1358 = vsel %vm560, %v1349, 0.0
      %1359 = vadd.xlane.f32.xlu0 %v1358
      %v1360 = vpop.xlane.xlu0 %1359
      %v1361 = vsel %vm560, %v1351, 0.0
      %1362 = vadd.xlane.f32.xlu0 %v1361
      %v1363 = vpop.xlane.xlu0 %1362
      %v1364 = vrcp.pop %v1354
      %v1365 = vrcp.pop %v1357
      %v1366 = vrcp.pop %v1360
      %v1367 = vrcp.pop %v1363
      %v1368 = vmul.f32 %v1345, %v1364
      %v1369 = vmul.f32 %v1347, %v1365
      %v1370 = vmul.f32 %v1349, %v1366
      %v1371 = vmul.f32 %v1351, %v1367
      %v1373 = vsel %vm560, %v1368, 0
      %1375 = vmatpush.msra.mxu0 0.0
      %1376 = vmatpush.msra.mxu0 0.0
      %1377 = vmatpush.msra.mxu0 0.0
      %1378 = vmatpush.msra.mxu0 0.0
      %1379 = vmatpush.msra.mxu0 0.0
      %1380 = vmatpush.msra.mxu0 0.0
      %1381 = vmatpush.msra.mxu0 0.0
      %1382 = vmatpush.msra.mxu0 0.0
      %1383 = vmatpush.msra.mxu0 0.0
      %1384 = vmatpush.msra.mxu0 0.0
      %1385 = vmatpush.msra.mxu0 0.0
      %1386 = vmatpush.msra.mxu0 0.0
      %1387 = vmatpush.msra.mxu0 0.0
      %1388 = vmatpush.msra.mxu0 0.0
      %1389 = vmatpush.msra.mxu0 0.0
      %1390 = vmatpush.msra.mxu0 %v1061
      %1391 = vmatmul.f32.gmra.mxu0 %v1373
      %v1392 = vpop.f32.mrf.mxu0
      %v1393 = vadd.f32 0.0, %v1392
      %1394 = vdwg.mxu0
      %v1396 = vsel %vm560, %v1369, 0
      %1398 = vmatpush.msra.mxu0 0.0
      %1399 = vmatpush.msra.mxu0 0.0
      %1400 = vmatpush.msra.mxu0 0.0
      %1401 = vmatpush.msra.mxu0 0.0
      %1402 = vmatpush.msra.mxu0 0.0
      %1403 = vmatpush.msra.mxu0 0.0
      %1404 = vmatpush.msra.mxu0 0.0
      %1405 = vmatpush.msra.mxu0 0.0
      %1406 = vmatpush.msra.mxu0 0.0
      %1407 = vmatpush.msra.mxu0 0.0
      %1408 = vmatpush.msra.mxu0 0.0
      %1409 = vmatpush.msra.mxu0 0.0
      %1410 = vmatpush.msra.mxu0 0.0
      %1411 = vmatpush.msra.mxu0 0.0
      %1412 = vmatpush.msra.mxu0 0.0
      %1413 = vmatpush.msra.mxu0 %v1072
      %1414 = vmatmul.f32.gmra.mxu0 %v1396
      %v1415 = vpop.f32.mrf.mxu0
      %v1416 = vadd.f32 0.0, %v1415
      %1417 = vdwg.mxu0
      %v1419 = vsel %vm560, %v1370, 0
      %1421 = vmatpush.msra.mxu0 0.0
      %1422 = vmatpush.msra.mxu0 0.0
      %1423 = vmatpush.msra.mxu0 0.0
      %1424 = vmatpush.msra.mxu0 0.0
      %1425 = vmatpush.msra.mxu0 0.0
      %1426 = vmatpush.msra.mxu0 0.0
      %1427 = vmatpush.msra.mxu0 0.0
      %1428 = vmatpush.msra.mxu0 0.0
      %1429 = vmatpush.msra.mxu0 0.0
      %1430 = vmatpush.msra.mxu0 0.0
      %1431 = vmatpush.msra.mxu0 0.0
      %1432 = vmatpush.msra.mxu0 0.0
      %1433 = vmatpush.msra.mxu0 0.0
      %1434 = vmatpush.msra.mxu0 0.0
      %1435 = vmatpush.msra.mxu0 0.0
      %1436 = vmatpush.msra.mxu0 %v1075
      %1437 = vmatmul.f32.gmra.mxu0 %v1419
      %v1438 = vpop.f32.mrf.mxu0
      %v1439 = vadd.f32 0.0, %v1438
      %1440 = vdwg.mxu0
      %v1442 = vsel %vm560, %v1371, 0
      %1444 = vmatpush.msra.mxu0 0.0
      %1445 = vmatpush.msra.mxu0 0.0
      %1446 = vmatpush.msra.mxu0 0.0
      %1447 = vmatpush.msra.mxu0 0.0
      %1448 = vmatpush.msra.mxu0 0.0
      %1449 = vmatpush.msra.mxu0 0.0
      %1450 = vmatpush.msra.mxu0 0.0
      %1451 = vmatpush.msra.mxu0 0.0
      %1452 = vmatpush.msra.mxu0 0.0
      %1453 = vmatpush.msra.mxu0 0.0
      %1454 = vmatpush.msra.mxu0 0.0
      %1455 = vmatpush.msra.mxu0 0.0
      %1456 = vmatpush.msra.mxu0 0.0
      %1457 = vmatpush.msra.mxu0 0.0
      %1458 = vmatpush.msra.mxu0 0.0
      %1459 = vmatpush.msra.mxu0 %v1078
      %1460 = vmatmul.f32.gmra.mxu0 %v1442
      %v1461 = vpop.f32.mrf.mxu0
      %v1462 = vadd.f32 0.0, %v1461
      %1463 = vdwg.mxu0
      %1465 = vrot.lane.b32.xlu0 %v1416, 16
      %v1466 = vpop.permute.xlu0 %1465
      %1469 = vrot.lane.b32.xlu0 %v1439, 32
      %v1470 = vpop.permute.xlu0 %1469
      %1473 = vrot.lane.b32.xlu0 %v1462, 48
      %v1474 = vpop.permute.xlu0 %1473
      %v1476 = vsel %vm445, %v1393, %v1466
      %v1477 = vsel %vm311, %v1476, %v1470
      %v1478 = vsel %vm843, %v1477, %v1474
      %v1479 = vmul.f32 %v1478, %v303
      %s1480 = scalar_lea.vmem %s5, 64
      %v1481 = vld [vmem:[%s1480] sm:$0xff]
      %v1482 = vld [vmem:[%s1480 + $0x8] sm:$0xff]
      %v1483 = vld [vmem:[%s1480 + $0x10] sm:$0xff]
      %v1484 = vld [vmem:[%s1480 + $0x18] sm:$0xff]
      %v1485 = vld [vmem:[%s1480 + $0x20] sm:$0xff]
      %v1486 = vld [vmem:[%s1480 + $0x28] sm:$0xff]
      %v1487 = vld [vmem:[%s1480 + $0x30] sm:$0xff]
      %v1488 = vld [vmem:[%s1480 + $0x38] sm:$0xff]
      %v1490 = vsel %vm854, %v1479, 0
      %1492 = vmatpush.msra.mxu0 0.0
      %1493 = vmatpush.msra.mxu0 0.0
      %1494 = vmatpush.msra.mxu0 0.0
      %1495 = vmatpush.msra.mxu0 0.0
      %1496 = vmatpush.msra.mxu0 0.0
      %1497 = vmatpush.msra.mxu0 0.0
      %1498 = vmatpush.msra.mxu0 0.0
      %1499 = vmatpush.msra.mxu0 0.0
      %1500 = vmatpush.msra.mxu0 %v1488
      %1501 = vmatpush.msra.mxu0 %v1487
      %1502 = vmatpush.msra.mxu0 %v1486
      %1503 = vmatpush.msra.mxu0 %v1485
      %1504 = vmatpush.msra.mxu0 %v1484
      %1505 = vmatpush.msra.mxu0 %v1483
      %1506 = vmatpush.msra.mxu0 %v1482
      %1507 = vmatpush.msra.mxu0 %v1481
      %1508 = vmatmul.f32.gmra.mxu0 %v1490
      %v1509 = vpop.f32.mrf.mxu0
      %v1510 = vadd.f32 0.0, %v1509
      %1511 = vdwg.mxu0
      %v1512 = vadd.f32 %v977, %v1510
      %v1513 = vperm.slane %v978, 0
      %v1514 = vadd.f32 %v1512, %v1513
      %v1515 = vsel %vm311, %v1514, 0.0
      %1516 = vadd.xlane.f32.xlu0 %v1515
      %v1517 = vpop.xlane.xlu0 %1516
      %v1518 = vmul.f32 %v1517, %v351
      %v1519 = vsub.f32 %v1514, %v1518
      %v1520 = vmul.f32 %v1519, %v1519
      %v1521 = vsel %vm311, %v1520, 0.0
      %1522 = vadd.xlane.f32.xlu0 %v1521
      %v1523 = vpop.xlane.xlu0 %1522
      %v1524 = vmul.f32 %v1523, %v351
      %v1525 = vadd.f32 %v1524, 1e-05
      %v1526 = vrsqrt.pop %v1525
      %v1527 = vmul.f32 %v1526, %v1525
      %v1528 = vmul.f32 %v1527, %v1526
      %v1529 = vmul.f32 0.5, %v1528
      %v1530 = vsub.f32 1.5, %v1529
      %v1531 = vmul.f32 %v1526, %v1530
      %vm1532 = vweird.f32 %v1525
      %vm1533 = vweird.f32 %v1526
      %vm1534 = vmor %vm1532, %vm1533
      %v1535 = vsel %vm1534, %v1526, %v1531
      %v1536 = vmul.f32 %v1519, %v1535
      %v1537 = vperm.slane %v981, 0
      %v1538 = vmul.f32 %v1536, %v1537
      %v1539 = vperm.slane %v982, 0
      %v1540 = vadd.f32 %v1538, %v1539
      %s1541 = scalar_lea.vmem %s6, 32
      %v1542 = vld [vmem:[%s1541] sm:$0xff]
      %v1543 = vld [vmem:[%s1541 + $0x8] sm:$0xff]
      %v1544 = vld [vmem:[%s1541 + $0x10] sm:$0xff]
      %v1545 = vld [vmem:[%s1541 + $0x18] sm:$0xff]
      %v1546 = vperm.slane %v984, 0
      %v1548 = vsel %vm311, %v1540, 0
      %1550 = vmatpush.msra.mxu0 0.0
      %1551 = vmatpush.msra.mxu0 0.0
      %1552 = vmatpush.msra.mxu0 0.0
      %1553 = vmatpush.msra.mxu0 0.0
      %1554 = vmatpush.msra.mxu0 0.0
      %1555 = vmatpush.msra.mxu0 0.0
      %1556 = vmatpush.msra.mxu0 0.0
      %1557 = vmatpush.msra.mxu0 0.0
      %1558 = vmatpush.msra.mxu0 0.0
      %1559 = vmatpush.msra.mxu0 0.0
      %1560 = vmatpush.msra.mxu0 0.0
      %1561 = vmatpush.msra.mxu0 0.0
      %1562 = vmatpush.msra.mxu0 %v1545
      %1563 = vmatpush.msra.mxu0 %v1544
      %1564 = vmatpush.msra.mxu0 %v1543
      %1565 = vmatpush.msra.mxu0 %v1542
      %1566 = vmatmul.f32.gmra.mxu0 %v1548
      %v1567 = vpop.f32.mrf.mxu0
      %v1568 = vadd.f32 %v1546, %v1567
      %1569 = vdwg.mxu0
      %v1570 = vmul.f32 %v1568, %v1568
      %v1571 = vmul.f32 %v1568, %v1570
      %v1572 = vmul.f32 %v1571, 0.044715
      %v1573 = vadd.f32 %v1568, %v1572
      %v1574 = vmul.f32 %v1573, 0.7978846
      %v1575 = vtanh.pop %v1574
      %v1576 = vadd.f32 %v1575, 1.0
      %v1577 = vmul.f32 %v1576, 0.5
      %v1578 = vmul.f32 %v1568, %v1577
      %s1579 = scalar_lea.vmem %s7, 64
      %v1580 = vld [vmem:[%s1579] sm:$0xff]
      %v1581 = vld [vmem:[%s1579 + $0x8] sm:$0xff]
      %v1582 = vld [vmem:[%s1579 + $0x10] sm:$0xff]
      %v1583 = vld [vmem:[%s1579 + $0x18] sm:$0xff]
      %v1584 = vld [vmem:[%s1579 + $0x20] sm:$0xff]
      %v1585 = vld [vmem:[%s1579 + $0x28] sm:$0xff]
      %v1586 = vld [vmem:[%s1579 + $0x30] sm:$0xff]
      %v1587 = vld [vmem:[%s1579 + $0x38] sm:$0xff]
      %v1589 = vsel %vm854, %v1578, 0
      %1591 = vmatpush.msra.mxu0 0.0
      %1592 = vmatpush.msra.mxu0 0.0
      %1593 = vmatpush.msra.mxu0 0.0
      %1594 = vmatpush.msra.mxu0 0.0
      %1595 = vmatpush.msra.mxu0 0.0
      %1596 = vmatpush.msra.mxu0 0.0
      %1597 = vmatpush.msra.mxu0 0.0
      %1598 = vmatpush.msra.mxu0 0.0
      %1599 = vmatpush.msra.mxu0 %v1587
      %1600 = vmatpush.msra.mxu0 %v1586
      %1601 = vmatpush.msra.mxu0 %v1585
      %1602 = vmatpush.msra.mxu0 %v1584
      %1603 = vmatpush.msra.mxu0 %v1583
      %1604 = vmatpush.msra.mxu0 %v1582
      %1605 = vmatpush.msra.mxu0 %v1581
      %1606 = vmatpush.msra.mxu0 %v1580
      %1607 = vmatmul.f32.gmra.mxu0 %v1589
      %v1608 = vpop.f32.mrf.mxu0
      %v1609 = vadd.f32 0.0, %v1608
      %1610 = vdwg.mxu0
      %v1611 = vadd.f32 %v1514, %v1609
      %v1612 = vperm.slane %v983, 0
      %v1613 = vadd.f32 %v1611, %v1612
      %1615 = vrot.lane.b32.xlu0 %v1613, 32
      %v1616 = vpop.permute.xlu0 %1615
      %v1618 = vsel %vm311, %v301, %v1616
      %s1619 = scalar_lea.vmem %s1, 8
      %v1620 = vld [vmem:[%s1619] sm:$0xff]
      %s1621 = scalar_lea.vmem %s3, 16
      %v1622 = vld [vmem:[%s1621 + $0xe] sm:$0x1]
      %s1623 = scalar_lea.vmem %s2, 96
      %v1624 = vld [vmem:[%s1623] sm:$0xff]
      %v1625 = vld [vmem:[%s1623 + $0x8] sm:$0xff]
      %v1626 = vld [vmem:[%s1623 + $0x10] sm:$0xff]
      %v1627 = vld [vmem:[%s1623 + $0x18] sm:$0xff]
      %v1628 = vld [vmem:[%s1623 + $0x20] sm:$0xff]
      %v1629 = vld [vmem:[%s1623 + $0x28] sm:$0xff]
      %v1630 = vld [vmem:[%s1623 + $0x30] sm:$0xff]
      %v1631 = vld [vmem:[%s1623 + $0x38] sm:$0xff]
      %v1632 = vperm.slane %v1622, 0
      %v1634 = vsel %vm854, %v1618, 0
      %1636 = vmatpush.msra.mxu0 0.0
      %1637 = vmatpush.msra.mxu0 0.0
      %1638 = vmatpush.msra.mxu0 0.0
      %1639 = vmatpush.msra.mxu0 0.0
      %1640 = vmatpush.msra.mxu0 0.0
      %1641 = vmatpush.msra.mxu0 0.0
      %1642 = vmatpush.msra.mxu0 0.0
      %1643 = vmatpush.msra.mxu0 0.0
      %1644 = vmatpush.msra.mxu0 %v1631
      %1645 = vmatpush.msra.mxu0 %v1630
      %1646 = vmatpush.msra.mxu0 %v1629
      %1647 = vmatpush.msra.mxu0 %v1628
      %1648 = vmatpush.msra.mxu0 %v1627
      %1649 = vmatpush.msra.mxu0 %v1626
      %1650 = vmatpush.msra.mxu0 %v1625
      %1651 = vmatpush.msra.mxu0 %v1624
      %1652 = vmatmul.f32.gmra.mxu0 %v1634
      %v1653 = vpop.f32.mrf.mxu0
      %v1654 = vadd.f32 %v1632, %v1653
      %1655 = vdwg.mxu0
      %v1656 = vld [vmem:[%s1621] sm:$0x1]
      %v1657 = vld [vmem:[%s1621 + $0x1] sm:$0x1]
      %v1658 = vld [vmem:[%s1621 + $0x2] sm:$0x1]
      %v1659 = vld [vmem:[%s1621 + $0x3] sm:$0x1]
      %v1660 = vld [vmem:[%s1621 + $0x4] sm:$0x1]
      %v1661 = vld [vmem:[%s1621 + $0x5] sm:$0x1]
      %v1662 = vld [vmem:[%s1621 + $0x6] sm:$0x1]
      %v1663 = vsel %vm311, %v1654, 0.0
      %1664 = vadd.xlane.f32.xlu0 %v1663
      %v1665 = vpop.xlane.xlu0 %1664
      %v1666 = vmul.f32 %v1665, %v351
      %v1667 = vsub.f32 %v1654, %v1666
      %v1668 = vmul.f32 %v1667, %v1667
      %v1669 = vsel %vm311, %v1668, 0.0
      %1670 = vadd.xlane.f32.xlu0 %v1669
      %v1671 = vpop.xlane.xlu0 %1670
      %v1672 = vmul.f32 %v1671, %v351
      %v1673 = vadd.f32 %v1672, 1e-05
      %v1674 = vrsqrt.pop %v1673
      %v1675 = vmul.f32 %v1674, %v1673
      %v1676 = vmul.f32 %v1675, %v1674
      %v1677 = vmul.f32 0.5, %v1676
      %v1678 = vsub.f32 1.5, %v1677
      %v1679 = vmul.f32 %v1674, %v1678
      %vm1680 = vweird.f32 %v1673
      %vm1681 = vweird.f32 %v1674
      %vm1682 = vmor %vm1680, %vm1681
      %v1683 = vsel %vm1682, %v1674, %v1679
      %v1684 = vmul.f32 %v1667, %v1683
      %v1685 = vperm.slane %v1657, 0
      %v1686 = vmul.f32 %v1684, %v1685
      %v1687 = vperm.slane %v1658, 0
      %v1688 = vadd.f32 %v1686, %v1687
      %s1689 = scalar_lea.vmem %s4, 128
      %v1690 = vld [vmem:[%s1689] sm:$0xff]
      %v1691 = vld [vmem:[%s1689 + $0x8] sm:$0xff]
      %v1692 = vld [vmem:[%s1689 + $0x10] sm:$0xff]
      %v1693 = vld [vmem:[%s1689 + $0x18] sm:$0xff]
      %v1694 = vld [vmem:[%s1689 + $0x20] sm:$0xff]
      %v1695 = vld [vmem:[%s1689 + $0x28] sm:$0xff]
      %v1696 = vld [vmem:[%s1689 + $0x30] sm:$0xff]
      %v1697 = vld [vmem:[%s1689 + $0x38] sm:$0xff]
      %v1699 = vsel %vm311, %v1688, 0
      %1701 = vmatpush.msra.mxu0 0.0
      %1702 = vmatpush.msra.mxu0 0.0
      %1703 = vmatpush.msra.mxu0 0.0
      %1704 = vmatpush.msra.mxu0 0.0
      %1705 = vmatpush.msra.mxu0 0.0
      %1706 = vmatpush.msra.mxu0 0.0
      %1707 = vmatpush.msra.mxu0 0.0
      %1708 = vmatpush.msra.mxu0 0.0
      %1709 = vmatpush.msra.mxu0 0.0
      %1710 = vmatpush.msra.mxu0 0.0
      %1711 = vmatpush.msra.mxu0 0.0
      %1712 = vmatpush.msra.mxu0 0.0
      %1713 = vmatpush.msra.mxu0 %v1696
      %1714 = vmatpush.msra.mxu0 %v1694
      %1715 = vmatpush.msra.mxu0 %v1692
      %1716 = vmatpush.msra.mxu0 %v1690
      %1717 = vmatmul.f32.gmra.mxu0 %v1699
      %v1718 = vpop.f32.mrf.mxu0
      %v1719 = vadd.f32 0.0, %v1718
      %1720 = vdwg.mxu0
      %1721 = vmatpush.msra.mxu0 0.0
      %1722 = vmatpush.msra.mxu0 0.0
      %1723 = vmatpush.msra.mxu0 0.0
      %1724 = vmatpush.msra.mxu0 0.0
      %1725 = vmatpush.msra.mxu0 0.0
      %1726 = vmatpush.msra.mxu0 0.0
      %1727 = vmatpush.msra.mxu0 0.0
      %1728 = vmatpush.msra.mxu0 0.0
      %1729 = vmatpush.msra.mxu0 0.0
      %1730 = vmatpush.msra.mxu0 0.0
      %1731 = vmatpush.msra.mxu0 0.0
      %1732 = vmatpush.msra.mxu0 0.0
      %1733 = vmatpush.msra.mxu0 %v1697
      %1734 = vmatpush.msra.mxu0 %v1695
      %1735 = vmatpush.msra.mxu0 %v1693
      %1736 = vmatpush.msra.mxu0 %v1691
      %1737 = vmatmul.f32.gmra.mxu0 %v1699
      %v1738 = vpop.f32.mrf.mxu0
      %v1739 = vadd.f32 0.0, %v1738
      %1740 = vdwg.mxu0
      %1742 = vrot.lane.b32.xlu0 %v1719, 112
      %v1743 = vpop.permute.xlu0 %1742
      %1744 = vrot.lane.b32.xlu0 %v1719, 96
      %v1745 = vpop.permute.xlu0 %1744
      %1746 = vrot.lane.b32.xlu0 %v1719, 80
      %v1747 = vpop.permute.xlu0 %1746
      %1749 = vrot.lane.b32.xlu0 %v1739, 112
      %v1750 = vpop.permute.xlu0 %1749
      %1752 = vrot.lane.b32.xlu0 %v1739, 96
      %v1753 = vpop.permute.xlu0 %1752
      %1755 = vrot.lane.b32.xlu0 %v1739, 80
      %v1756 = vpop.permute.xlu0 %1755
      %1758 = vrot.lane.b32.xlu0 %v1719, 64
      %v1759 = vpop.permute.xlu0 %1758
      %v1760 = vsel %vm445, %v1719, 0
      %v1762 = vsel %vm445, %v1759, 0
      %1764 = vmatpush.xpose.msra.mxu0 0.0
      %1765 = vmatpush.xpose.msra.mxu0 0.0
      %1766 = vmatpush.xpose.msra.mxu0 0.0
      %1767 = vmatpush.xpose.msra.mxu0 0.0
      %1768 = vmatpush.xpose.msra.mxu0 0.0
      %1769 = vmatpush.xpose.msra.mxu0 0.0
      %1770 = vmatpush.xpose.msra.mxu0 0.0
      %1771 = vmatpush.xpose.msra.mxu0 0.0
      %1772 = vmatpush.xpose.msra.mxu0 0.0
      %1773 = vmatpush.xpose.msra.mxu0 0.0
      %1774 = vmatpush.xpose.msra.mxu0 0.0
      %1775 = vmatpush.xpose.msra.mxu0 0.0
      %1776 = vmatpush.xpose.msra.mxu0 0.0
      %1777 = vmatpush.xpose.msra.mxu0 0.0
      %1778 = vmatpush.xpose.msra.mxu0 0.0
      %1779 = vmatpush.xpose.msra.mxu0 %v1762
      %1780 = vmatmul.f32.gmra.mxu0 %v1760
      %v1781 = vpop.f32.mrf.mxu0
      %v1782 = vadd.f32 0.0, %v1781
      %1783 = vdwg.mxu0
      %1784 = vrot.lane.b32.xlu0 %v1743, 64
      %v1785 = vpop.permute.xlu0 %1784
      %v1786 = vsel %vm445, %v1743, 0
      %v1788 = vsel %vm445, %v1785, 0
      %1790 = vmatpush.xpose.msra.mxu0 0.0
      %1791 = vmatpush.xpose.msra.mxu0 0.0
      %1792 = vmatpush.xpose.msra.mxu0 0.0
      %1793 = vmatpush.xpose.msra.mxu0 0.0
      %1794 = vmatpush.xpose.msra.mxu0 0.0
      %1795 = vmatpush.xpose.msra.mxu0 0.0
      %1796 = vmatpush.xpose.msra.mxu0 0.0
      %1797 = vmatpush.xpose.msra.mxu0 0.0
      %1798 = vmatpush.xpose.msra.mxu0 0.0
      %1799 = vmatpush.xpose.msra.mxu0 0.0
      %1800 = vmatpush.xpose.msra.mxu0 0.0
      %1801 = vmatpush.xpose.msra.mxu0 0.0
      %1802 = vmatpush.xpose.msra.mxu0 0.0
      %1803 = vmatpush.xpose.msra.mxu0 0.0
      %1804 = vmatpush.xpose.msra.mxu0 0.0
      %1805 = vmatpush.xpose.msra.mxu0 %v1788
      %1806 = vmatmul.f32.gmra.mxu0 %v1786
      %v1807 = vpop.f32.mrf.mxu0
      %v1808 = vadd.f32 0.0, %v1807
      %1809 = vdwg.mxu0
      %1810 = vrot.lane.b32.xlu0 %v1745, 64
      %v1811 = vpop.permute.xlu0 %1810
      %v1812 = vsel %vm445, %v1745, 0
      %v1814 = vsel %vm445, %v1811, 0
      %1816 = vmatpush.xpose.msra.mxu0 0.0
      %1817 = vmatpush.xpose.msra.mxu0 0.0
      %1818 = vmatpush.xpose.msra.mxu0 0.0
      %1819 = vmatpush.xpose.msra.mxu0 0.0
      %1820 = vmatpush.xpose.msra.mxu0 0.0
      %1821 = vmatpush.xpose.msra.mxu0 0.0
      %1822 = vmatpush.xpose.msra.mxu0 0.0
      %1823 = vmatpush.xpose.msra.mxu0 0.0
      %1824 = vmatpush.xpose.msra.mxu0 0.0
      %1825 = vmatpush.xpose.msra.mxu0 0.0
      %1826 = vmatpush.xpose.msra.mxu0 0.0
      %1827 = vmatpush.xpose.msra.mxu0 0.0
      %1828 = vmatpush.xpose.msra.mxu0 0.0
      %1829 = vmatpush.xpose.msra.mxu0 0.0
      %1830 = vmatpush.xpose.msra.mxu0 0.0
      %1831 = vmatpush.xpose.msra.mxu0 %v1814
      %1832 = vmatmul.f32.gmra.mxu0 %v1812
      %v1833 = vpop.f32.mrf.mxu0
      %v1834 = vadd.f32 0.0, %v1833
      %1835 = vdwg.mxu0
      %1836 = vrot.lane.b32.xlu0 %v1747, 64
      %v1837 = vpop.permute.xlu0 %1836
      %v1838 = vsel %vm445, %v1747, 0
      %v1840 = vsel %vm445, %v1837, 0
      %1842 = vmatpush.xpose.msra.mxu0 0.0
      %1843 = vmatpush.xpose.msra.mxu0 0.0
      %1844 = vmatpush.xpose.msra.mxu0 0.0
      %1845 = vmatpush.xpose.msra.mxu0 0.0
      %1846 = vmatpush.xpose.msra.mxu0 0.0
      %1847 = vmatpush.xpose.msra.mxu0 0.0
      %1848 = vmatpush.xpose.msra.mxu0 0.0
      %1849 = vmatpush.xpose.msra.mxu0 0.0
      %1850 = vmatpush.xpose.msra.mxu0 0.0
      %1851 = vmatpush.xpose.msra.mxu0 0.0
      %1852 = vmatpush.xpose.msra.mxu0 0.0
      %1853 = vmatpush.xpose.msra.mxu0 0.0
      %1854 = vmatpush.xpose.msra.mxu0 0.0
      %1855 = vmatpush.xpose.msra.mxu0 0.0
      %1856 = vmatpush.xpose.msra.mxu0 0.0
      %1857 = vmatpush.xpose.msra.mxu0 %v1840
      %1858 = vmatmul.f32.gmra.mxu0 %v1838
      %v1859 = vpop.f32.mrf.mxu0
      %v1860 = vadd.f32 0.0, %v1859
      %1861 = vdwg.mxu0
      %v1862 = vmul.f32 %v1782, 0.25
      %v1863 = vmul.f32 %v1808, 0.25
      %v1864 = vmul.f32 %v1834, 0.25
      %v1865 = vmul.f32 %v1860, 0.25
      %v1866 = vmul.f32 %v1862, %v1620
      %v1867 = vmul.f32 %v1863, %v1620
      %v1868 = vmul.f32 %v1864, %v1620
      %v1869 = vmul.f32 %v1865, %v1620
      %v1870 = vmul.f32 %v1866, %v1866
      %v1871 = vmul.f32 %v1867, %v1867
      %v1872 = vmul.f32 %v1868, %v1868
      %v1873 = vmul.f32 %v1869, %v1869
      %v1874 = vsel %vm560, %v1870, 0.0
      %1875 = vadd.xlane.f32.xlu0 %v1874
      %v1876 = vpop.xlane.xlu0 %1875
      %v1877 = vsel %vm560, %v1871, 0.0
      %1878 = vadd.xlane.f32.xlu0 %v1877
      %v1879 = vpop.xlane.xlu0 %1878
      %v1880 = vsel %vm560, %v1872, 0.0
      %1881 = vadd.xlane.f32.xlu0 %v1880
      %v1882 = vpop.xlane.xlu0 %1881
      %v1883 = vsel %vm560, %v1873, 0.0
      %1884 = vadd.xlane.f32.xlu0 %v1883
      %v1885 = vpop.xlane.xlu0 %1884
      %v1886 = vmul.f32 %v1862, %v1862
      %v1887 = vmul.f32 %v1863, %v1863
      %v1888 = vmul.f32 %v1864, %v1864
      %v1889 = vmul.f32 %v1865, %v1865
      %v1890 = vsel %vm560, %v1886, 0.0
      %1891 = vadd.xlane.f32.xlu0 %v1890
      %v1892 = vpop.xlane.xlu0 %1891
      %v1893 = vsel %vm560, %v1887, 0.0
      %1894 = vadd.xlane.f32.xlu0 %v1893
      %v1895 = vpop.xlane.xlu0 %1894
      %v1896 = vsel %vm560, %v1888, 0.0
      %1897 = vadd.xlane.f32.xlu0 %v1896
      %v1898 = vpop.xlane.xlu0 %1897
      %v1899 = vsel %vm560, %v1889, 0.0
      %1900 = vadd.xlane.f32.xlu0 %v1899
      %v1901 = vpop.xlane.xlu0 %1900
      %v1902 = vrsqrt.pop %v1892
      %v1903 = vmul.f32 %v1902, %v1892
      %v1904 = vmul.f32 %v1903, %v1902
      %v1905 = vmul.f32 0.5, %v1904
      %v1906 = vsub.f32 1.5, %v1905
      %v1907 = vmul.f32 %v1902, %v1906
      %v1908 = vmul.f32 %v1892, %v1907
      %vm1909 = vcmp.eq.f32.partialorder %v1892, inf
      %v1910 = vsel %vm1909, %v1892, %v1908
      %vm1911 = vcmp.eq.f32.partialorder %v1892, 0.0
      %v1912 = vand.u32 %v1892, 2147483648
      %v1913 = vsel %vm1911, %v1912, %v1910
      %v1914 = vrsqrt.pop %v1895
      %v1915 = vmul.f32 %v1914, %v1895
      %v1916 = vmul.f32 %v1915, %v1914
      %v1917 = vmul.f32 0.5, %v1916
      %v1918 = vsub.f32 1.5, %v1917
      %v1919 = vmul.f32 %v1914, %v1918
      %v1920 = vmul.f32 %v1895, %v1919
      %vm1921 = vcmp.eq.f32.partialorder %v1895, inf
      %v1922 = vsel %vm1921, %v1895, %v1920
      %vm1923 = vcmp.eq.f32.partialorder %v1895, 0.0
      %v1924 = vand.u32 %v1895, 2147483648
      %v1925 = vsel %vm1923, %v1924, %v1922
      %v1926 = vrsqrt.pop %v1898
      %v1927 = vmul.f32 %v1926, %v1898
      %v1928 = vmul.f32 %v1927, %v1926
      %v1929 = vmul.f32 0.5, %v1928
      %v1930 = vsub.f32 1.5, %v1929
      %v1931 = vmul.f32 %v1926, %v1930
      %v1932 = vmul.f32 %v1898, %v1931
      %vm1933 = vcmp.eq.f32.partialorder %v1898, inf
      %v1934 = vsel %vm1933, %v1898, %v1932
      %vm1935 = vcmp.eq.f32.partialorder %v1898, 0.0
      %v1936 = vand.u32 %v1898, 2147483648
      %v1937 = vsel %vm1935, %v1936, %v1934
      %v1938 = vrsqrt.pop %v1901
      %v1939 = vmul.f32 %v1938, %v1901
      %v1940 = vmul.f32 %v1939, %v1938
      %v1941 = vmul.f32 0.5, %v1940
      %v1942 = vsub.f32 1.5, %v1941
      %v1943 = vmul.f32 %v1938, %v1942
      %v1944 = vmul.f32 %v1901, %v1943
      %vm1945 = vcmp.eq.f32.partialorder %v1901, inf
      %v1946 = vsel %vm1945, %v1901, %v1944
      %vm1947 = vcmp.eq.f32.partialorder %v1901, 0.0
      %v1948 = vand.u32 %v1901, 2147483648
      %v1949 = vsel %vm1947, %v1948, %v1946
      %v1950 = vmax.f32 %v1876, 1e-24
      %v1951 = vmax.f32 %v1879, 1e-24
      %v1952 = vmax.f32 %v1882, 1e-24
      %v1953 = vmax.f32 %v1885, 1e-24
      %v1954 = vrsqrt.pop %v1950
      %v1955 = vmul.f32 %v1954, %v1950
      %v1956 = vmul.f32 %v1955, %v1954
      %v1957 = vmul.f32 0.5, %v1956
      %v1958 = vsub.f32 1.5, %v1957
      %v1959 = vmul.f32 %v1954, %v1958
      %vm1960 = vweird.f32 %v1950
      %vm1961 = vweird.f32 %v1954
      %vm1962 = vmor %vm1960, %vm1961
      %v1963 = vsel %vm1962, %v1954, %v1959
      %v1964 = vrsqrt.pop %v1951
      %v1965 = vmul.f32 %v1964, %v1951
      %v1966 = vmul.f32 %v1965, %v1964
      %v1967 = vmul.f32 0.5, %v1966
      %v1968 = vsub.f32 1.5, %v1967
      %v1969 = vmul.f32 %v1964, %v1968
      %vm1970 = vweird.f32 %v1951
      %vm1971 = vweird.f32 %v1964
      %vm1972 = vmor %vm1970, %vm1971
      %v1973 = vsel %vm1972, %v1964, %v1969
      %v1974 = vrsqrt.pop %v1952
      %v1975 = vmul.f32 %v1974, %v1952
      %v1976 = vmul.f32 %v1975, %v1974
      %v1977 = vmul.f32 0.5, %v1976
      %v1978 = vsub.f32 1.5, %v1977
      %v1979 = vmul.f32 %v1974, %v1978
      %vm1980 = vweird.f32 %v1952
      %vm1981 = vweird.f32 %v1974
      %vm1982 = vmor %vm1980, %vm1981
      %v1983 = vsel %vm1982, %v1974, %v1979
      %v1984 = vrsqrt.pop %v1953
      %v1985 = vmul.f32 %v1984, %v1953
      %v1986 = vmul.f32 %v1985, %v1984
      %v1987 = vmul.f32 0.5, %v1986
      %v1988 = vsub.f32 1.5, %v1987
      %v1989 = vmul.f32 %v1984, %v1988
      %vm1990 = vweird.f32 %v1953
      %vm1991 = vweird.f32 %v1984
      %vm1992 = vmor %vm1990, %vm1991
      %v1993 = vsel %vm1992, %v1984, %v1989
      %v1994 = vmul.f32 %v1913, %v1963
      %v1995 = vmul.f32 %v1925, %v1973
      %v1996 = vmul.f32 %v1937, %v1983
      %v1997 = vmul.f32 %v1949, %v1993
      %v1998 = vmul.f32 %v1866, %v1994
      %v1999 = vmul.f32 %v1867, %v1995
      %v2000 = vmul.f32 %v1868, %v1996
      %v2001 = vmul.f32 %v1869, %v1997
      %v2002 = vadd.f32 %v1862, %v1998
      %v2003 = vadd.f32 %v1863, %v1999
      %v2004 = vadd.f32 %v1864, %v2000
      %v2005 = vadd.f32 %v1865, %v2001
      %v2006 = vsel %vm560, %v2002, -inf
      %2007 = vmax.xlane.f32.xlu0 %v2006
      %v2008 = vpop.xlane.xlu0 %2007
      %v2009 = vsel %vm560, %v2003, -inf
      %2010 = vmax.xlane.f32.xlu0 %v2009
      %v2011 = vpop.xlane.xlu0 %2010
      %v2012 = vsel %vm560, %v2004, -inf
      %2013 = vmax.xlane.f32.xlu0 %v2012
      %v2014 = vpop.xlane.xlu0 %2013
      %v2015 = vsel %vm560, %v2005, -inf
      %2016 = vmax.xlane.f32.xlu0 %v2015
      %v2017 = vpop.xlane.xlu0 %2016
      %v2018 = vsub.f32 %v2002, %v2008
      %v2019 = vsub.f32 %v2003, %v2011
      %v2020 = vsub.f32 %v2004, %v2014
      %v2021 = vsub.f32 %v2005, %v2017
      %v2022 = vmul.f32 %v2018, 1.442695
      %v2023 = vpow.pop %v2022
      %v2024 = vmul.f32 %v2019, 1.442695
      %v2025 = vpow.pop %v2024
      %v2026 = vmul.f32 %v2020, 1.442695
      %v2027 = vpow.pop %v2026
      %v2028 = vmul.f32 %v2021, 1.442695
      %v2029 = vpow.pop %v2028
      %v2030 = vsel %vm560, %v2023, 0.0
      %2031 = vadd.xlane.f32.xlu0 %v2030
      %v2032 = vpop.xlane.xlu0 %2031
      %v2033 = vsel %vm560, %v2025, 0.0
      %2034 = vadd.xlane.f32.xlu0 %v2033
      %v2035 = vpop.xlane.xlu0 %2034
      %v2036 = vsel %vm560, %v2027, 0.0
      %2037 = vadd.xlane.f32.xlu0 %v2036
      %v2038 = vpop.xlane.xlu0 %2037
      %v2039 = vsel %vm560, %v2029, 0.0
      %2040 = vadd.xlane.f32.xlu0 %v2039
      %v2041 = vpop.xlane.xlu0 %2040
      %v2042 = vrcp.pop %v2032
      %v2043 = vrcp.pop %v2035
      %v2044 = vrcp.pop %v2038
      %v2045 = vrcp.pop %v2041
      %v2046 = vmul.f32 %v2023, %v2042
      %v2047 = vmul.f32 %v2025, %v2043
      %v2048 = vmul.f32 %v2027, %v2044
      %v2049 = vmul.f32 %v2029, %v2045
      %v2051 = vsel %vm560, %v2046, 0
      %2053 = vmatpush.msra.mxu0 0.0
      %2054 = vmatpush.msra.mxu0 0.0
      %2055 = vmatpush.msra.mxu0 0.0
      %2056 = vmatpush.msra.mxu0 0.0
      %2057 = vmatpush.msra.mxu0 0.0
      %2058 = vmatpush.msra.mxu0 0.0
      %2059 = vmatpush.msra.mxu0 0.0
      %2060 = vmatpush.msra.mxu0 0.0
      %2061 = vmatpush.msra.mxu0 0.0
      %2062 = vmatpush.msra.mxu0 0.0
      %2063 = vmatpush.msra.mxu0 0.0
      %2064 = vmatpush.msra.mxu0 0.0
      %2065 = vmatpush.msra.mxu0 0.0
      %2066 = vmatpush.msra.mxu0 0.0
      %2067 = vmatpush.msra.mxu0 0.0
      %2068 = vmatpush.msra.mxu0 %v1739
      %2069 = vmatmul.f32.gmra.mxu0 %v2051
      %v2070 = vpop.f32.mrf.mxu0
      %v2071 = vadd.f32 0.0, %v2070
      %2072 = vdwg.mxu0
      %v2074 = vsel %vm560, %v2047, 0
      %2076 = vmatpush.msra.mxu0 0.0
      %2077 = vmatpush.msra.mxu0 0.0
      %2078 = vmatpush.msra.mxu0 0.0
      %2079 = vmatpush.msra.mxu0 0.0
      %2080 = vmatpush.msra.mxu0 0.0
      %2081 = vmatpush.msra.mxu0 0.0
      %2082 = vmatpush.msra.mxu0 0.0
      %2083 = vmatpush.msra.mxu0 0.0
      %2084 = vmatpush.msra.mxu0 0.0
      %2085 = vmatpush.msra.mxu0 0.0
      %2086 = vmatpush.msra.mxu0 0.0
      %2087 = vmatpush.msra.mxu0 0.0
      %2088 = vmatpush.msra.mxu0 0.0
      %2089 = vmatpush.msra.mxu0 0.0
      %2090 = vmatpush.msra.mxu0 0.0
      %2091 = vmatpush.msra.mxu0 %v1750
      %2092 = vmatmul.f32.gmra.mxu0 %v2074
      %v2093 = vpop.f32.mrf.mxu0
      %v2094 = vadd.f32 0.0, %v2093
      %2095 = vdwg.mxu0
      %v2097 = vsel %vm560, %v2048, 0
      %2099 = vmatpush.msra.mxu0 0.0
      %2100 = vmatpush.msra.mxu0 0.0
      %2101 = vmatpush.msra.mxu0 0.0
      %2102 = vmatpush.msra.mxu0 0.0
      %2103 = vmatpush.msra.mxu0 0.0
      %2104 = vmatpush.msra.mxu0 0.0
      %2105 = vmatpush.msra.mxu0 0.0
      %2106 = vmatpush.msra.mxu0 0.0
      %2107 = vmatpush.msra.mxu0 0.0
      %2108 = vmatpush.msra.mxu0 0.0
      %2109 = vmatpush.msra.mxu0 0.0
      %2110 = vmatpush.msra.mxu0 0.0
      %2111 = vmatpush.msra.mxu0 0.0
      %2112 = vmatpush.msra.mxu0 0.0
      %2113 = vmatpush.msra.mxu0 0.0
      %2114 = vmatpush.msra.mxu0 %v1753
      %2115 = vmatmul.f32.gmra.mxu0 %v2097
      %v2116 = vpop.f32.mrf.mxu0
      %v2117 = vadd.f32 0.0, %v2116
      %2118 = vdwg.mxu0
      %v2120 = vsel %vm560, %v2049, 0
      %2122 = vmatpush.msra.mxu0 0.0
      %2123 = vmatpush.msra.mxu0 0.0
      %2124 = vmatpush.msra.mxu0 0.0
      %2125 = vmatpush.msra.mxu0 0.0
      %2126 = vmatpush.msra.mxu0 0.0
      %2127 = vmatpush.msra.mxu0 0.0
      %2128 = vmatpush.msra.mxu0 0.0
      %2129 = vmatpush.msra.mxu0 0.0
      %2130 = vmatpush.msra.mxu0 0.0
      %2131 = vmatpush.msra.mxu0 0.0
      %2132 = vmatpush.msra.mxu0 0.0
      %2133 = vmatpush.msra.mxu0 0.0
      %2134 = vmatpush.msra.mxu0 0.0
      %2135 = vmatpush.msra.mxu0 0.0
      %2136 = vmatpush.msra.mxu0 0.0
      %2137 = vmatpush.msra.mxu0 %v1756
      %2138 = vmatmul.f32.gmra.mxu0 %v2120
      %v2139 = vpop.f32.mrf.mxu0
      %v2140 = vadd.f32 0.0, %v2139
      %2141 = vdwg.mxu0
      %2143 = vrot.lane.b32.xlu0 %v2094, 16
      %v2144 = vpop.permute.xlu0 %2143
      %2147 = vrot.lane.b32.xlu0 %v2117, 32
      %v2148 = vpop.permute.xlu0 %2147
      %2151 = vrot.lane.b32.xlu0 %v2140, 48
      %v2152 = vpop.permute.xlu0 %2151
      %v2154 = vsel %vm445, %v2071, %v2144
      %v2155 = vsel %vm311, %v2154, %v2148
      %v2156 = vsel %vm843, %v2155, %v2152
      %v2157 = vmul.f32 %v2156, %v303
      %s2158 = scalar_lea.vmem %s5, 128
      %v2159 = vld [vmem:[%s2158] sm:$0xff]
      %v2160 = vld [vmem:[%s2158 + $0x8] sm:$0xff]
      %v2161 = vld [vmem:[%s2158 + $0x10] sm:$0xff]
      %v2162 = vld [vmem:[%s2158 + $0x18] sm:$0xff]
      %v2163 = vld [vmem:[%s2158 + $0x20] sm:$0xff]
      %v2164 = vld [vmem:[%s2158 + $0x28] sm:$0xff]
      %v2165 = vld [vmem:[%s2158 + $0x30] sm:$0xff]
      %v2166 = vld [vmem:[%s2158 + $0x38] sm:$0xff]
      %v2168 = vsel %vm854, %v2157, 0
      %2170 = vmatpush.msra.mxu0 0.0
      %2171 = vmatpush.msra.mxu0 0.0
      %2172 = vmatpush.msra.mxu0 0.0
      %2173 = vmatpush.msra.mxu0 0.0
      %2174 = vmatpush.msra.mxu0 0.0
      %2175 = vmatpush.msra.mxu0 0.0
      %2176 = vmatpush.msra.mxu0 0.0
      %2177 = vmatpush.msra.mxu0 0.0
      %2178 = vmatpush.msra.mxu0 %v2166
      %2179 = vmatpush.msra.mxu0 %v2165
      %2180 = vmatpush.msra.mxu0 %v2164
      %2181 = vmatpush.msra.mxu0 %v2163
      %2182 = vmatpush.msra.mxu0 %v2162
      %2183 = vmatpush.msra.mxu0 %v2161
      %2184 = vmatpush.msra.mxu0 %v2160
      %2185 = vmatpush.msra.mxu0 %v2159
      %2186 = vmatmul.f32.gmra.mxu0 %v2168
      %v2187 = vpop.f32.mrf.mxu0
      %v2188 = vadd.f32 0.0, %v2187
      %2189 = vdwg.mxu0
      %v2190 = vadd.f32 %v1654, %v2188
      %v2191 = vperm.slane %v1656, 0
      %v2192 = vadd.f32 %v2190, %v2191
      %v2193 = vsel %vm311, %v2192, 0.0
      %2194 = vadd.xlane.f32.xlu0 %v2193
      %v2195 = vpop.xlane.xlu0 %2194
      %v2196 = vmul.f32 %v2195, %v351
      %v2197 = vsub.f32 %v2192, %v2196
      %v2198 = vmul.f32 %v2197, %v2197
      %v2199 = vsel %vm311, %v2198, 0.0
      %2200 = vadd.xlane.f32.xlu0 %v2199
      %v2201 = vpop.xlane.xlu0 %2200
      %v2202 = vmul.f32 %v2201, %v351
      %v2203 = vadd.f32 %v2202, 1e-05
      %v2204 = vrsqrt.pop %v2203
      %v2205 = vmul.f32 %v2204, %v2203
      %v2206 = vmul.f32 %v2205, %v2204
      %v2207 = vmul.f32 0.5, %v2206
      %v2208 = vsub.f32 1.5, %v2207
      %v2209 = vmul.f32 %v2204, %v2208
      %vm2210 = vweird.f32 %v2203
      %vm2211 = vweird.f32 %v2204
      %vm2212 = vmor %vm2210, %vm2211
      %v2213 = vsel %vm2212, %v2204, %v2209
      %v2214 = vmul.f32 %v2197, %v2213
      %v2215 = vperm.slane %v1659, 0
      %v2216 = vmul.f32 %v2214, %v2215
      %v2217 = vperm.slane %v1660, 0
      %v2218 = vadd.f32 %v2216, %v2217
      %s2219 = scalar_lea.vmem %s6, 64
      %v2220 = vld [vmem:[%s2219] sm:$0xff]
      %v2221 = vld [vmem:[%s2219 + $0x8] sm:$0xff]
      %v2222 = vld [vmem:[%s2219 + $0x10] sm:$0xff]
      %v2223 = vld [vmem:[%s2219 + $0x18] sm:$0xff]
      %v2224 = vperm.slane %v1662, 0
      %v2226 = vsel %vm311, %v2218, 0
      %2228 = vmatpush.msra.mxu0 0.0
      %2229 = vmatpush.msra.mxu0 0.0
      %2230 = vmatpush.msra.mxu0 0.0
      %2231 = vmatpush.msra.mxu0 0.0
      %2232 = vmatpush.msra.mxu0 0.0
      %2233 = vmatpush.msra.mxu0 0.0
      %2234 = vmatpush.msra.mxu0 0.0
      %2235 = vmatpush.msra.mxu0 0.0
      %2236 = vmatpush.msra.mxu0 0.0
      %2237 = vmatpush.msra.mxu0 0.0
      %2238 = vmatpush.msra.mxu0 0.0
      %2239 = vmatpush.msra.mxu0 0.0
      %2240 = vmatpush.msra.mxu0 %v2223
      %2241 = vmatpush.msra.mxu0 %v2222
      %2242 = vmatpush.msra.mxu0 %v2221
      %2243 = vmatpush.msra.mxu0 %v2220
      %2244 = vmatmul.f32.gmra.mxu0 %v2226
      %v2245 = vpop.f32.mrf.mxu0
      %v2246 = vadd.f32 %v2224, %v2245
      %2247 = vdwg.mxu0
      %v2248 = vmul.f32 %v2246, %v2246
      %v2249 = vmul.f32 %v2246, %v2248
      %v2250 = vmul.f32 %v2249, 0.044715
      %v2251 = vadd.f32 %v2246, %v2250
      %v2252 = vmul.f32 %v2251, 0.7978846
      %v2253 = vtanh.pop %v2252
      %v2254 = vadd.f32 %v2253, 1.0
      %v2255 = vmul.f32 %v2254, 0.5
      %v2256 = vmul.f32 %v2246, %v2255
      %s2257 = scalar_lea.vmem %s7, 128
      %v2258 = vld [vmem:[%s2257] sm:$0xff]
      %v2259 = vld [vmem:[%s2257 + $0x8] sm:$0xff]
      %v2260 = vld [vmem:[%s2257 + $0x10] sm:$0xff]
      %v2261 = vld [vmem:[%s2257 + $0x18] sm:$0xff]
      %v2262 = vld [vmem:[%s2257 + $0x20] sm:$0xff]
      %v2263 = vld [vmem:[%s2257 + $0x28] sm:$0xff]
      %v2264 = vld [vmem:[%s2257 + $0x30] sm:$0xff]
      %v2265 = vld [vmem:[%s2257 + $0x38] sm:$0xff]
      %v2267 = vsel %vm854, %v2256, 0
      %2269 = vmatpush.msra.mxu0 0.0
      %2270 = vmatpush.msra.mxu0 0.0
      %2271 = vmatpush.msra.mxu0 0.0
      %2272 = vmatpush.msra.mxu0 0.0
      %2273 = vmatpush.msra.mxu0 0.0
      %2274 = vmatpush.msra.mxu0 0.0
      %2275 = vmatpush.msra.mxu0 0.0
      %2276 = vmatpush.msra.mxu0 0.0
      %2277 = vmatpush.msra.mxu0 %v2265
      %2278 = vmatpush.msra.mxu0 %v2264
      %2279 = vmatpush.msra.mxu0 %v2263
      %2280 = vmatpush.msra.mxu0 %v2262
      %2281 = vmatpush.msra.mxu0 %v2261
      %2282 = vmatpush.msra.mxu0 %v2260
      %2283 = vmatpush.msra.mxu0 %v2259
      %2284 = vmatpush.msra.mxu0 %v2258
      %2285 = vmatmul.f32.gmra.mxu0 %v2267
      %v2286 = vpop.f32.mrf.mxu0
      %v2287 = vadd.f32 0.0, %v2286
      %2288 = vdwg.mxu0
      %v2289 = vadd.f32 %v2192, %v2287
      %v2290 = vperm.slane %v1661, 0
      %v2291 = vadd.f32 %v2289, %v2290
      %v2292 = vld [vmem:[%s1621 + $0x7] sm:$0x1]
      %v2293 = vld [vmem:[%s1621 + $0x8] sm:$0x1]
      %v2294 = vld [vmem:[%s1621 + $0x9] sm:$0x1]
      %v2295 = vld [vmem:[%s1621 + $0xa] sm:$0x1]
      %v2296 = vld [vmem:[%s1621 + $0xb] sm:$0x1]
      %v2297 = vld [vmem:[%s1621 + $0xc] sm:$0x1]
      %v2298 = vld [vmem:[%s1621 + $0xd] sm:$0x1]
      %v2299 = vsel %vm311, %v2291, 0.0
      %2300 = vadd.xlane.f32.xlu0 %v2299
      %v2301 = vpop.xlane.xlu0 %2300
      %v2302 = vmul.f32 %v2301, %v351
      %v2303 = vsub.f32 %v2291, %v2302
      %v2304 = vmul.f32 %v2303, %v2303
      %v2305 = vsel %vm311, %v2304, 0.0
      %2306 = vadd.xlane.f32.xlu0 %v2305
      %v2307 = vpop.xlane.xlu0 %2306
      %v2308 = vmul.f32 %v2307, %v351
      %v2309 = vadd.f32 %v2308, 1e-05
      %v2310 = vrsqrt.pop %v2309
      %v2311 = vmul.f32 %v2310, %v2309
      %v2312 = vmul.f32 %v2311, %v2310
      %v2313 = vmul.f32 0.5, %v2312
      %v2314 = vsub.f32 1.5, %v2313
      %v2315 = vmul.f32 %v2310, %v2314
      %vm2316 = vweird.f32 %v2309
      %vm2317 = vweird.f32 %v2310
      %vm2318 = vmor %vm2316, %vm2317
      %v2319 = vsel %vm2318, %v2310, %v2315
      %v2320 = vmul.f32 %v2303, %v2319
      %v2321 = vperm.slane %v2293, 0
      %v2322 = vmul.f32 %v2320, %v2321
      %v2323 = vperm.slane %v2294, 0
      %v2324 = vadd.f32 %v2322, %v2323
      %s2325 = scalar_lea.vmem %s4, 192
      %v2326 = vld [vmem:[%s2325] sm:$0xff]
      %v2327 = vld [vmem:[%s2325 + $0x8] sm:$0xff]
      %v2328 = vld [vmem:[%s2325 + $0x10] sm:$0xff]
      %v2329 = vld [vmem:[%s2325 + $0x18] sm:$0xff]
      %v2330 = vld [vmem:[%s2325 + $0x20] sm:$0xff]
      %v2331 = vld [vmem:[%s2325 + $0x28] sm:$0xff]
      %v2332 = vld [vmem:[%s2325 + $0x30] sm:$0xff]
      %v2333 = vld [vmem:[%s2325 + $0x38] sm:$0xff]
      %v2335 = vsel %vm311, %v2324, 0
      %2337 = vmatpush.msra.mxu0 0.0
      %2338 = vmatpush.msra.mxu0 0.0
      %2339 = vmatpush.msra.mxu0 0.0
      %2340 = vmatpush.msra.mxu0 0.0
      %2341 = vmatpush.msra.mxu0 0.0
      %2342 = vmatpush.msra.mxu0 0.0
      %2343 = vmatpush.msra.mxu0 0.0
      %2344 = vmatpush.msra.mxu0 0.0
      %2345 = vmatpush.msra.mxu0 0.0
      %2346 = vmatpush.msra.mxu0 0.0
      %2347 = vmatpush.msra.mxu0 0.0
      %2348 = vmatpush.msra.mxu0 0.0
      %2349 = vmatpush.msra.mxu0 %v2332
      %2350 = vmatpush.msra.mxu0 %v2330
      %2351 = vmatpush.msra.mxu0 %v2328
      %2352 = vmatpush.msra.mxu0 %v2326
      %2353 = vmatmul.f32.gmra.mxu0 %v2335
      %v2354 = vpop.f32.mrf.mxu0
      %v2355 = vadd.f32 0.0, %v2354
      %2356 = vdwg.mxu0
      %2357 = vmatpush.msra.mxu0 0.0
      %2358 = vmatpush.msra.mxu0 0.0
      %2359 = vmatpush.msra.mxu0 0.0
      %2360 = vmatpush.msra.mxu0 0.0
      %2361 = vmatpush.msra.mxu0 0.0
      %2362 = vmatpush.msra.mxu0 0.0
      %2363 = vmatpush.msra.mxu0 0.0
      %2364 = vmatpush.msra.mxu0 0.0
      %2365 = vmatpush.msra.mxu0 0.0
      %2366 = vmatpush.msra.mxu0 0.0
      %2367 = vmatpush.msra.mxu0 0.0
      %2368 = vmatpush.msra.mxu0 0.0
      %2369 = vmatpush.msra.mxu0 %v2333
      %2370 = vmatpush.msra.mxu0 %v2331
      %2371 = vmatpush.msra.mxu0 %v2329
      %2372 = vmatpush.msra.mxu0 %v2327
      %2373 = vmatmul.f32.gmra.mxu0 %v2335
      %v2374 = vpop.f32.mrf.mxu0
      %v2375 = vadd.f32 0.0, %v2374
      %2376 = vdwg.mxu0
      %2378 = vrot.lane.b32.xlu0 %v2355, 112
      %v2379 = vpop.permute.xlu0 %2378
      %2380 = vrot.lane.b32.xlu0 %v2355, 96
      %v2381 = vpop.permute.xlu0 %2380
      %2382 = vrot.lane.b32.xlu0 %v2355, 80
      %v2383 = vpop.permute.xlu0 %2382
      %2385 = vrot.lane.b32.xlu0 %v2375, 112
      %v2386 = vpop.permute.xlu0 %2385
      %2388 = vrot.lane.b32.xlu0 %v2375, 96
      %v2389 = vpop.permute.xlu0 %2388
      %2391 = vrot.lane.b32.xlu0 %v2375, 80
      %v2392 = vpop.permute.xlu0 %2391
      %2394 = vrot.lane.b32.xlu0 %v2355, 64
      %v2395 = vpop.permute.xlu0 %2394
      %v2396 = vsel %vm445, %v2355, 0
      %v2398 = vsel %vm445, %v2395, 0
      %2400 = vmatpush.xpose.msra.mxu0 0.0
      %2401 = vmatpush.xpose.msra.mxu0 0.0
      %2402 = vmatpush.xpose.msra.mxu0 0.0
      %2403 = vmatpush.xpose.msra.mxu0 0.0
      %2404 = vmatpush.xpose.msra.mxu0 0.0
      %2405 = vmatpush.xpose.msra.mxu0 0.0
      %2406 = vmatpush.xpose.msra.mxu0 0.0
      %2407 = vmatpush.xpose.msra.mxu0 0.0
      %2408 = vmatpush.xpose.msra.mxu0 0.0
      %2409 = vmatpush.xpose.msra.mxu0 0.0
      %2410 = vmatpush.xpose.msra.mxu0 0.0
      %2411 = vmatpush.xpose.msra.mxu0 0.0
      %2412 = vmatpush.xpose.msra.mxu0 0.0
      %2413 = vmatpush.xpose.msra.mxu0 0.0
      %2414 = vmatpush.xpose.msra.mxu0 0.0
      %2415 = vmatpush.xpose.msra.mxu0 %v2398
      %2416 = vmatmul.f32.gmra.mxu0 %v2396
      %v2417 = vpop.f32.mrf.mxu0
      %v2418 = vadd.f32 0.0, %v2417
      %2419 = vdwg.mxu0
      %2420 = vrot.lane.b32.xlu0 %v2379, 64
      %v2421 = vpop.permute.xlu0 %2420
      %v2422 = vsel %vm445, %v2379, 0
      %v2424 = vsel %vm445, %v2421, 0
      %2426 = vmatpush.xpose.msra.mxu0 0.0
      %2427 = vmatpush.xpose.msra.mxu0 0.0
      %2428 = vmatpush.xpose.msra.mxu0 0.0
      %2429 = vmatpush.xpose.msra.mxu0 0.0
      %2430 = vmatpush.xpose.msra.mxu0 0.0
      %2431 = vmatpush.xpose.msra.mxu0 0.0
      %2432 = vmatpush.xpose.msra.mxu0 0.0
      %2433 = vmatpush.xpose.msra.mxu0 0.0
      %2434 = vmatpush.xpose.msra.mxu0 0.0
      %2435 = vmatpush.xpose.msra.mxu0 0.0
      %2436 = vmatpush.xpose.msra.mxu0 0.0
      %2437 = vmatpush.xpose.msra.mxu0 0.0
      %2438 = vmatpush.xpose.msra.mxu0 0.0
      %2439 = vmatpush.xpose.msra.mxu0 0.0
      %2440 = vmatpush.xpose.msra.mxu0 0.0
      %2441 = vmatpush.xpose.msra.mxu0 %v2424
      %2442 = vmatmul.f32.gmra.mxu0 %v2422
      %v2443 = vpop.f32.mrf.mxu0
      %v2444 = vadd.f32 0.0, %v2443
      %2445 = vdwg.mxu0
      %2446 = vrot.lane.b32.xlu0 %v2381, 64
      %v2447 = vpop.permute.xlu0 %2446
      %v2448 = vsel %vm445, %v2381, 0
      %v2450 = vsel %vm445, %v2447, 0
      %2452 = vmatpush.xpose.msra.mxu0 0.0
      %2453 = vmatpush.xpose.msra.mxu0 0.0
      %2454 = vmatpush.xpose.msra.mxu0 0.0
      %2455 = vmatpush.xpose.msra.mxu0 0.0
      %2456 = vmatpush.xpose.msra.mxu0 0.0
      %2457 = vmatpush.xpose.msra.mxu0 0.0
      %2458 = vmatpush.xpose.msra.mxu0 0.0
      %2459 = vmatpush.xpose.msra.mxu0 0.0
      %2460 = vmatpush.xpose.msra.mxu0 0.0
      %2461 = vmatpush.xpose.msra.mxu0 0.0
      %2462 = vmatpush.xpose.msra.mxu0 0.0
      %2463 = vmatpush.xpose.msra.mxu0 0.0
      %2464 = vmatpush.xpose.msra.mxu0 0.0
      %2465 = vmatpush.xpose.msra.mxu0 0.0
      %2466 = vmatpush.xpose.msra.mxu0 0.0
      %2467 = vmatpush.xpose.msra.mxu0 %v2450
      %2468 = vmatmul.f32.gmra.mxu0 %v2448
      %v2469 = vpop.f32.mrf.mxu0
      %v2470 = vadd.f32 0.0, %v2469
      %2471 = vdwg.mxu0
      %2472 = vrot.lane.b32.xlu0 %v2383, 64
      %v2473 = vpop.permute.xlu0 %2472
      %v2474 = vsel %vm445, %v2383, 0
      %v2476 = vsel %vm445, %v2473, 0
      %2478 = vmatpush.xpose.msra.mxu0 0.0
      %2479 = vmatpush.xpose.msra.mxu0 0.0
      %2480 = vmatpush.xpose.msra.mxu0 0.0
      %2481 = vmatpush.xpose.msra.mxu0 0.0
      %2482 = vmatpush.xpose.msra.mxu0 0.0
      %2483 = vmatpush.xpose.msra.mxu0 0.0
      %2484 = vmatpush.xpose.msra.mxu0 0.0
      %2485 = vmatpush.xpose.msra.mxu0 0.0
      %2486 = vmatpush.xpose.msra.mxu0 0.0
      %2487 = vmatpush.xpose.msra.mxu0 0.0
      %2488 = vmatpush.xpose.msra.mxu0 0.0
      %2489 = vmatpush.xpose.msra.mxu0 0.0
      %2490 = vmatpush.xpose.msra.mxu0 0.0
      %2491 = vmatpush.xpose.msra.mxu0 0.0
      %2492 = vmatpush.xpose.msra.mxu0 0.0
      %2493 = vmatpush.xpose.msra.mxu0 %v2476
      %2494 = vmatmul.f32.gmra.mxu0 %v2474
      %v2495 = vpop.f32.mrf.mxu0
      %v2496 = vadd.f32 0.0, %v2495
      %2497 = vdwg.mxu0
      %v2498 = vmul.f32 %v2418, 0.25
      %v2499 = vmul.f32 %v2444, 0.25
      %v2500 = vmul.f32 %v2470, 0.25
      %v2501 = vmul.f32 %v2496, 0.25
      %v2502 = vmul.f32 %v2498, %v1620
      %v2503 = vmul.f32 %v2499, %v1620
      %v2504 = vmul.f32 %v2500, %v1620
      %v2505 = vmul.f32 %v2501, %v1620
      %v2506 = vmul.f32 %v2502, %v2502
      %v2507 = vmul.f32 %v2503, %v2503
      %v2508 = vmul.f32 %v2504, %v2504
      %v2509 = vmul.f32 %v2505, %v2505
      %v2510 = vsel %vm560, %v2506, 0.0
      %2511 = vadd.xlane.f32.xlu0 %v2510
      %v2512 = vpop.xlane.xlu0 %2511
      %v2513 = vsel %vm560, %v2507, 0.0
      %2514 = vadd.xlane.f32.xlu0 %v2513
      %v2515 = vpop.xlane.xlu0 %2514
      %v2516 = vsel %vm560, %v2508, 0.0
      %2517 = vadd.xlane.f32.xlu0 %v2516
      %v2518 = vpop.xlane.xlu0 %2517
      %v2519 = vsel %vm560, %v2509, 0.0
      %2520 = vadd.xlane.f32.xlu0 %v2519
      %v2521 = vpop.xlane.xlu0 %2520
      %v2522 = vmul.f32 %v2498, %v2498
      %v2523 = vmul.f32 %v2499, %v2499
      %v2524 = vmul.f32 %v2500, %v2500
      %v2525 = vmul.f32 %v2501, %v2501
      %v2526 = vsel %vm560, %v2522, 0.0
      %2527 = vadd.xlane.f32.xlu0 %v2526
      %v2528 = vpop.xlane.xlu0 %2527
      %v2529 = vsel %vm560, %v2523, 0.0
      %2530 = vadd.xlane.f32.xlu0 %v2529
      %v2531 = vpop.xlane.xlu0 %2530
      %v2532 = vsel %vm560, %v2524, 0.0
      %2533 = vadd.xlane.f32.xlu0 %v2532
      %v2534 = vpop.xlane.xlu0 %2533
      %v2535 = vsel %vm560, %v2525, 0.0
      %2536 = vadd.xlane.f32.xlu0 %v2535
      %v2537 = vpop.xlane.xlu0 %2536
      %v2538 = vrsqrt.pop %v2528
      %v2539 = vmul.f32 %v2538, %v2528
      %v2540 = vmul.f32 %v2539, %v2538
      %v2541 = vmul.f32 0.5, %v2540
      %v2542 = vsub.f32 1.5, %v2541
      %v2543 = vmul.f32 %v2538, %v2542
      %v2544 = vmul.f32 %v2528, %v2543
      %vm2545 = vcmp.eq.f32.partialorder %v2528, inf
      %v2546 = vsel %vm2545, %v2528, %v2544
      %vm2547 = vcmp.eq.f32.partialorder %v2528, 0.0
      %v2548 = vand.u32 %v2528, 2147483648
      %v2549 = vsel %vm2547, %v2548, %v2546
      %v2550 = vrsqrt.pop %v2531
      %v2551 = vmul.f32 %v2550, %v2531
      %v2552 = vmul.f32 %v2551, %v2550
      %v2553 = vmul.f32 0.5, %v2552
      %v2554 = vsub.f32 1.5, %v2553
      %v2555 = vmul.f32 %v2550, %v2554
      %v2556 = vmul.f32 %v2531, %v2555
      %vm2557 = vcmp.eq.f32.partialorder %v2531, inf
      %v2558 = vsel %vm2557, %v2531, %v2556
      %vm2559 = vcmp.eq.f32.partialorder %v2531, 0.0
      %v2560 = vand.u32 %v2531, 2147483648
      %v2561 = vsel %vm2559, %v2560, %v2558
      %v2562 = vrsqrt.pop %v2534
      %v2563 = vmul.f32 %v2562, %v2534
      %v2564 = vmul.f32 %v2563, %v2562
      %v2565 = vmul.f32 0.5, %v2564
      %v2566 = vsub.f32 1.5, %v2565
      %v2567 = vmul.f32 %v2562, %v2566
      %v2568 = vmul.f32 %v2534, %v2567
      %vm2569 = vcmp.eq.f32.partialorder %v2534, inf
      %v2570 = vsel %vm2569, %v2534, %v2568
      %vm2571 = vcmp.eq.f32.partialorder %v2534, 0.0
      %v2572 = vand.u32 %v2534, 2147483648
      %v2573 = vsel %vm2571, %v2572, %v2570
      %v2574 = vrsqrt.pop %v2537
      %v2575 = vmul.f32 %v2574, %v2537
      %v2576 = vmul.f32 %v2575, %v2574
      %v2577 = vmul.f32 0.5, %v2576
      %v2578 = vsub.f32 1.5, %v2577
      %v2579 = vmul.f32 %v2574, %v2578
      %v2580 = vmul.f32 %v2537, %v2579
      %vm2581 = vcmp.eq.f32.partialorder %v2537, inf
      %v2582 = vsel %vm2581, %v2537, %v2580
      %vm2583 = vcmp.eq.f32.partialorder %v2537, 0.0
      %v2584 = vand.u32 %v2537, 2147483648
      %v2585 = vsel %vm2583, %v2584, %v2582
      %v2586 = vmax.f32 %v2512, 1e-24
      %v2587 = vmax.f32 %v2515, 1e-24
      %v2588 = vmax.f32 %v2518, 1e-24
      %v2589 = vmax.f32 %v2521, 1e-24
      %v2590 = vrsqrt.pop %v2586
      %v2591 = vmul.f32 %v2590, %v2586
      %v2592 = vmul.f32 %v2591, %v2590
      %v2593 = vmul.f32 0.5, %v2592
      %v2594 = vsub.f32 1.5, %v2593
      %v2595 = vmul.f32 %v2590, %v2594
      %vm2596 = vweird.f32 %v2586
      %vm2597 = vweird.f32 %v2590
      %vm2598 = vmor %vm2596, %vm2597
      %v2599 = vsel %vm2598, %v2590, %v2595
      %v2600 = vrsqrt.pop %v2587
      %v2601 = vmul.f32 %v2600, %v2587
      %v2602 = vmul.f32 %v2601, %v2600
      %v2603 = vmul.f32 0.5, %v2602
      %v2604 = vsub.f32 1.5, %v2603
      %v2605 = vmul.f32 %v2600, %v2604
      %vm2606 = vweird.f32 %v2587
      %vm2607 = vweird.f32 %v2600
      %vm2608 = vmor %vm2606, %vm2607
      %v2609 = vsel %vm2608, %v2600, %v2605
      %v2610 = vrsqrt.pop %v2588
      %v2611 = vmul.f32 %v2610, %v2588
      %v2612 = vmul.f32 %v2611, %v2610
      %v2613 = vmul.f32 0.5, %v2612
      %v2614 = vsub.f32 1.5, %v2613
      %v2615 = vmul.f32 %v2610, %v2614
      %vm2616 = vweird.f32 %v2588
      %vm2617 = vweird.f32 %v2610
      %vm2618 = vmor %vm2616, %vm2617
      %v2619 = vsel %vm2618, %v2610, %v2615
      %v2620 = vrsqrt.pop %v2589
      %v2621 = vmul.f32 %v2620, %v2589
      %v2622 = vmul.f32 %v2621, %v2620
      %v2623 = vmul.f32 0.5, %v2622
      %v2624 = vsub.f32 1.5, %v2623
      %v2625 = vmul.f32 %v2620, %v2624
      %vm2626 = vweird.f32 %v2589
      %vm2627 = vweird.f32 %v2620
      %vm2628 = vmor %vm2626, %vm2627
      %v2629 = vsel %vm2628, %v2620, %v2625
      %v2630 = vmul.f32 %v2549, %v2599
      %v2631 = vmul.f32 %v2561, %v2609
      %v2632 = vmul.f32 %v2573, %v2619
      %v2633 = vmul.f32 %v2585, %v2629
      %v2634 = vmul.f32 %v2502, %v2630
      %v2635 = vmul.f32 %v2503, %v2631
      %v2636 = vmul.f32 %v2504, %v2632
      %v2637 = vmul.f32 %v2505, %v2633
      %v2638 = vadd.f32 %v2498, %v2634
      %v2639 = vadd.f32 %v2499, %v2635
      %v2640 = vadd.f32 %v2500, %v2636
      %v2641 = vadd.f32 %v2501, %v2637
      %v2642 = vsel %vm560, %v2638, -inf
      %2643 = vmax.xlane.f32.xlu0 %v2642
      %v2644 = vpop.xlane.xlu0 %2643
      %v2645 = vsel %vm560, %v2639, -inf
      %2646 = vmax.xlane.f32.xlu0 %v2645
      %v2647 = vpop.xlane.xlu0 %2646
      %v2648 = vsel %vm560, %v2640, -inf
      %2649 = vmax.xlane.f32.xlu0 %v2648
      %v2650 = vpop.xlane.xlu0 %2649
      %v2651 = vsel %vm560, %v2641, -inf
      %2652 = vmax.xlane.f32.xlu0 %v2651
      %v2653 = vpop.xlane.xlu0 %2652
      %v2654 = vsub.f32 %v2638, %v2644
      %v2655 = vsub.f32 %v2639, %v2647
      %v2656 = vsub.f32 %v2640, %v2650
      %v2657 = vsub.f32 %v2641, %v2653
      %v2658 = vmul.f32 %v2654, 1.442695
      %v2659 = vpow.pop %v2658
      %v2660 = vmul.f32 %v2655, 1.442695
      %v2661 = vpow.pop %v2660
      %v2662 = vmul.f32 %v2656, 1.442695
      %v2663 = vpow.pop %v2662
      %v2664 = vmul.f32 %v2657, 1.442695
      %v2665 = vpow.pop %v2664
      %v2666 = vsel %vm560, %v2659, 0.0
      %2667 = vadd.xlane.f32.xlu0 %v2666
      %v2668 = vpop.xlane.xlu0 %2667
      %v2669 = vsel %vm560, %v2661, 0.0
      %2670 = vadd.xlane.f32.xlu0 %v2669
      %v2671 = vpop.xlane.xlu0 %2670
      %v2672 = vsel %vm560, %v2663, 0.0
      %2673 = vadd.xlane.f32.xlu0 %v2672
      %v2674 = vpop.xlane.xlu0 %2673
      %v2675 = vsel %vm560, %v2665, 0.0
      %2676 = vadd.xlane.f32.xlu0 %v2675
      %v2677 = vpop.xlane.xlu0 %2676
      %v2678 = vrcp.pop %v2668
      %v2679 = vrcp.pop %v2671
      %v2680 = vrcp.pop %v2674
      %v2681 = vrcp.pop %v2677
      %v2682 = vmul.f32 %v2659, %v2678
      %v2683 = vmul.f32 %v2661, %v2679
      %v2684 = vmul.f32 %v2663, %v2680
      %v2685 = vmul.f32 %v2665, %v2681
      %v2687 = vsel %vm560, %v2682, 0
      %2689 = vmatpush.msra.mxu0 0.0
      %2690 = vmatpush.msra.mxu0 0.0
      %2691 = vmatpush.msra.mxu0 0.0
      %2692 = vmatpush.msra.mxu0 0.0
      %2693 = vmatpush.msra.mxu0 0.0
      %2694 = vmatpush.msra.mxu0 0.0
      %2695 = vmatpush.msra.mxu0 0.0
      %2696 = vmatpush.msra.mxu0 0.0
      %2697 = vmatpush.msra.mxu0 0.0
      %2698 = vmatpush.msra.mxu0 0.0
      %2699 = vmatpush.msra.mxu0 0.0
      %2700 = vmatpush.msra.mxu0 0.0
      %2701 = vmatpush.msra.mxu0 0.0
      %2702 = vmatpush.msra.mxu0 0.0
      %2703 = vmatpush.msra.mxu0 0.0
      %2704 = vmatpush.msra.mxu0 %v2375
      %2705 = vmatmul.f32.gmra.mxu0 %v2687
      %v2706 = vpop.f32.mrf.mxu0
      %v2707 = vadd.f32 0.0, %v2706
      %2708 = vdwg.mxu0
      %v2710 = vsel %vm560, %v2683, 0
      %2712 = vmatpush.msra.mxu0 0.0
      %2713 = vmatpush.msra.mxu0 0.0
      %2714 = vmatpush.msra.mxu0 0.0
      %2715 = vmatpush.msra.mxu0 0.0
      %2716 = vmatpush.msra.mxu0 0.0
      %2717 = vmatpush.msra.mxu0 0.0
      %2718 = vmatpush.msra.mxu0 0.0
      %2719 = vmatpush.msra.mxu0 0.0
      %2720 = vmatpush.msra.mxu0 0.0
      %2721 = vmatpush.msra.mxu0 0.0
      %2722 = vmatpush.msra.mxu0 0.0
      %2723 = vmatpush.msra.mxu0 0.0
      %2724 = vmatpush.msra.mxu0 0.0
      %2725 = vmatpush.msra.mxu0 0.0
      %2726 = vmatpush.msra.mxu0 0.0
      %2727 = vmatpush.msra.mxu0 %v2386
      %2728 = vmatmul.f32.gmra.mxu0 %v2710
      %v2729 = vpop.f32.mrf.mxu0
      %v2730 = vadd.f32 0.0, %v2729
      %2731 = vdwg.mxu0
      %v2733 = vsel %vm560, %v2684, 0
      %2735 = vmatpush.msra.mxu0 0.0
      %2736 = vmatpush.msra.mxu0 0.0
      %2737 = vmatpush.msra.mxu0 0.0
      %2738 = vmatpush.msra.mxu0 0.0
      %2739 = vmatpush.msra.mxu0 0.0
      %2740 = vmatpush.msra.mxu0 0.0
      %2741 = vmatpush.msra.mxu0 0.0
      %2742 = vmatpush.msra.mxu0 0.0
      %2743 = vmatpush.msra.mxu0 0.0
      %2744 = vmatpush.msra.mxu0 0.0
      %2745 = vmatpush.msra.mxu0 0.0
      %2746 = vmatpush.msra.mxu0 0.0
      %2747 = vmatpush.msra.mxu0 0.0
      %2748 = vmatpush.msra.mxu0 0.0
      %2749 = vmatpush.msra.mxu0 0.0
      %2750 = vmatpush.msra.mxu0 %v2389
      %2751 = vmatmul.f32.gmra.mxu0 %v2733
      %v2752 = vpop.f32.mrf.mxu0
      %v2753 = vadd.f32 0.0, %v2752
      %2754 = vdwg.mxu0
      %v2756 = vsel %vm560, %v2685, 0
      %2758 = vmatpush.msra.mxu0 0.0
      %2759 = vmatpush.msra.mxu0 0.0
      %2760 = vmatpush.msra.mxu0 0.0
      %2761 = vmatpush.msra.mxu0 0.0
      %2762 = vmatpush.msra.mxu0 0.0
      %2763 = vmatpush.msra.mxu0 0.0
      %2764 = vmatpush.msra.mxu0 0.0
      %2765 = vmatpush.msra.mxu0 0.0
      %2766 = vmatpush.msra.mxu0 0.0
      %2767 = vmatpush.msra.mxu0 0.0
      %2768 = vmatpush.msra.mxu0 0.0
      %2769 = vmatpush.msra.mxu0 0.0
      %2770 = vmatpush.msra.mxu0 0.0
      %2771 = vmatpush.msra.mxu0 0.0
      %2772 = vmatpush.msra.mxu0 0.0
      %2773 = vmatpush.msra.mxu0 %v2392
      %2774 = vmatmul.f32.gmra.mxu0 %v2756
      %v2775 = vpop.f32.mrf.mxu0
      %v2776 = vadd.f32 0.0, %v2775
      %2777 = vdwg.mxu0
      %2779 = vrot.lane.b32.xlu0 %v2730, 16
      %v2780 = vpop.permute.xlu0 %2779
      %2783 = vrot.lane.b32.xlu0 %v2753, 32
      %v2784 = vpop.permute.xlu0 %2783
      %2787 = vrot.lane.b32.xlu0 %v2776, 48
      %v2788 = vpop.permute.xlu0 %2787
      %v2790 = vsel %vm445, %v2707, %v2780
      %v2791 = vsel %vm311, %v2790, %v2784
      %v2792 = vsel %vm843, %v2791, %v2788
      %v2793 = vmul.f32 %v2792, %v303
      %s2794 = scalar_lea.vmem %s5, 192
      %v2795 = vld [vmem:[%s2794] sm:$0xff]
      %v2796 = vld [vmem:[%s2794 + $0x8] sm:$0xff]
      %v2797 = vld [vmem:[%s2794 + $0x10] sm:$0xff]
      %v2798 = vld [vmem:[%s2794 + $0x18] sm:$0xff]
      %v2799 = vld [vmem:[%s2794 + $0x20] sm:$0xff]
      %v2800 = vld [vmem:[%s2794 + $0x28] sm:$0xff]
      %v2801 = vld [vmem:[%s2794 + $0x30] sm:$0xff]
      %v2802 = vld [vmem:[%s2794 + $0x38] sm:$0xff]
      %v2804 = vsel %vm854, %v2793, 0
      %2806 = vmatpush.msra.mxu0 0.0
      %2807 = vmatpush.msra.mxu0 0.0
      %2808 = vmatpush.msra.mxu0 0.0
      %2809 = vmatpush.msra.mxu0 0.0
      %2810 = vmatpush.msra.mxu0 0.0
      %2811 = vmatpush.msra.mxu0 0.0
      %2812 = vmatpush.msra.mxu0 0.0
      %2813 = vmatpush.msra.mxu0 0.0
      %2814 = vmatpush.msra.mxu0 %v2802
      %2815 = vmatpush.msra.mxu0 %v2801
      %2816 = vmatpush.msra.mxu0 %v2800
      %2817 = vmatpush.msra.mxu0 %v2799
      %2818 = vmatpush.msra.mxu0 %v2798
      %2819 = vmatpush.msra.mxu0 %v2797
      %2820 = vmatpush.msra.mxu0 %v2796
      %2821 = vmatpush.msra.mxu0 %v2795
      %2822 = vmatmul.f32.gmra.mxu0 %v2804
      %v2823 = vpop.f32.mrf.mxu0
      %v2824 = vadd.f32 0.0, %v2823
      %2825 = vdwg.mxu0
      %v2826 = vadd.f32 %v2291, %v2824
      %v2827 = vperm.slane %v2292, 0
      %v2828 = vadd.f32 %v2826, %v2827
      %v2829 = vsel %vm311, %v2828, 0.0
      %2830 = vadd.xlane.f32.xlu0 %v2829
      %v2831 = vpop.xlane.xlu0 %2830
      %v2832 = vmul.f32 %v2831, %v351
      %v2833 = vsub.f32 %v2828, %v2832
      %v2834 = vmul.f32 %v2833, %v2833
      %v2835 = vsel %vm311, %v2834, 0.0
      %2836 = vadd.xlane.f32.xlu0 %v2835
      %v2837 = vpop.xlane.xlu0 %2836
      %v2838 = vmul.f32 %v2837, %v351
      %v2839 = vadd.f32 %v2838, 1e-05
      %v2840 = vrsqrt.pop %v2839
      %v2841 = vmul.f32 %v2840, %v2839
      %v2842 = vmul.f32 %v2841, %v2840
      %v2843 = vmul.f32 0.5, %v2842
      %v2844 = vsub.f32 1.5, %v2843
      %v2845 = vmul.f32 %v2840, %v2844
      %vm2846 = vweird.f32 %v2839
      %vm2847 = vweird.f32 %v2840
      %vm2848 = vmor %vm2846, %vm2847
      %v2849 = vsel %vm2848, %v2840, %v2845
      %v2850 = vmul.f32 %v2833, %v2849
      %v2851 = vperm.slane %v2295, 0
      %v2852 = vmul.f32 %v2850, %v2851
      %v2853 = vperm.slane %v2296, 0
      %v2854 = vadd.f32 %v2852, %v2853
      %s2855 = scalar_lea.vmem %s6, 96
      %v2856 = vld [vmem:[%s2855] sm:$0xff]
      %v2857 = vld [vmem:[%s2855 + $0x8] sm:$0xff]
      %v2858 = vld [vmem:[%s2855 + $0x10] sm:$0xff]
      %v2859 = vld [vmem:[%s2855 + $0x18] sm:$0xff]
      %v2860 = vperm.slane %v2298, 0
      %v2862 = vsel %vm311, %v2854, 0
      %2864 = vmatpush.msra.mxu0 0.0
      %2865 = vmatpush.msra.mxu0 0.0
      %2866 = vmatpush.msra.mxu0 0.0
      %2867 = vmatpush.msra.mxu0 0.0
      %2868 = vmatpush.msra.mxu0 0.0
      %2869 = vmatpush.msra.mxu0 0.0
      %2870 = vmatpush.msra.mxu0 0.0
      %2871 = vmatpush.msra.mxu0 0.0
      %2872 = vmatpush.msra.mxu0 0.0
      %2873 = vmatpush.msra.mxu0 0.0
      %2874 = vmatpush.msra.mxu0 0.0
      %2875 = vmatpush.msra.mxu0 0.0
      %2876 = vmatpush.msra.mxu0 %v2859
      %2877 = vmatpush.msra.mxu0 %v2858
      %2878 = vmatpush.msra.mxu0 %v2857
      %2879 = vmatpush.msra.mxu0 %v2856
      %2880 = vmatmul.f32.gmra.mxu0 %v2862
      %v2881 = vpop.f32.mrf.mxu0
      %v2882 = vadd.f32 %v2860, %v2881
      %2883 = vdwg.mxu0
      %v2884 = vmul.f32 %v2882, %v2882
      %v2885 = vmul.f32 %v2882, %v2884
      %v2886 = vmul.f32 %v2885, 0.044715
      %v2887 = vadd.f32 %v2882, %v2886
      %v2888 = vmul.f32 %v2887, 0.7978846
      %v2889 = vtanh.pop %v2888
      %v2890 = vadd.f32 %v2889, 1.0
      %v2891 = vmul.f32 %v2890, 0.5
      %v2892 = vmul.f32 %v2882, %v2891
      %s2893 = scalar_lea.vmem %s7, 192
      %v2894 = vld [vmem:[%s2893] sm:$0xff]
      %v2895 = vld [vmem:[%s2893 + $0x8] sm:$0xff]
      %v2896 = vld [vmem:[%s2893 + $0x10] sm:$0xff]
      %v2897 = vld [vmem:[%s2893 + $0x18] sm:$0xff]
      %v2898 = vld [vmem:[%s2893 + $0x20] sm:$0xff]
      %v2899 = vld [vmem:[%s2893 + $0x28] sm:$0xff]
      %v2900 = vld [vmem:[%s2893 + $0x30] sm:$0xff]
      %v2901 = vld [vmem:[%s2893 + $0x38] sm:$0xff]
      %v2903 = vsel %vm854, %v2892, 0
      %2905 = vmatpush.msra.mxu0 0.0
      %2906 = vmatpush.msra.mxu0 0.0
      %2907 = vmatpush.msra.mxu0 0.0
      %2908 = vmatpush.msra.mxu0 0.0
      %2909 = vmatpush.msra.mxu0 0.0
      %2910 = vmatpush.msra.mxu0 0.0
      %2911 = vmatpush.msra.mxu0 0.0
      %2912 = vmatpush.msra.mxu0 0.0
      %2913 = vmatpush.msra.mxu0 %v2901
      %2914 = vmatpush.msra.mxu0 %v2900
      %2915 = vmatpush.msra.mxu0 %v2899
      %2916 = vmatpush.msra.mxu0 %v2898
      %2917 = vmatpush.msra.mxu0 %v2897
      %2918 = vmatpush.msra.mxu0 %v2896
      %2919 = vmatpush.msra.mxu0 %v2895
      %2920 = vmatpush.msra.mxu0 %v2894
      %2921 = vmatmul.f32.gmra.mxu0 %v2903
      %v2922 = vpop.f32.mrf.mxu0
      %v2923 = vadd.f32 0.0, %v2922
      %2924 = vdwg.mxu0
      %v2925 = vadd.f32 %v2828, %v2923
      %v2926 = vperm.slane %v2297, 0
      %v2927 = vadd.f32 %v2925, %v2926
      %2929 = vrot.lane.b32.xlu0 %v2927, 64
      %v2930 = vpop.permute.xlu0 %2929
      %v2932 = vsel %vm854, %v1618, %v2930
      %s2933 = scalar_lea.vmem %s1, 16
      %v2934 = vld [vmem:[%s2933] sm:$0xff]
      %s2935 = scalar_lea.vmem %s3, 32
      %v2936 = vld [vmem:[%s2935 + $0xe] sm:$0x1]
      %s2937 = scalar_lea.vmem %s2, 192
      %v2938 = vld [vmem:[%s2937] sm:$0xff]
      %v2939 = vld [vmem:[%s2937 + $0x8] sm:$0xff]
      %v2940 = vld [vmem:[%s2937 + $0x10] sm:$0xff]
      %v2941 = vld [vmem:[%s2937 + $0x18] sm:$0xff]
      %v2942 = vld [vmem:[%s2937 + $0x20] sm:$0xff]
      %v2943 = vld [vmem:[%s2937 + $0x28] sm:$0xff]
      %v2944 = vld [vmem:[%s2937 + $0x30] sm:$0xff]
      %v2945 = vld [vmem:[%s2937 + $0x38] sm:$0xff]
      %v2946 = vld [vmem:[%s2937 + $0x40] sm:$0xff]
      %v2947 = vld [vmem:[%s2937 + $0x48] sm:$0xff]
      %v2948 = vld [vmem:[%s2937 + $0x50] sm:$0xff]
      %v2949 = vld [vmem:[%s2937 + $0x58] sm:$0xff]
      %v2950 = vperm.slane %v2936, 0
      %vm2951 = vcmask 785408
      %v2953 = vsel %vm2951, %v2932, 0
      %2955 = vmatpush.msra.mxu0 0.0
      %2956 = vmatpush.msra.mxu0 0.0
      %2957 = vmatpush.msra.mxu0 0.0
      %2958 = vmatpush.msra.mxu0 0.0
      %2959 = vmatpush.msra.mxu0 %v2949
      %2960 = vmatpush.msra.mxu0 %v2948
      %2961 = vmatpush.msra.mxu0 %v2947
      %2962 = vmatpush.msra.mxu0 %v2946
      %2963 = vmatpush.msra.mxu0 %v2945
      %2964 = vmatpush.msra.mxu0 %v2944
      %2965 = vmatpush.msra.mxu0 %v2943
      %2966 = vmatpush.msra.mxu0 %v2942
      %2967 = vmatpush.msra.mxu0 %v2941
      %2968 = vmatpush.msra.mxu0 %v2940
      %2969 = vmatpush.msra.mxu0 %v2939
      %2970 = vmatpush.msra.mxu0 %v2938
      %2971 = vmatmul.f32.gmra.mxu0 %v2953
      %v2972 = vpop.f32.mrf.mxu0
      %v2973 = vadd.f32 %v2950, %v2972
      %2974 = vdwg.mxu0
      %v2975 = vld [vmem:[%s2935] sm:$0x1]
      %v2976 = vld [vmem:[%s2935 + $0x1] sm:$0x1]
      %v2977 = vld [vmem:[%s2935 + $0x2] sm:$0x1]
      %v2978 = vld [vmem:[%s2935 + $0x3] sm:$0x1]
      %v2979 = vld [vmem:[%s2935 + $0x4] sm:$0x1]
      %v2980 = vld [vmem:[%s2935 + $0x5] sm:$0x1]
      %v2981 = vld [vmem:[%s2935 + $0x6] sm:$0x1]
      %v2982 = vsel %vm311, %v2973, 0.0
      %2983 = vadd.xlane.f32.xlu0 %v2982
      %v2984 = vpop.xlane.xlu0 %2983
      %v2985 = vmul.f32 %v2984, %v351
      %v2986 = vsub.f32 %v2973, %v2985
      %v2987 = vmul.f32 %v2986, %v2986
      %v2988 = vsel %vm311, %v2987, 0.0
      %2989 = vadd.xlane.f32.xlu0 %v2988
      %v2990 = vpop.xlane.xlu0 %2989
      %v2991 = vmul.f32 %v2990, %v351
      %v2992 = vadd.f32 %v2991, 1e-05
      %v2993 = vrsqrt.pop %v2992
      %v2994 = vmul.f32 %v2993, %v2992
      %v2995 = vmul.f32 %v2994, %v2993
      %v2996 = vmul.f32 0.5, %v2995
      %v2997 = vsub.f32 1.5, %v2996
      %v2998 = vmul.f32 %v2993, %v2997
      %vm2999 = vweird.f32 %v2992
      %vm3000 = vweird.f32 %v2993
      %vm3001 = vmor %vm2999, %vm3000
      %v3002 = vsel %vm3001, %v2993, %v2998
      %v3003 = vmul.f32 %v2986, %v3002
      %v3004 = vperm.slane %v2976, 0
      %v3005 = vmul.f32 %v3003, %v3004
      %v3006 = vperm.slane %v2977, 0
      %v3007 = vadd.f32 %v3005, %v3006
      %s3008 = scalar_lea.vmem %s4, 256
      %v3009 = vld [vmem:[%s3008] sm:$0xff]
      %v3010 = vld [vmem:[%s3008 + $0x8] sm:$0xff]
      %v3011 = vld [vmem:[%s3008 + $0x10] sm:$0xff]
      %v3012 = vld [vmem:[%s3008 + $0x18] sm:$0xff]
      %v3013 = vld [vmem:[%s3008 + $0x20] sm:$0xff]
      %v3014 = vld [vmem:[%s3008 + $0x28] sm:$0xff]
      %v3015 = vld [vmem:[%s3008 + $0x30] sm:$0xff]
      %v3016 = vld [vmem:[%s3008 + $0x38] sm:$0xff]
      %v3018 = vsel %vm311, %v3007, 0
      %3020 = vmatpush.msra.mxu0 0.0
      %3021 = vmatpush.msra.mxu0 0.0
      %3022 = vmatpush.msra.mxu0 0.0
      %3023 = vmatpush.msra.mxu0 0.0
      %3024 = vmatpush.msra.mxu0 0.0
      %3025 = vmatpush.msra.mxu0 0.0
      %3026 = vmatpush.msra.mxu0 0.0
      %3027 = vmatpush.msra.mxu0 0.0
      %3028 = vmatpush.msra.mxu0 0.0
      %3029 = vmatpush.msra.mxu0 0.0
      %3030 = vmatpush.msra.mxu0 0.0
      %3031 = vmatpush.msra.mxu0 0.0
      %3032 = vmatpush.msra.mxu0 %v3015
      %3033 = vmatpush.msra.mxu0 %v3013
      %3034 = vmatpush.msra.mxu0 %v3011
      %3035 = vmatpush.msra.mxu0 %v3009
      %3036 = vmatmul.f32.gmra.mxu0 %v3018
      %v3037 = vpop.f32.mrf.mxu0
      %v3038 = vadd.f32 0.0, %v3037
      %3039 = vdwg.mxu0
      %3040 = vmatpush.msra.mxu0 0.0
      %3041 = vmatpush.msra.mxu0 0.0
      %3042 = vmatpush.msra.mxu0 0.0
      %3043 = vmatpush.msra.mxu0 0.0
      %3044 = vmatpush.msra.mxu0 0.0
      %3045 = vmatpush.msra.mxu0 0.0
      %3046 = vmatpush.msra.mxu0 0.0
      %3047 = vmatpush.msra.mxu0 0.0
      %3048 = vmatpush.msra.mxu0 0.0
      %3049 = vmatpush.msra.mxu0 0.0
      %3050 = vmatpush.msra.mxu0 0.0
      %3051 = vmatpush.msra.mxu0 0.0
      %3052 = vmatpush.msra.mxu0 %v3016
      %3053 = vmatpush.msra.mxu0 %v3014
      %3054 = vmatpush.msra.mxu0 %v3012
      %3055 = vmatpush.msra.mxu0 %v3010
      %3056 = vmatmul.f32.gmra.mxu0 %v3018
      %v3057 = vpop.f32.mrf.mxu0
      %v3058 = vadd.f32 0.0, %v3057
      %3059 = vdwg.mxu0
      %3061 = vrot.lane.b32.xlu0 %v3038, 112
      %v3062 = vpop.permute.xlu0 %3061
      %3063 = vrot.lane.b32.xlu0 %v3038, 96
      %v3064 = vpop.permute.xlu0 %3063
      %3065 = vrot.lane.b32.xlu0 %v3038, 80
      %v3066 = vpop.permute.xlu0 %3065
      %3068 = vrot.lane.b32.xlu0 %v3058, 112
      %v3069 = vpop.permute.xlu0 %3068
      %3071 = vrot.lane.b32.xlu0 %v3058, 96
      %v3072 = vpop.permute.xlu0 %3071
      %3074 = vrot.lane.b32.xlu0 %v3058, 80
      %v3075 = vpop.permute.xlu0 %3074
      %3077 = vrot.lane.b32.xlu0 %v3038, 64
      %v3078 = vpop.permute.xlu0 %3077
      %v3079 = vsel %vm445, %v3038, 0
      %v3081 = vsel %vm445, %v3078, 0
      %3083 = vmatpush.xpose.msra.mxu0 0.0
      %3084 = vmatpush.xpose.msra.mxu0 0.0
      %3085 = vmatpush.xpose.msra.mxu0 0.0
      %3086 = vmatpush.xpose.msra.mxu0 0.0
      %3087 = vmatpush.xpose.msra.mxu0 0.0
      %3088 = vmatpush.xpose.msra.mxu0 0.0
      %3089 = vmatpush.xpose.msra.mxu0 0.0
      %3090 = vmatpush.xpose.msra.mxu0 0.0
      %3091 = vmatpush.xpose.msra.mxu0 0.0
      %3092 = vmatpush.xpose.msra.mxu0 0.0
      %3093 = vmatpush.xpose.msra.mxu0 0.0
      %3094 = vmatpush.xpose.msra.mxu0 0.0
      %3095 = vmatpush.xpose.msra.mxu0 0.0
      %3096 = vmatpush.xpose.msra.mxu0 0.0
      %3097 = vmatpush.xpose.msra.mxu0 0.0
      %3098 = vmatpush.xpose.msra.mxu0 %v3081
      %3099 = vmatmul.f32.gmra.mxu0 %v3079
      %v3100 = vpop.f32.mrf.mxu0
      %v3101 = vadd.f32 0.0, %v3100
      %3102 = vdwg.mxu0
      %3103 = vrot.lane.b32.xlu0 %v3062, 64
      %v3104 = vpop.permute.xlu0 %3103
      %v3105 = vsel %vm445, %v3062, 0
      %v3107 = vsel %vm445, %v3104, 0
      %3109 = vmatpush.xpose.msra.mxu0 0.0
      %3110 = vmatpush.xpose.msra.mxu0 0.0
      %3111 = vmatpush.xpose.msra.mxu0 0.0
      %3112 = vmatpush.xpose.msra.mxu0 0.0
      %3113 = vmatpush.xpose.msra.mxu0 0.0
      %3114 = vmatpush.xpose.msra.mxu0 0.0
      %3115 = vmatpush.xpose.msra.mxu0 0.0
      %3116 = vmatpush.xpose.msra.mxu0 0.0
      %3117 = vmatpush.xpose.msra.mxu0 0.0
      %3118 = vmatpush.xpose.msra.mxu0 0.0
      %3119 = vmatpush.xpose.msra.mxu0 0.0
      %3120 = vmatpush.xpose.msra.mxu0 0.0
      %3121 = vmatpush.xpose.msra.mxu0 0.0
      %3122 = vmatpush.xpose.msra.mxu0 0.0
      %3123 = vmatpush.xpose.msra.mxu0 0.0
      %3124 = vmatpush.xpose.msra.mxu0 %v3107
      %3125 = vmatmul.f32.gmra.mxu0 %v3105
      %v3126 = vpop.f32.mrf.mxu0
      %v3127 = vadd.f32 0.0, %v3126
      %3128 = vdwg.mxu0
      %3129 = vrot.lane.b32.xlu0 %v3064, 64
      %v3130 = vpop.permute.xlu0 %3129
      %v3131 = vsel %vm445, %v3064, 0
      %v3133 = vsel %vm445, %v3130, 0
      %3135 = vmatpush.xpose.msra.mxu0 0.0
      %3136 = vmatpush.xpose.msra.mxu0 0.0
      %3137 = vmatpush.xpose.msra.mxu0 0.0
      %3138 = vmatpush.xpose.msra.mxu0 0.0
      %3139 = vmatpush.xpose.msra.mxu0 0.0
      %3140 = vmatpush.xpose.msra.mxu0 0.0
      %3141 = vmatpush.xpose.msra.mxu0 0.0
      %3142 = vmatpush.xpose.msra.mxu0 0.0
      %3143 = vmatpush.xpose.msra.mxu0 0.0
      %3144 = vmatpush.xpose.msra.mxu0 0.0
      %3145 = vmatpush.xpose.msra.mxu0 0.0
      %3146 = vmatpush.xpose.msra.mxu0 0.0
      %3147 = vmatpush.xpose.msra.mxu0 0.0
      %3148 = vmatpush.xpose.msra.mxu0 0.0
      %3149 = vmatpush.xpose.msra.mxu0 0.0
      %3150 = vmatpush.xpose.msra.mxu0 %v3133
      %3151 = vmatmul.f32.gmra.mxu0 %v3131
      %v3152 = vpop.f32.mrf.mxu0
      %v3153 = vadd.f32 0.0, %v3152
      %3154 = vdwg.mxu0
      %3155 = vrot.lane.b32.xlu0 %v3066, 64
      %v3156 = vpop.permute.xlu0 %3155
      %v3157 = vsel %vm445, %v3066, 0
      %v3159 = vsel %vm445, %v3156, 0
      %3161 = vmatpush.xpose.msra.mxu0 0.0
      %3162 = vmatpush.xpose.msra.mxu0 0.0
      %3163 = vmatpush.xpose.msra.mxu0 0.0
      %3164 = vmatpush.xpose.msra.mxu0 0.0
      %3165 = vmatpush.xpose.msra.mxu0 0.0
      %3166 = vmatpush.xpose.msra.mxu0 0.0
      %3167 = vmatpush.xpose.msra.mxu0 0.0
      %3168 = vmatpush.xpose.msra.mxu0 0.0
      %3169 = vmatpush.xpose.msra.mxu0 0.0
      %3170 = vmatpush.xpose.msra.mxu0 0.0
      %3171 = vmatpush.xpose.msra.mxu0 0.0
      %3172 = vmatpush.xpose.msra.mxu0 0.0
      %3173 = vmatpush.xpose.msra.mxu0 0.0
      %3174 = vmatpush.xpose.msra.mxu0 0.0
      %3175 = vmatpush.xpose.msra.mxu0 0.0
      %3176 = vmatpush.xpose.msra.mxu0 %v3159
      %3177 = vmatmul.f32.gmra.mxu0 %v3157
      %v3178 = vpop.f32.mrf.mxu0
      %v3179 = vadd.f32 0.0, %v3178
      %3180 = vdwg.mxu0
      %v3181 = vmul.f32 %v3101, 0.25
      %v3182 = vmul.f32 %v3127, 0.25
      %v3183 = vmul.f32 %v3153, 0.25
      %v3184 = vmul.f32 %v3179, 0.25
      %v3185 = vmul.f32 %v3181, %v2934
      %v3186 = vmul.f32 %v3182, %v2934
      %v3187 = vmul.f32 %v3183, %v2934
      %v3188 = vmul.f32 %v3184, %v2934
      %v3189 = vmul.f32 %v3185, %v3185
      %v3190 = vmul.f32 %v3186, %v3186
      %v3191 = vmul.f32 %v3187, %v3187
      %v3192 = vmul.f32 %v3188, %v3188
      %v3193 = vsel %vm560, %v3189, 0.0
      %3194 = vadd.xlane.f32.xlu0 %v3193
      %v3195 = vpop.xlane.xlu0 %3194
      %v3196 = vsel %vm560, %v3190, 0.0
      %3197 = vadd.xlane.f32.xlu0 %v3196
      %v3198 = vpop.xlane.xlu0 %3197
      %v3199 = vsel %vm560, %v3191, 0.0
      %3200 = vadd.xlane.f32.xlu0 %v3199
      %v3201 = vpop.xlane.xlu0 %3200
      %v3202 = vsel %vm560, %v3192, 0.0
      %3203 = vadd.xlane.f32.xlu0 %v3202
      %v3204 = vpop.xlane.xlu0 %3203
      %v3205 = vmul.f32 %v3181, %v3181
      %v3206 = vmul.f32 %v3182, %v3182
      %v3207 = vmul.f32 %v3183, %v3183
      %v3208 = vmul.f32 %v3184, %v3184
      %v3209 = vsel %vm560, %v3205, 0.0
      %3210 = vadd.xlane.f32.xlu0 %v3209
      %v3211 = vpop.xlane.xlu0 %3210
      %v3212 = vsel %vm560, %v3206, 0.0
      %3213 = vadd.xlane.f32.xlu0 %v3212
      %v3214 = vpop.xlane.xlu0 %3213
      %v3215 = vsel %vm560, %v3207, 0.0
      %3216 = vadd.xlane.f32.xlu0 %v3215
      %v3217 = vpop.xlane.xlu0 %3216
      %v3218 = vsel %vm560, %v3208, 0.0
      %3219 = vadd.xlane.f32.xlu0 %v3218
      %v3220 = vpop.xlane.xlu0 %3219
      %v3221 = vrsqrt.pop %v3211
      %v3222 = vmul.f32 %v3221, %v3211
      %v3223 = vmul.f32 %v3222, %v3221
      %v3224 = vmul.f32 0.5, %v3223
      %v3225 = vsub.f32 1.5, %v3224
      %v3226 = vmul.f32 %v3221, %v3225
      %v3227 = vmul.f32 %v3211, %v3226
      %vm3228 = vcmp.eq.f32.partialorder %v3211, inf
      %v3229 = vsel %vm3228, %v3211, %v3227
      %vm3230 = vcmp.eq.f32.partialorder %v3211, 0.0
      %v3231 = vand.u32 %v3211, 2147483648
      %v3232 = vsel %vm3230, %v3231, %v3229
      %v3233 = vrsqrt.pop %v3214
      %v3234 = vmul.f32 %v3233, %v3214
      %v3235 = vmul.f32 %v3234, %v3233
      %v3236 = vmul.f32 0.5, %v3235
      %v3237 = vsub.f32 1.5, %v3236
      %v3238 = vmul.f32 %v3233, %v3237
      %v3239 = vmul.f32 %v3214, %v3238
      %vm3240 = vcmp.eq.f32.partialorder %v3214, inf
      %v3241 = vsel %vm3240, %v3214, %v3239
      %vm3242 = vcmp.eq.f32.partialorder %v3214, 0.0
      %v3243 = vand.u32 %v3214, 2147483648
      %v3244 = vsel %vm3242, %v3243, %v3241
      %v3245 = vrsqrt.pop %v3217
      %v3246 = vmul.f32 %v3245, %v3217
      %v3247 = vmul.f32 %v3246, %v3245
      %v3248 = vmul.f32 0.5, %v3247
      %v3249 = vsub.f32 1.5, %v3248
      %v3250 = vmul.f32 %v3245, %v3249
      %v3251 = vmul.f32 %v3217, %v3250
      %vm3252 = vcmp.eq.f32.partialorder %v3217, inf
      %v3253 = vsel %vm3252, %v3217, %v3251
      %vm3254 = vcmp.eq.f32.partialorder %v3217, 0.0
      %v3255 = vand.u32 %v3217, 2147483648
      %v3256 = vsel %vm3254, %v3255, %v3253
      %v3257 = vrsqrt.pop %v3220
      %v3258 = vmul.f32 %v3257, %v3220
      %v3259 = vmul.f32 %v3258, %v3257
      %v3260 = vmul.f32 0.5, %v3259
      %v3261 = vsub.f32 1.5, %v3260
      %v3262 = vmul.f32 %v3257, %v3261
      %v3263 = vmul.f32 %v3220, %v3262
      %vm3264 = vcmp.eq.f32.partialorder %v3220, inf
      %v3265 = vsel %vm3264, %v3220, %v3263
      %vm3266 = vcmp.eq.f32.partialorder %v3220, 0.0
      %v3267 = vand.u32 %v3220, 2147483648
      %v3268 = vsel %vm3266, %v3267, %v3265
      %v3269 = vmax.f32 %v3195, 1e-24
      %v3270 = vmax.f32 %v3198, 1e-24
      %v3271 = vmax.f32 %v3201, 1e-24
      %v3272 = vmax.f32 %v3204, 1e-24
      %v3273 = vrsqrt.pop %v3269
      %v3274 = vmul.f32 %v3273, %v3269
      %v3275 = vmul.f32 %v3274, %v3273
      %v3276 = vmul.f32 0.5, %v3275
      %v3277 = vsub.f32 1.5, %v3276
      %v3278 = vmul.f32 %v3273, %v3277
      %vm3279 = vweird.f32 %v3269
      %vm3280 = vweird.f32 %v3273
      %vm3281 = vmor %vm3279, %vm3280
      %v3282 = vsel %vm3281, %v3273, %v3278
      %v3283 = vrsqrt.pop %v3270
      %v3284 = vmul.f32 %v3283, %v3270
      %v3285 = vmul.f32 %v3284, %v3283
      %v3286 = vmul.f32 0.5, %v3285
      %v3287 = vsub.f32 1.5, %v3286
      %v3288 = vmul.f32 %v3283, %v3287
      %vm3289 = vweird.f32 %v3270
      %vm3290 = vweird.f32 %v3283
      %vm3291 = vmor %vm3289, %vm3290
      %v3292 = vsel %vm3291, %v3283, %v3288
      %v3293 = vrsqrt.pop %v3271
      %v3294 = vmul.f32 %v3293, %v3271
      %v3295 = vmul.f32 %v3294, %v3293
      %v3296 = vmul.f32 0.5, %v3295
      %v3297 = vsub.f32 1.5, %v3296
      %v3298 = vmul.f32 %v3293, %v3297
      %vm3299 = vweird.f32 %v3271
      %vm3300 = vweird.f32 %v3293
      %vm3301 = vmor %vm3299, %vm3300
      %v3302 = vsel %vm3301, %v3293, %v3298
      %v3303 = vrsqrt.pop %v3272
      %v3304 = vmul.f32 %v3303, %v3272
      %v3305 = vmul.f32 %v3304, %v3303
      %v3306 = vmul.f32 0.5, %v3305
      %v3307 = vsub.f32 1.5, %v3306
      %v3308 = vmul.f32 %v3303, %v3307
      %vm3309 = vweird.f32 %v3272
      %vm3310 = vweird.f32 %v3303
      %vm3311 = vmor %vm3309, %vm3310
      %v3312 = vsel %vm3311, %v3303, %v3308
      %v3313 = vmul.f32 %v3232, %v3282
      %v3314 = vmul.f32 %v3244, %v3292
      %v3315 = vmul.f32 %v3256, %v3302
      %v3316 = vmul.f32 %v3268, %v3312
      %v3317 = vmul.f32 %v3185, %v3313
      %v3318 = vmul.f32 %v3186, %v3314
      %v3319 = vmul.f32 %v3187, %v3315
      %v3320 = vmul.f32 %v3188, %v3316
      %v3321 = vadd.f32 %v3181, %v3317
      %v3322 = vadd.f32 %v3182, %v3318
      %v3323 = vadd.f32 %v3183, %v3319
      %v3324 = vadd.f32 %v3184, %v3320
      %v3325 = vsel %vm560, %v3321, -inf
      %3326 = vmax.xlane.f32.xlu0 %v3325
      %v3327 = vpop.xlane.xlu0 %3326
      %v3328 = vsel %vm560, %v3322, -inf
      %3329 = vmax.xlane.f32.xlu0 %v3328
      %v3330 = vpop.xlane.xlu0 %3329
      %v3331 = vsel %vm560, %v3323, -inf
      %3332 = vmax.xlane.f32.xlu0 %v3331
      %v3333 = vpop.xlane.xlu0 %3332
      %v3334 = vsel %vm560, %v3324, -inf
      %3335 = vmax.xlane.f32.xlu0 %v3334
      %v3336 = vpop.xlane.xlu0 %3335
      %v3337 = vsub.f32 %v3321, %v3327
      %v3338 = vsub.f32 %v3322, %v3330
      %v3339 = vsub.f32 %v3323, %v3333
      %v3340 = vsub.f32 %v3324, %v3336
      %v3341 = vmul.f32 %v3337, 1.442695
      %v3342 = vpow.pop %v3341
      %v3343 = vmul.f32 %v3338, 1.442695
      %v3344 = vpow.pop %v3343
      %v3345 = vmul.f32 %v3339, 1.442695
      %v3346 = vpow.pop %v3345
      %v3347 = vmul.f32 %v3340, 1.442695
      %v3348 = vpow.pop %v3347
      %v3349 = vsel %vm560, %v3342, 0.0
      %3350 = vadd.xlane.f32.xlu0 %v3349
      %v3351 = vpop.xlane.xlu0 %3350
      %v3352 = vsel %vm560, %v3344, 0.0
      %3353 = vadd.xlane.f32.xlu0 %v3352
      %v3354 = vpop.xlane.xlu0 %3353
      %v3355 = vsel %vm560, %v3346, 0.0
      %3356 = vadd.xlane.f32.xlu0 %v3355
      %v3357 = vpop.xlane.xlu0 %3356
      %v3358 = vsel %vm560, %v3348, 0.0
      %3359 = vadd.xlane.f32.xlu0 %v3358
      %v3360 = vpop.xlane.xlu0 %3359
      %v3361 = vrcp.pop %v3351
      %v3362 = vrcp.pop %v3354
      %v3363 = vrcp.pop %v3357
      %v3364 = vrcp.pop %v3360
      %v3365 = vmul.f32 %v3342, %v3361
      %v3366 = vmul.f32 %v3344, %v3362
      %v3367 = vmul.f32 %v3346, %v3363
      %v3368 = vmul.f32 %v3348, %v3364
      %v3370 = vsel %vm560, %v3365, 0
      %3372 = vmatpush.msra.mxu0 0.0
      %3373 = vmatpush.msra.mxu0 0.0
      %3374 = vmatpush.msra.mxu0 0.0
      %3375 = vmatpush.msra.mxu0 0.0
      %3376 = vmatpush.msra.mxu0 0.0
      %3377 = vmatpush.msra.mxu0 0.0
      %3378 = vmatpush.msra.mxu0 0.0
      %3379 = vmatpush.msra.mxu0 0.0
      %3380 = vmatpush.msra.mxu0 0.0
      %3381 = vmatpush.msra.mxu0 0.0
      %3382 = vmatpush.msra.mxu0 0.0
      %3383 = vmatpush.msra.mxu0 0.0
      %3384 = vmatpush.msra.mxu0 0.0
      %3385 = vmatpush.msra.mxu0 0.0
      %3386 = vmatpush.msra.mxu0 0.0
      %3387 = vmatpush.msra.mxu0 %v3058
      %3388 = vmatmul.f32.gmra.mxu0 %v3370
      %v3389 = vpop.f32.mrf.mxu0
      %v3390 = vadd.f32 0.0, %v3389
      %3391 = vdwg.mxu0
      %v3393 = vsel %vm560, %v3366, 0
      %3395 = vmatpush.msra.mxu0 0.0
      %3396 = vmatpush.msra.mxu0 0.0
      %3397 = vmatpush.msra.mxu0 0.0
      %3398 = vmatpush.msra.mxu0 0.0
      %3399 = vmatpush.msra.mxu0 0.0
      %3400 = vmatpush.msra.mxu0 0.0
      %3401 = vmatpush.msra.mxu0 0.0
      %3402 = vmatpush.msra.mxu0 0.0
      %3403 = vmatpush.msra.mxu0 0.0
      %3404 = vmatpush.msra.mxu0 0.0
      %3405 = vmatpush.msra.mxu0 0.0
      %3406 = vmatpush.msra.mxu0 0.0
      %3407 = vmatpush.msra.mxu0 0.0
      %3408 = vmatpush.msra.mxu0 0.0
      %3409 = vmatpush.msra.mxu0 0.0
      %3410 = vmatpush.msra.mxu0 %v3069
      %3411 = vmatmul.f32.gmra.mxu0 %v3393
      %v3412 = vpop.f32.mrf.mxu0
      %v3413 = vadd.f32 0.0, %v3412
      %3414 = vdwg.mxu0
      %v3416 = vsel %vm560, %v3367, 0
      %3418 = vmatpush.msra.mxu0 0.0
      %3419 = vmatpush.msra.mxu0 0.0
      %3420 = vmatpush.msra.mxu0 0.0
      %3421 = vmatpush.msra.mxu0 0.0
      %3422 = vmatpush.msra.mxu0 0.0
      %3423 = vmatpush.msra.mxu0 0.0
      %3424 = vmatpush.msra.mxu0 0.0
      %3425 = vmatpush.msra.mxu0 0.0
      %3426 = vmatpush.msra.mxu0 0.0
      %3427 = vmatpush.msra.mxu0 0.0
      %3428 = vmatpush.msra.mxu0 0.0
      %3429 = vmatpush.msra.mxu0 0.0
      %3430 = vmatpush.msra.mxu0 0.0
      %3431 = vmatpush.msra.mxu0 0.0
      %3432 = vmatpush.msra.mxu0 0.0
      %3433 = vmatpush.msra.mxu0 %v3072
      %3434 = vmatmul.f32.gmra.mxu0 %v3416
      %v3435 = vpop.f32.mrf.mxu0
      %v3436 = vadd.f32 0.0, %v3435
      %3437 = vdwg.mxu0
      %v3439 = vsel %vm560, %v3368, 0
      %3441 = vmatpush.msra.mxu0 0.0
      %3442 = vmatpush.msra.mxu0 0.0
      %3443 = vmatpush.msra.mxu0 0.0
      %3444 = vmatpush.msra.mxu0 0.0
      %3445 = vmatpush.msra.mxu0 0.0
      %3446 = vmatpush.msra.mxu0 0.0
      %3447 = vmatpush.msra.mxu0 0.0
      %3448 = vmatpush.msra.mxu0 0.0
      %3449 = vmatpush.msra.mxu0 0.0
      %3450 = vmatpush.msra.mxu0 0.0
      %3451 = vmatpush.msra.mxu0 0.0
      %3452 = vmatpush.msra.mxu0 0.0
      %3453 = vmatpush.msra.mxu0 0.0
      %3454 = vmatpush.msra.mxu0 0.0
      %3455 = vmatpush.msra.mxu0 0.0
      %3456 = vmatpush.msra.mxu0 %v3075
      %3457 = vmatmul.f32.gmra.mxu0 %v3439
      %v3458 = vpop.f32.mrf.mxu0
      %v3459 = vadd.f32 0.0, %v3458
      %3460 = vdwg.mxu0
      %3462 = vrot.lane.b32.xlu0 %v3413, 16
      %v3463 = vpop.permute.xlu0 %3462
      %3466 = vrot.lane.b32.xlu0 %v3436, 32
      %v3467 = vpop.permute.xlu0 %3466
      %3470 = vrot.lane.b32.xlu0 %v3459, 48
      %v3471 = vpop.permute.xlu0 %3470
      %v3473 = vsel %vm445, %v3390, %v3463
      %v3474 = vsel %vm311, %v3473, %v3467
      %v3475 = vsel %vm843, %v3474, %v3471
      %v3476 = vmul.f32 %v3475, %v303
      %s3477 = scalar_lea.vmem %s5, 256
      %v3478 = vld [vmem:[%s3477] sm:$0xff]
      %v3479 = vld [vmem:[%s3477 + $0x8] sm:$0xff]
      %v3480 = vld [vmem:[%s3477 + $0x10] sm:$0xff]
      %v3481 = vld [vmem:[%s3477 + $0x18] sm:$0xff]
      %v3482 = vld [vmem:[%s3477 + $0x20] sm:$0xff]
      %v3483 = vld [vmem:[%s3477 + $0x28] sm:$0xff]
      %v3484 = vld [vmem:[%s3477 + $0x30] sm:$0xff]
      %v3485 = vld [vmem:[%s3477 + $0x38] sm:$0xff]
      %v3487 = vsel %vm854, %v3476, 0
      %3489 = vmatpush.msra.mxu0 0.0
      %3490 = vmatpush.msra.mxu0 0.0
      %3491 = vmatpush.msra.mxu0 0.0
      %3492 = vmatpush.msra.mxu0 0.0
      %3493 = vmatpush.msra.mxu0 0.0
      %3494 = vmatpush.msra.mxu0 0.0
      %3495 = vmatpush.msra.mxu0 0.0
      %3496 = vmatpush.msra.mxu0 0.0
      %3497 = vmatpush.msra.mxu0 %v3485
      %3498 = vmatpush.msra.mxu0 %v3484
      %3499 = vmatpush.msra.mxu0 %v3483
      %3500 = vmatpush.msra.mxu0 %v3482
      %3501 = vmatpush.msra.mxu0 %v3481
      %3502 = vmatpush.msra.mxu0 %v3480
      %3503 = vmatpush.msra.mxu0 %v3479
      %3504 = vmatpush.msra.mxu0 %v3478
      %3505 = vmatmul.f32.gmra.mxu0 %v3487
      %v3506 = vpop.f32.mrf.mxu0
      %v3507 = vadd.f32 0.0, %v3506
      %3508 = vdwg.mxu0
      %v3509 = vadd.f32 %v2973, %v3507
      %v3510 = vperm.slane %v2975, 0
      %v3511 = vadd.f32 %v3509, %v3510
      %v3512 = vsel %vm311, %v3511, 0.0
      %3513 = vadd.xlane.f32.xlu0 %v3512
      %v3514 = vpop.xlane.xlu0 %3513
      %v3515 = vmul.f32 %v3514, %v351
      %v3516 = vsub.f32 %v3511, %v3515
      %v3517 = vmul.f32 %v3516, %v3516
      %v3518 = vsel %vm311, %v3517, 0.0
      %3519 = vadd.xlane.f32.xlu0 %v3518
      %v3520 = vpop.xlane.xlu0 %3519
      %v3521 = vmul.f32 %v3520, %v351
      %v3522 = vadd.f32 %v3521, 1e-05
      %v3523 = vrsqrt.pop %v3522
      %v3524 = vmul.f32 %v3523, %v3522
      %v3525 = vmul.f32 %v3524, %v3523
      %v3526 = vmul.f32 0.5, %v3525
      %v3527 = vsub.f32 1.5, %v3526
      %v3528 = vmul.f32 %v3523, %v3527
      %vm3529 = vweird.f32 %v3522
      %vm3530 = vweird.f32 %v3523
      %vm3531 = vmor %vm3529, %vm3530
      %v3532 = vsel %vm3531, %v3523, %v3528
      %v3533 = vmul.f32 %v3516, %v3532
      %v3534 = vperm.slane %v2978, 0
      %v3535 = vmul.f32 %v3533, %v3534
      %v3536 = vperm.slane %v2979, 0
      %v3537 = vadd.f32 %v3535, %v3536
      %s3538 = scalar_lea.vmem %s6, 128
      %v3539 = vld [vmem:[%s3538] sm:$0xff]
      %v3540 = vld [vmem:[%s3538 + $0x8] sm:$0xff]
      %v3541 = vld [vmem:[%s3538 + $0x10] sm:$0xff]
      %v3542 = vld [vmem:[%s3538 + $0x18] sm:$0xff]
      %v3543 = vperm.slane %v2981, 0
      %v3545 = vsel %vm311, %v3537, 0
      %3547 = vmatpush.msra.mxu0 0.0
      %3548 = vmatpush.msra.mxu0 0.0
      %3549 = vmatpush.msra.mxu0 0.0
      %3550 = vmatpush.msra.mxu0 0.0
      %3551 = vmatpush.msra.mxu0 0.0
      %3552 = vmatpush.msra.mxu0 0.0
      %3553 = vmatpush.msra.mxu0 0.0
      %3554 = vmatpush.msra.mxu0 0.0
      %3555 = vmatpush.msra.mxu0 0.0
      %3556 = vmatpush.msra.mxu0 0.0
      %3557 = vmatpush.msra.mxu0 0.0
      %3558 = vmatpush.msra.mxu0 0.0
      %3559 = vmatpush.msra.mxu0 %v3542
      %3560 = vmatpush.msra.mxu0 %v3541
      %3561 = vmatpush.msra.mxu0 %v3540
      %3562 = vmatpush.msra.mxu0 %v3539
      %3563 = vmatmul.f32.gmra.mxu0 %v3545
      %v3564 = vpop.f32.mrf.mxu0
      %v3565 = vadd.f32 %v3543, %v3564
      %3566 = vdwg.mxu0
      %v3567 = vmul.f32 %v3565, %v3565
      %v3568 = vmul.f32 %v3565, %v3567
      %v3569 = vmul.f32 %v3568, 0.044715
      %v3570 = vadd.f32 %v3565, %v3569
      %v3571 = vmul.f32 %v3570, 0.7978846
      %v3572 = vtanh.pop %v3571
      %v3573 = vadd.f32 %v3572, 1.0
      %v3574 = vmul.f32 %v3573, 0.5
      %v3575 = vmul.f32 %v3565, %v3574
      %s3576 = scalar_lea.vmem %s7, 256
      %v3577 = vld [vmem:[%s3576] sm:$0xff]
      %v3578 = vld [vmem:[%s3576 + $0x8] sm:$0xff]
      %v3579 = vld [vmem:[%s3576 + $0x10] sm:$0xff]
      %v3580 = vld [vmem:[%s3576 + $0x18] sm:$0xff]
      %v3581 = vld [vmem:[%s3576 + $0x20] sm:$0xff]
      %v3582 = vld [vmem:[%s3576 + $0x28] sm:$0xff]
      %v3583 = vld [vmem:[%s3576 + $0x30] sm:$0xff]
      %v3584 = vld [vmem:[%s3576 + $0x38] sm:$0xff]
      %v3586 = vsel %vm854, %v3575, 0
      %3588 = vmatpush.msra.mxu0 0.0
      %3589 = vmatpush.msra.mxu0 0.0
      %3590 = vmatpush.msra.mxu0 0.0
      %3591 = vmatpush.msra.mxu0 0.0
      %3592 = vmatpush.msra.mxu0 0.0
      %3593 = vmatpush.msra.mxu0 0.0
      %3594 = vmatpush.msra.mxu0 0.0
      %3595 = vmatpush.msra.mxu0 0.0
      %3596 = vmatpush.msra.mxu0 %v3584
      %3597 = vmatpush.msra.mxu0 %v3583
      %3598 = vmatpush.msra.mxu0 %v3582
      %3599 = vmatpush.msra.mxu0 %v3581
      %3600 = vmatpush.msra.mxu0 %v3580
      %3601 = vmatpush.msra.mxu0 %v3579
      %3602 = vmatpush.msra.mxu0 %v3578
      %3603 = vmatpush.msra.mxu0 %v3577
      %3604 = vmatmul.f32.gmra.mxu0 %v3586
      %v3605 = vpop.f32.mrf.mxu0
      %v3606 = vadd.f32 0.0, %v3605
      %3607 = vdwg.mxu0
      %v3608 = vadd.f32 %v3511, %v3606
      %v3609 = vperm.slane %v2980, 0
      %v3610 = vadd.f32 %v3608, %v3609
      %v3611 = vld [vmem:[%s2935 + $0x7] sm:$0x1]
      %v3612 = vld [vmem:[%s2935 + $0x8] sm:$0x1]
      %v3613 = vld [vmem:[%s2935 + $0x9] sm:$0x1]
      %v3614 = vld [vmem:[%s2935 + $0xa] sm:$0x1]
      %v3615 = vld [vmem:[%s2935 + $0xb] sm:$0x1]
      %v3616 = vld [vmem:[%s2935 + $0xc] sm:$0x1]
      %v3617 = vld [vmem:[%s2935 + $0xd] sm:$0x1]
      %v3618 = vsel %vm311, %v3610, 0.0
      %3619 = vadd.xlane.f32.xlu0 %v3618
      %v3620 = vpop.xlane.xlu0 %3619
      %v3621 = vmul.f32 %v3620, %v351
      %v3622 = vsub.f32 %v3610, %v3621
      %v3623 = vmul.f32 %v3622, %v3622
      %v3624 = vsel %vm311, %v3623, 0.0
      %3625 = vadd.xlane.f32.xlu0 %v3624
      %v3626 = vpop.xlane.xlu0 %3625
      %v3627 = vmul.f32 %v3626, %v351
      %v3628 = vadd.f32 %v3627, 1e-05
      %v3629 = vrsqrt.pop %v3628
      %v3630 = vmul.f32 %v3629, %v3628
      %v3631 = vmul.f32 %v3630, %v3629
      %v3632 = vmul.f32 0.5, %v3631
      %v3633 = vsub.f32 1.5, %v3632
      %v3634 = vmul.f32 %v3629, %v3633
      %vm3635 = vweird.f32 %v3628
      %vm3636 = vweird.f32 %v3629
      %vm3637 = vmor %vm3635, %vm3636
      %v3638 = vsel %vm3637, %v3629, %v3634
      %v3639 = vmul.f32 %v3622, %v3638
      %v3640 = vperm.slane %v3612, 0
      %v3641 = vmul.f32 %v3639, %v3640
      %v3642 = vperm.slane %v3613, 0
      %v3643 = vadd.f32 %v3641, %v3642
      %s3644 = scalar_lea.vmem %s4, 320
      %v3645 = vld [vmem:[%s3644] sm:$0xff]
      %v3646 = vld [vmem:[%s3644 + $0x8] sm:$0xff]
      %v3647 = vld [vmem:[%s3644 + $0x10] sm:$0xff]
      %v3648 = vld [vmem:[%s3644 + $0x18] sm:$0xff]
      %v3649 = vld [vmem:[%s3644 + $0x20] sm:$0xff]
      %v3650 = vld [vmem:[%s3644 + $0x28] sm:$0xff]
      %v3651 = vld [vmem:[%s3644 + $0x30] sm:$0xff]
      %v3652 = vld [vmem:[%s3644 + $0x38] sm:$0xff]
      %v3654 = vsel %vm311, %v3643, 0
      %3656 = vmatpush.msra.mxu0 0.0
      %3657 = vmatpush.msra.mxu0 0.0
      %3658 = vmatpush.msra.mxu0 0.0
      %3659 = vmatpush.msra.mxu0 0.0
      %3660 = vmatpush.msra.mxu0 0.0
      %3661 = vmatpush.msra.mxu0 0.0
      %3662 = vmatpush.msra.mxu0 0.0
      %3663 = vmatpush.msra.mxu0 0.0
      %3664 = vmatpush.msra.mxu0 0.0
      %3665 = vmatpush.msra.mxu0 0.0
      %3666 = vmatpush.msra.mxu0 0.0
      %3667 = vmatpush.msra.mxu0 0.0
      %3668 = vmatpush.msra.mxu0 %v3651
      %3669 = vmatpush.msra.mxu0 %v3649
      %3670 = vmatpush.msra.mxu0 %v3647
      %3671 = vmatpush.msra.mxu0 %v3645
      %3672 = vmatmul.f32.gmra.mxu0 %v3654
      %v3673 = vpop.f32.mrf.mxu0
      %v3674 = vadd.f32 0.0, %v3673
      %3675 = vdwg.mxu0
      %3676 = vmatpush.msra.mxu0 0.0
      %3677 = vmatpush.msra.mxu0 0.0
      %3678 = vmatpush.msra.mxu0 0.0
      %3679 = vmatpush.msra.mxu0 0.0
      %3680 = vmatpush.msra.mxu0 0.0
      %3681 = vmatpush.msra.mxu0 0.0
      %3682 = vmatpush.msra.mxu0 0.0
      %3683 = vmatpush.msra.mxu0 0.0
      %3684 = vmatpush.msra.mxu0 0.0
      %3685 = vmatpush.msra.mxu0 0.0
      %3686 = vmatpush.msra.mxu0 0.0
      %3687 = vmatpush.msra.mxu0 0.0
      %3688 = vmatpush.msra.mxu0 %v3652
      %3689 = vmatpush.msra.mxu0 %v3650
      %3690 = vmatpush.msra.mxu0 %v3648
      %3691 = vmatpush.msra.mxu0 %v3646
      %3692 = vmatmul.f32.gmra.mxu0 %v3654
      %v3693 = vpop.f32.mrf.mxu0
      %v3694 = vadd.f32 0.0, %v3693
      %3695 = vdwg.mxu0
      %3697 = vrot.lane.b32.xlu0 %v3674, 112
      %v3698 = vpop.permute.xlu0 %3697
      %3699 = vrot.lane.b32.xlu0 %v3674, 96
      %v3700 = vpop.permute.xlu0 %3699
      %3701 = vrot.lane.b32.xlu0 %v3674, 80
      %v3702 = vpop.permute.xlu0 %3701
      %3704 = vrot.lane.b32.xlu0 %v3694, 112
      %v3705 = vpop.permute.xlu0 %3704
      %3707 = vrot.lane.b32.xlu0 %v3694, 96
      %v3708 = vpop.permute.xlu0 %3707
      %3710 = vrot.lane.b32.xlu0 %v3694, 80
      %v3711 = vpop.permute.xlu0 %3710
      %3713 = vrot.lane.b32.xlu0 %v3674, 64
      %v3714 = vpop.permute.xlu0 %3713
      %v3715 = vsel %vm445, %v3674, 0
      %v3717 = vsel %vm445, %v3714, 0
      %3719 = vmatpush.xpose.msra.mxu0 0.0
      %3720 = vmatpush.xpose.msra.mxu0 0.0
      %3721 = vmatpush.xpose.msra.mxu0 0.0
      %3722 = vmatpush.xpose.msra.mxu0 0.0
      %3723 = vmatpush.xpose.msra.mxu0 0.0
      %3724 = vmatpush.xpose.msra.mxu0 0.0
      %3725 = vmatpush.xpose.msra.mxu0 0.0
      %3726 = vmatpush.xpose.msra.mxu0 0.0
      %3727 = vmatpush.xpose.msra.mxu0 0.0
      %3728 = vmatpush.xpose.msra.mxu0 0.0
      %3729 = vmatpush.xpose.msra.mxu0 0.0
      %3730 = vmatpush.xpose.msra.mxu0 0.0
      %3731 = vmatpush.xpose.msra.mxu0 0.0
      %3732 = vmatpush.xpose.msra.mxu0 0.0
      %3733 = vmatpush.xpose.msra.mxu0 0.0
      %3734 = vmatpush.xpose.msra.mxu0 %v3717
      %3735 = vmatmul.f32.gmra.mxu0 %v3715
      %v3736 = vpop.f32.mrf.mxu0
      %v3737 = vadd.f32 0.0, %v3736
      %3738 = vdwg.mxu0
      %3739 = vrot.lane.b32.xlu0 %v3698, 64
      %v3740 = vpop.permute.xlu0 %3739
      %v3741 = vsel %vm445, %v3698, 0
      %v3743 = vsel %vm445, %v3740, 0
      %3745 = vmatpush.xpose.msra.mxu0 0.0
      %3746 = vmatpush.xpose.msra.mxu0 0.0
      %3747 = vmatpush.xpose.msra.mxu0 0.0
      %3748 = vmatpush.xpose.msra.mxu0 0.0
      %3749 = vmatpush.xpose.msra.mxu0 0.0
      %3750 = vmatpush.xpose.msra.mxu0 0.0
      %3751 = vmatpush.xpose.msra.mxu0 0.0
      %3752 = vmatpush.xpose.msra.mxu0 0.0
      %3753 = vmatpush.xpose.msra.mxu0 0.0
      %3754 = vmatpush.xpose.msra.mxu0 0.0
      %3755 = vmatpush.xpose.msra.mxu0 0.0
      %3756 = vmatpush.xpose.msra.mxu0 0.0
      %3757 = vmatpush.xpose.msra.mxu0 0.0
      %3758 = vmatpush.xpose.msra.mxu0 0.0
      %3759 = vmatpush.xpose.msra.mxu0 0.0
      %3760 = vmatpush.xpose.msra.mxu0 %v3743
      %3761 = vmatmul.f32.gmra.mxu0 %v3741
      %v3762 = vpop.f32.mrf.mxu0
      %v3763 = vadd.f32 0.0, %v3762
      %3764 = vdwg.mxu0
      %3765 = vrot.lane.b32.xlu0 %v3700, 64
      %v3766 = vpop.permute.xlu0 %3765
      %v3767 = vsel %vm445, %v3700, 0
      %v3769 = vsel %vm445, %v3766, 0
      %3771 = vmatpush.xpose.msra.mxu0 0.0
      %3772 = vmatpush.xpose.msra.mxu0 0.0
      %3773 = vmatpush.xpose.msra.mxu0 0.0
      %3774 = vmatpush.xpose.msra.mxu0 0.0
      %3775 = vmatpush.xpose.msra.mxu0 0.0
      %3776 = vmatpush.xpose.msra.mxu0 0.0
      %3777 = vmatpush.xpose.msra.mxu0 0.0
      %3778 = vmatpush.xpose.msra.mxu0 0.0
      %3779 = vmatpush.xpose.msra.mxu0 0.0
      %3780 = vmatpush.xpose.msra.mxu0 0.0
      %3781 = vmatpush.xpose.msra.mxu0 0.0
      %3782 = vmatpush.xpose.msra.mxu0 0.0
      %3783 = vmatpush.xpose.msra.mxu0 0.0
      %3784 = vmatpush.xpose.msra.mxu0 0.0
      %3785 = vmatpush.xpose.msra.mxu0 0.0
      %3786 = vmatpush.xpose.msra.mxu0 %v3769
      %3787 = vmatmul.f32.gmra.mxu0 %v3767
      %v3788 = vpop.f32.mrf.mxu0
      %v3789 = vadd.f32 0.0, %v3788
      %3790 = vdwg.mxu0
      %3791 = vrot.lane.b32.xlu0 %v3702, 64
      %v3792 = vpop.permute.xlu0 %3791
      %v3793 = vsel %vm445, %v3702, 0
      %v3795 = vsel %vm445, %v3792, 0
      %3797 = vmatpush.xpose.msra.mxu0 0.0
      %3798 = vmatpush.xpose.msra.mxu0 0.0
      %3799 = vmatpush.xpose.msra.mxu0 0.0
      %3800 = vmatpush.xpose.msra.mxu0 0.0
      %3801 = vmatpush.xpose.msra.mxu0 0.0
      %3802 = vmatpush.xpose.msra.mxu0 0.0
      %3803 = vmatpush.xpose.msra.mxu0 0.0
      %3804 = vmatpush.xpose.msra.mxu0 0.0
      %3805 = vmatpush.xpose.msra.mxu0 0.0
      %3806 = vmatpush.xpose.msra.mxu0 0.0
      %3807 = vmatpush.xpose.msra.mxu0 0.0
      %3808 = vmatpush.xpose.msra.mxu0 0.0
      %3809 = vmatpush.xpose.msra.mxu0 0.0
      %3810 = vmatpush.xpose.msra.mxu0 0.0
      %3811 = vmatpush.xpose.msra.mxu0 0.0
      %3812 = vmatpush.xpose.msra.mxu0 %v3795
      %3813 = vmatmul.f32.gmra.mxu0 %v3793
      %v3814 = vpop.f32.mrf.mxu0
      %v3815 = vadd.f32 0.0, %v3814
      %3816 = vdwg.mxu0
      %v3817 = vmul.f32 %v3737, 0.25
      %v3818 = vmul.f32 %v3763, 0.25
      %v3819 = vmul.f32 %v3789, 0.25
      %v3820 = vmul.f32 %v3815, 0.25
      %v3821 = vmul.f32 %v3817, %v2934
      %v3822 = vmul.f32 %v3818, %v2934
      %v3823 = vmul.f32 %v3819, %v2934
      %v3824 = vmul.f32 %v3820, %v2934
      %v3825 = vmul.f32 %v3821, %v3821
      %v3826 = vmul.f32 %v3822, %v3822
      %v3827 = vmul.f32 %v3823, %v3823
      %v3828 = vmul.f32 %v3824, %v3824
      %v3829 = vsel %vm560, %v3825, 0.0
      %3830 = vadd.xlane.f32.xlu0 %v3829
      %v3831 = vpop.xlane.xlu0 %3830
      %v3832 = vsel %vm560, %v3826, 0.0
      %3833 = vadd.xlane.f32.xlu0 %v3832
      %v3834 = vpop.xlane.xlu0 %3833
      %v3835 = vsel %vm560, %v3827, 0.0
      %3836 = vadd.xlane.f32.xlu0 %v3835
      %v3837 = vpop.xlane.xlu0 %3836
      %v3838 = vsel %vm560, %v3828, 0.0
      %3839 = vadd.xlane.f32.xlu0 %v3838
      %v3840 = vpop.xlane.xlu0 %3839
      %v3841 = vmul.f32 %v3817, %v3817
      %v3842 = vmul.f32 %v3818, %v3818
      %v3843 = vmul.f32 %v3819, %v3819
      %v3844 = vmul.f32 %v3820, %v3820
      %v3845 = vsel %vm560, %v3841, 0.0
      %3846 = vadd.xlane.f32.xlu0 %v3845
      %v3847 = vpop.xlane.xlu0 %3846
      %v3848 = vsel %vm560, %v3842, 0.0
      %3849 = vadd.xlane.f32.xlu0 %v3848
      %v3850 = vpop.xlane.xlu0 %3849
      %v3851 = vsel %vm560, %v3843, 0.0
      %3852 = vadd.xlane.f32.xlu0 %v3851
      %v3853 = vpop.xlane.xlu0 %3852
      %v3854 = vsel %vm560, %v3844, 0.0
      %3855 = vadd.xlane.f32.xlu0 %v3854
      %v3856 = vpop.xlane.xlu0 %3855
      %v3857 = vrsqrt.pop %v3847
      %v3858 = vmul.f32 %v3857, %v3847
      %v3859 = vmul.f32 %v3858, %v3857
      %v3860 = vmul.f32 0.5, %v3859
      %v3861 = vsub.f32 1.5, %v3860
      %v3862 = vmul.f32 %v3857, %v3861
      %v3863 = vmul.f32 %v3847, %v3862
      %vm3864 = vcmp.eq.f32.partialorder %v3847, inf
      %v3865 = vsel %vm3864, %v3847, %v3863
      %vm3866 = vcmp.eq.f32.partialorder %v3847, 0.0
      %v3867 = vand.u32 %v3847, 2147483648
      %v3868 = vsel %vm3866, %v3867, %v3865
      %v3869 = vrsqrt.pop %v3850
      %v3870 = vmul.f32 %v3869, %v3850
      %v3871 = vmul.f32 %v3870, %v3869
      %v3872 = vmul.f32 0.5, %v3871
      %v3873 = vsub.f32 1.5, %v3872
      %v3874 = vmul.f32 %v3869, %v3873
      %v3875 = vmul.f32 %v3850, %v3874
      %vm3876 = vcmp.eq.f32.partialorder %v3850, inf
      %v3877 = vsel %vm3876, %v3850, %v3875
      %vm3878 = vcmp.eq.f32.partialorder %v3850, 0.0
      %v3879 = vand.u32 %v3850, 2147483648
      %v3880 = vsel %vm3878, %v3879, %v3877
      %v3881 = vrsqrt.pop %v3853
      %v3882 = vmul.f32 %v3881, %v3853
      %v3883 = vmul.f32 %v3882, %v3881
      %v3884 = vmul.f32 0.5, %v3883
      %v3885 = vsub.f32 1.5, %v3884
      %v3886 = vmul.f32 %v3881, %v3885
      %v3887 = vmul.f32 %v3853, %v3886
      %vm3888 = vcmp.eq.f32.partialorder %v3853, inf
      %v3889 = vsel %vm3888, %v3853, %v3887
      %vm3890 = vcmp.eq.f32.partialorder %v3853, 0.0
      %v3891 = vand.u32 %v3853, 2147483648
      %v3892 = vsel %vm3890, %v3891, %v3889
      %v3893 = vrsqrt.pop %v3856
      %v3894 = vmul.f32 %v3893, %v3856
      %v3895 = vmul.f32 %v3894, %v3893
      %v3896 = vmul.f32 0.5, %v3895
      %v3897 = vsub.f32 1.5, %v3896
      %v3898 = vmul.f32 %v3893, %v3897
      %v3899 = vmul.f32 %v3856, %v3898
      %vm3900 = vcmp.eq.f32.partialorder %v3856, inf
      %v3901 = vsel %vm3900, %v3856, %v3899
      %vm3902 = vcmp.eq.f32.partialorder %v3856, 0.0
      %v3903 = vand.u32 %v3856, 2147483648
      %v3904 = vsel %vm3902, %v3903, %v3901
      %v3905 = vmax.f32 %v3831, 1e-24
      %v3906 = vmax.f32 %v3834, 1e-24
      %v3907 = vmax.f32 %v3837, 1e-24
      %v3908 = vmax.f32 %v3840, 1e-24
      %v3909 = vrsqrt.pop %v3905
      %v3910 = vmul.f32 %v3909, %v3905
      %v3911 = vmul.f32 %v3910, %v3909
      %v3912 = vmul.f32 0.5, %v3911
      %v3913 = vsub.f32 1.5, %v3912
      %v3914 = vmul.f32 %v3909, %v3913
      %vm3915 = vweird.f32 %v3905
      %vm3916 = vweird.f32 %v3909
      %vm3917 = vmor %vm3915, %vm3916
      %v3918 = vsel %vm3917, %v3909, %v3914
      %v3919 = vrsqrt.pop %v3906
      %v3920 = vmul.f32 %v3919, %v3906
      %v3921 = vmul.f32 %v3920, %v3919
      %v3922 = vmul.f32 0.5, %v3921
      %v3923 = vsub.f32 1.5, %v3922
      %v3924 = vmul.f32 %v3919, %v3923
      %vm3925 = vweird.f32 %v3906
      %vm3926 = vweird.f32 %v3919
      %vm3927 = vmor %vm3925, %vm3926
      %v3928 = vsel %vm3927, %v3919, %v3924
      %v3929 = vrsqrt.pop %v3907
      %v3930 = vmul.f32 %v3929, %v3907
      %v3931 = vmul.f32 %v3930, %v3929
      %v3932 = vmul.f32 0.5, %v3931
      %v3933 = vsub.f32 1.5, %v3932
      %v3934 = vmul.f32 %v3929, %v3933
      %vm3935 = vweird.f32 %v3907
      %vm3936 = vweird.f32 %v3929
      %vm3937 = vmor %vm3935, %vm3936
      %v3938 = vsel %vm3937, %v3929, %v3934
      %v3939 = vrsqrt.pop %v3908
      %v3940 = vmul.f32 %v3939, %v3908
      %v3941 = vmul.f32 %v3940, %v3939
      %v3942 = vmul.f32 0.5, %v3941
      %v3943 = vsub.f32 1.5, %v3942
      %v3944 = vmul.f32 %v3939, %v3943
      %vm3945 = vweird.f32 %v3908
      %vm3946 = vweird.f32 %v3939
      %vm3947 = vmor %vm3945, %vm3946
      %v3948 = vsel %vm3947, %v3939, %v3944
      %v3949 = vmul.f32 %v3868, %v3918
      %v3950 = vmul.f32 %v3880, %v3928
      %v3951 = vmul.f32 %v3892, %v3938
      %v3952 = vmul.f32 %v3904, %v3948
      %v3953 = vmul.f32 %v3821, %v3949
      %v3954 = vmul.f32 %v3822, %v3950
      %v3955 = vmul.f32 %v3823, %v3951
      %v3956 = vmul.f32 %v3824, %v3952
      %v3957 = vadd.f32 %v3817, %v3953
      %v3958 = vadd.f32 %v3818, %v3954
      %v3959 = vadd.f32 %v3819, %v3955
      %v3960 = vadd.f32 %v3820, %v3956
      %v3961 = vsel %vm560, %v3957, -inf
      %3962 = vmax.xlane.f32.xlu0 %v3961
      %v3963 = vpop.xlane.xlu0 %3962
      %v3964 = vsel %vm560, %v3958, -inf
      %3965 = vmax.xlane.f32.xlu0 %v3964
      %v3966 = vpop.xlane.xlu0 %3965
      %v3967 = vsel %vm560, %v3959, -inf
      %3968 = vmax.xlane.f32.xlu0 %v3967
      %v3969 = vpop.xlane.xlu0 %3968
      %v3970 = vsel %vm560, %v3960, -inf
      %3971 = vmax.xlane.f32.xlu0 %v3970
      %v3972 = vpop.xlane.xlu0 %3971
      %v3973 = vsub.f32 %v3957, %v3963
      %v3974 = vsub.f32 %v3958, %v3966
      %v3975 = vsub.f32 %v3959, %v3969
      %v3976 = vsub.f32 %v3960, %v3972
      %v3977 = vmul.f32 %v3973, 1.442695
      %v3978 = vpow.pop %v3977
      %v3979 = vmul.f32 %v3974, 1.442695
      %v3980 = vpow.pop %v3979
      %v3981 = vmul.f32 %v3975, 1.442695
      %v3982 = vpow.pop %v3981
      %v3983 = vmul.f32 %v3976, 1.442695
      %v3984 = vpow.pop %v3983
      %v3985 = vsel %vm560, %v3978, 0.0
      %3986 = vadd.xlane.f32.xlu0 %v3985
      %v3987 = vpop.xlane.xlu0 %3986
      %v3988 = vsel %vm560, %v3980, 0.0
      %3989 = vadd.xlane.f32.xlu0 %v3988
      %v3990 = vpop.xlane.xlu0 %3989
      %v3991 = vsel %vm560, %v3982, 0.0
      %3992 = vadd.xlane.f32.xlu0 %v3991
      %v3993 = vpop.xlane.xlu0 %3992
      %v3994 = vsel %vm560, %v3984, 0.0
      %3995 = vadd.xlane.f32.xlu0 %v3994
      %v3996 = vpop.xlane.xlu0 %3995
      %v3997 = vrcp.pop %v3987
      %v3998 = vrcp.pop %v3990
      %v3999 = vrcp.pop %v3993
      %v4000 = vrcp.pop %v3996
      %v4001 = vmul.f32 %v3978, %v3997
      %v4002 = vmul.f32 %v3980, %v3998
      %v4003 = vmul.f32 %v3982, %v3999
      %v4004 = vmul.f32 %v3984, %v4000
      %v4006 = vsel %vm560, %v4001, 0
      %4008 = vmatpush.msra.mxu0 0.0
      %4009 = vmatpush.msra.mxu0 0.0
      %4010 = vmatpush.msra.mxu0 0.0
      %4011 = vmatpush.msra.mxu0 0.0
      %4012 = vmatpush.msra.mxu0 0.0
      %4013 = vmatpush.msra.mxu0 0.0
      %4014 = vmatpush.msra.mxu0 0.0
      %4015 = vmatpush.msra.mxu0 0.0
      %4016 = vmatpush.msra.mxu0 0.0
      %4017 = vmatpush.msra.mxu0 0.0
      %4018 = vmatpush.msra.mxu0 0.0
      %4019 = vmatpush.msra.mxu0 0.0
      %4020 = vmatpush.msra.mxu0 0.0
      %4021 = vmatpush.msra.mxu0 0.0
      %4022 = vmatpush.msra.mxu0 0.0
      %4023 = vmatpush.msra.mxu0 %v3694
      %4024 = vmatmul.f32.gmra.mxu0 %v4006
      %v4025 = vpop.f32.mrf.mxu0
      %v4026 = vadd.f32 0.0, %v4025
      %4027 = vdwg.mxu0
      %v4029 = vsel %vm560, %v4002, 0
      %4031 = vmatpush.msra.mxu0 0.0
      %4032 = vmatpush.msra.mxu0 0.0
      %4033 = vmatpush.msra.mxu0 0.0
      %4034 = vmatpush.msra.mxu0 0.0
      %4035 = vmatpush.msra.mxu0 0.0
      %4036 = vmatpush.msra.mxu0 0.0
      %4037 = vmatpush.msra.mxu0 0.0
      %4038 = vmatpush.msra.mxu0 0.0
      %4039 = vmatpush.msra.mxu0 0.0
      %4040 = vmatpush.msra.mxu0 0.0
      %4041 = vmatpush.msra.mxu0 0.0
      %4042 = vmatpush.msra.mxu0 0.0
      %4043 = vmatpush.msra.mxu0 0.0
      %4044 = vmatpush.msra.mxu0 0.0
      %4045 = vmatpush.msra.mxu0 0.0
      %4046 = vmatpush.msra.mxu0 %v3705
      %4047 = vmatmul.f32.gmra.mxu0 %v4029
      %v4048 = vpop.f32.mrf.mxu0
      %v4049 = vadd.f32 0.0, %v4048
      %4050 = vdwg.mxu0
      %v4052 = vsel %vm560, %v4003, 0
      %4054 = vmatpush.msra.mxu0 0.0
      %4055 = vmatpush.msra.mxu0 0.0
      %4056 = vmatpush.msra.mxu0 0.0
      %4057 = vmatpush.msra.mxu0 0.0
      %4058 = vmatpush.msra.mxu0 0.0
      %4059 = vmatpush.msra.mxu0 0.0
      %4060 = vmatpush.msra.mxu0 0.0
      %4061 = vmatpush.msra.mxu0 0.0
      %4062 = vmatpush.msra.mxu0 0.0
      %4063 = vmatpush.msra.mxu0 0.0
      %4064 = vmatpush.msra.mxu0 0.0
      %4065 = vmatpush.msra.mxu0 0.0
      %4066 = vmatpush.msra.mxu0 0.0
      %4067 = vmatpush.msra.mxu0 0.0
      %4068 = vmatpush.msra.mxu0 0.0
      %4069 = vmatpush.msra.mxu0 %v3708
      %4070 = vmatmul.f32.gmra.mxu0 %v4052
      %v4071 = vpop.f32.mrf.mxu0
      %v4072 = vadd.f32 0.0, %v4071
      %4073 = vdwg.mxu0
      %v4075 = vsel %vm560, %v4004, 0
      %4077 = vmatpush.msra.mxu0 0.0
      %4078 = vmatpush.msra.mxu0 0.0
      %4079 = vmatpush.msra.mxu0 0.0
      %4080 = vmatpush.msra.mxu0 0.0
      %4081 = vmatpush.msra.mxu0 0.0
      %4082 = vmatpush.msra.mxu0 0.0
      %4083 = vmatpush.msra.mxu0 0.0
      %4084 = vmatpush.msra.mxu0 0.0
      %4085 = vmatpush.msra.mxu0 0.0
      %4086 = vmatpush.msra.mxu0 0.0
      %4087 = vmatpush.msra.mxu0 0.0
      %4088 = vmatpush.msra.mxu0 0.0
      %4089 = vmatpush.msra.mxu0 0.0
      %4090 = vmatpush.msra.mxu0 0.0
      %4091 = vmatpush.msra.mxu0 0.0
      %4092 = vmatpush.msra.mxu0 %v3711
      %4093 = vmatmul.f32.gmra.mxu0 %v4075
      %v4094 = vpop.f32.mrf.mxu0
      %v4095 = vadd.f32 0.0, %v4094
      %4096 = vdwg.mxu0
      %4098 = vrot.lane.b32.xlu0 %v4049, 16
      %v4099 = vpop.permute.xlu0 %4098
      %4102 = vrot.lane.b32.xlu0 %v4072, 32
      %v4103 = vpop.permute.xlu0 %4102
      %4106 = vrot.lane.b32.xlu0 %v4095, 48
      %v4107 = vpop.permute.xlu0 %4106
      %v4109 = vsel %vm445, %v4026, %v4099
      %v4110 = vsel %vm311, %v4109, %v4103
      %v4111 = vsel %vm843, %v4110, %v4107
      %v4112 = vmul.f32 %v4111, %v303
      %s4113 = scalar_lea.vmem %s5, 320
      %v4114 = vld [vmem:[%s4113] sm:$0xff]
      %v4115 = vld [vmem:[%s4113 + $0x8] sm:$0xff]
      %v4116 = vld [vmem:[%s4113 + $0x10] sm:$0xff]
      %v4117 = vld [vmem:[%s4113 + $0x18] sm:$0xff]
      %v4118 = vld [vmem:[%s4113 + $0x20] sm:$0xff]
      %v4119 = vld [vmem:[%s4113 + $0x28] sm:$0xff]
      %v4120 = vld [vmem:[%s4113 + $0x30] sm:$0xff]
      %v4121 = vld [vmem:[%s4113 + $0x38] sm:$0xff]
      %v4123 = vsel %vm854, %v4112, 0
      %4125 = vmatpush.msra.mxu0 0.0
      %4126 = vmatpush.msra.mxu0 0.0
      %4127 = vmatpush.msra.mxu0 0.0
      %4128 = vmatpush.msra.mxu0 0.0
      %4129 = vmatpush.msra.mxu0 0.0
      %4130 = vmatpush.msra.mxu0 0.0
      %4131 = vmatpush.msra.mxu0 0.0
      %4132 = vmatpush.msra.mxu0 0.0
      %4133 = vmatpush.msra.mxu0 %v4121
      %4134 = vmatpush.msra.mxu0 %v4120
      %4135 = vmatpush.msra.mxu0 %v4119
      %4136 = vmatpush.msra.mxu0 %v4118
      %4137 = vmatpush.msra.mxu0 %v4117
      %4138 = vmatpush.msra.mxu0 %v4116
      %4139 = vmatpush.msra.mxu0 %v4115
      %4140 = vmatpush.msra.mxu0 %v4114
      %4141 = vmatmul.f32.gmra.mxu0 %v4123
      %v4142 = vpop.f32.mrf.mxu0
      %v4143 = vadd.f32 0.0, %v4142
      %4144 = vdwg.mxu0
      %v4145 = vadd.f32 %v3610, %v4143
      %v4146 = vperm.slane %v3611, 0
      %v4147 = vadd.f32 %v4145, %v4146
      %v4148 = vsel %vm311, %v4147, 0.0
      %4149 = vadd.xlane.f32.xlu0 %v4148
      %v4150 = vpop.xlane.xlu0 %4149
      %v4151 = vmul.f32 %v4150, %v351
      %v4152 = vsub.f32 %v4147, %v4151
      %v4153 = vmul.f32 %v4152, %v4152
      %v4154 = vsel %vm311, %v4153, 0.0
      %4155 = vadd.xlane.f32.xlu0 %v4154
      %v4156 = vpop.xlane.xlu0 %4155
      %v4157 = vmul.f32 %v4156, %v351
      %v4158 = vadd.f32 %v4157, 1e-05
      %v4159 = vrsqrt.pop %v4158
      %v4160 = vmul.f32 %v4159, %v4158
      %v4161 = vmul.f32 %v4160, %v4159
      %v4162 = vmul.f32 0.5, %v4161
      %v4163 = vsub.f32 1.5, %v4162
      %v4164 = vmul.f32 %v4159, %v4163
      %vm4165 = vweird.f32 %v4158
      %vm4166 = vweird.f32 %v4159
      %vm4167 = vmor %vm4165, %vm4166
      %v4168 = vsel %vm4167, %v4159, %v4164
      %v4169 = vmul.f32 %v4152, %v4168
      %v4170 = vperm.slane %v3614, 0
      %v4171 = vmul.f32 %v4169, %v4170
      %v4172 = vperm.slane %v3615, 0
      %v4173 = vadd.f32 %v4171, %v4172
      %s4174 = scalar_lea.vmem %s6, 160
      %v4175 = vld [vmem:[%s4174] sm:$0xff]
      %v4176 = vld [vmem:[%s4174 + $0x8] sm:$0xff]
      %v4177 = vld [vmem:[%s4174 + $0x10] sm:$0xff]
      %v4178 = vld [vmem:[%s4174 + $0x18] sm:$0xff]
      %v4179 = vperm.slane %v3617, 0
      %v4181 = vsel %vm311, %v4173, 0
      %4183 = vmatpush.msra.mxu0 0.0
      %4184 = vmatpush.msra.mxu0 0.0
      %4185 = vmatpush.msra.mxu0 0.0
      %4186 = vmatpush.msra.mxu0 0.0
      %4187 = vmatpush.msra.mxu0 0.0
      %4188 = vmatpush.msra.mxu0 0.0
      %4189 = vmatpush.msra.mxu0 0.0
      %4190 = vmatpush.msra.mxu0 0.0
      %4191 = vmatpush.msra.mxu0 0.0
      %4192 = vmatpush.msra.mxu0 0.0
      %4193 = vmatpush.msra.mxu0 0.0
      %4194 = vmatpush.msra.mxu0 0.0
      %4195 = vmatpush.msra.mxu0 %v4178
      %4196 = vmatpush.msra.mxu0 %v4177
      %4197 = vmatpush.msra.mxu0 %v4176
      %4198 = vmatpush.msra.mxu0 %v4175
      %4199 = vmatmul.f32.gmra.mxu0 %v4181
      %v4200 = vpop.f32.mrf.mxu0
      %v4201 = vadd.f32 %v4179, %v4200
      %4202 = vdwg.mxu0
      %v4203 = vmul.f32 %v4201, %v4201
      %v4204 = vmul.f32 %v4201, %v4203
      %v4205 = vmul.f32 %v4204, 0.044715
      %v4206 = vadd.f32 %v4201, %v4205
      %v4207 = vmul.f32 %v4206, 0.7978846
      %v4208 = vtanh.pop %v4207
      %v4209 = vadd.f32 %v4208, 1.0
      %v4210 = vmul.f32 %v4209, 0.5
      %v4211 = vmul.f32 %v4201, %v4210
      %s4212 = scalar_lea.vmem %s7, 320
      %v4213 = vld [vmem:[%s4212] sm:$0xff]
      %v4214 = vld [vmem:[%s4212 + $0x8] sm:$0xff]
      %v4215 = vld [vmem:[%s4212 + $0x10] sm:$0xff]
      %v4216 = vld [vmem:[%s4212 + $0x18] sm:$0xff]
      %v4217 = vld [vmem:[%s4212 + $0x20] sm:$0xff]
      %v4218 = vld [vmem:[%s4212 + $0x28] sm:$0xff]
      %v4219 = vld [vmem:[%s4212 + $0x30] sm:$0xff]
      %v4220 = vld [vmem:[%s4212 + $0x38] sm:$0xff]
      %v4222 = vsel %vm854, %v4211, 0
      %4224 = vmatpush.msra.mxu0 0.0
      %4225 = vmatpush.msra.mxu0 0.0
      %4226 = vmatpush.msra.mxu0 0.0
      %4227 = vmatpush.msra.mxu0 0.0
      %4228 = vmatpush.msra.mxu0 0.0
      %4229 = vmatpush.msra.mxu0 0.0
      %4230 = vmatpush.msra.mxu0 0.0
      %4231 = vmatpush.msra.mxu0 0.0
      %4232 = vmatpush.msra.mxu0 %v4220
      %4233 = vmatpush.msra.mxu0 %v4219
      %4234 = vmatpush.msra.mxu0 %v4218
      %4235 = vmatpush.msra.mxu0 %v4217
      %4236 = vmatpush.msra.mxu0 %v4216
      %4237 = vmatpush.msra.mxu0 %v4215
      %4238 = vmatpush.msra.mxu0 %v4214
      %4239 = vmatpush.msra.mxu0 %v4213
      %4240 = vmatmul.f32.gmra.mxu0 %v4222
      %v4241 = vpop.f32.mrf.mxu0
      %v4242 = vadd.f32 0.0, %v4241
      %4243 = vdwg.mxu0
      %v4244 = vadd.f32 %v4147, %v4242
      %v4245 = vperm.slane %v3616, 0
      %v4246 = vadd.f32 %v4244, %v4245
      %4247 = vrot.lane.b32.xlu0 %v2927, 32
      %v4248 = vpop.permute.xlu0 %4247
      %4251 = vrot.lane.b32.xlu0 %v4246, 64
      %v4252 = vpop.permute.xlu0 %4251
      %v4254 = vsel %vm311, %v1613, %v4248
      %v4255 = vsel %vm854, %v4254, %v4252
      %4256 = vst.msk [vmem:[%s300] sm:$0xff] %vm2951, %v4255
      %p4257 = scmp.lt.s32.totalorder %s19, 1
      %s4258 = scalar_select %p4257, %s19, 1
      %s4259 = smul.addr %s4258, 8
      %s4260 = scalar_lea.vmem %s8, %s4259
      // Predicated region
      $region53: #{airwayformer_forward.1} parent=51 // pred_check
        %p4261 = pneg %p210
      $region54: #{airwayformer_forward.1} parent=51 // pred_check_branch
        %4263 = sbr.rel (%p4261) target = $region56
      $region55: #{airwayformer_forward.1} parent=51 // pred_region
        _
      $region56: #{airwayformer_forward.1} parent=51 // pred_fallthru
        _
    $region52: #{airwayformer_forward.1} parent=5 // pred_fallthru
      _
    %p4264 = scmp.le.s32.totalorder 2, %s14
    // Predicated region
    $region57: #{airwayformer_forward.1} parent=5 // pred_check
      %p4265 = pneg %p4264
    $region58: #{airwayformer_forward.1} parent=5 // pred_check_branch
      %4267 = sbr.rel (%p4265) target = $region60
    $region59: #{airwayformer_forward.1} parent=5 // pred_region
      %s4268 = ssub.s32 %s14, 2
      // Predicated region
      $region61: #{airwayformer_forward.1} parent=59 // pred_check
        %p4269 = pneg %p216
      $region62: #{airwayformer_forward.1} parent=59 // pred_check_branch
        %4271 = sbr.rel (%p4269) target = $region64
      $region63: #{airwayformer_forward.1} parent=59 // pred_region
        %p4272 = scmp.lt.s32.totalorder %s20, 1
        %s4273 = scalar_select %p4272, %s20, 1
        %s4274 = smul.addr %s4273, 8
        %s4275 = scalar_lea.vmem %s8, %s4274
      $region64: #{airwayformer_forward.1} parent=59 // pred_fallthru
        _
    $region60: #{airwayformer_forward.1} parent=5 // pred_fallthru
      _
  $region6: #{airwayformer_forward.1} parent=0 // loop_footer
    %s18 = sadd.s32 1, %s14
  $region7: #{airwayformer_forward.1} parent=0 // loop_footer_branch
    %13 = sbr.rel target = $region3
  $region8: #{airwayformer_forward.1} parent=0 // loop_exit
    _

</llo_original>
